<compile_context>
chip_gen: v6e
topology: v6e:2x2x1
jax: 0.10.0
libtpu: 0.0.40
codegen_flags: <defaults>
</compile_context>

<pallas_src>
import math
import jax
import jax.numpy as jnp
from jax.experimental import pallas as pl
from jax.experimental.pallas import tpu as pltpu


# ----------------------------------------------------------------------------
# Pallas kernels
# ----------------------------------------------------------------------------
def _fc1_kernel(x_ref, w_ref, b_ref, o_ref):
    # (B, Din) @ (Din, Dout) + (1, Dout) with bf16 MXU inputs, f32 accumulation.
    o_ref[...] = (
        jnp.dot(x_ref[...].astype(jnp.bfloat16), w_ref[...],
                preferred_element_type=jnp.float32)
        + b_ref[...]
    )


def fc1_linear(x_flat, w_bf16, b_f32):
    """y = x_flat @ W + b.  x_flat: (B, Din) f32, W: (Din, Dout) bf16, b: (1, Dout) f32."""
    B, Din = x_flat.shape
    Dout = w_bf16.shape[1]
    ce = pl.CostEstimate(
        flops=2 * B * Din * Dout,
        transcendentals=0,
        bytes_accessed=int(x_flat.size) * 4 + int(w_bf16.size) * 2
        + int(b_f32.size) * 4 + B * Dout * 4,
    )
    return pl.pallas_call(
        _fc1_kernel,
        out_shape=jax.ShapeDtypeStruct((B, Dout), jnp.float32),
        grid=(1,),
        in_specs=[
            pl.BlockSpec((B, Din), lambda i: (0, 0)),
            pl.BlockSpec((Din, Dout), lambda i: (0, 0)),
            pl.BlockSpec((1, Dout), lambda i: (0, 0)),
        ],
        out_specs=pl.BlockSpec((B, Dout), lambda i: (0, 0)),
        compiler_params=pltpu.CompilerParams(
            dimension_semantics=("arbitrary",),
            vmem_limit_bytes=32 * 1024 * 1024,
        ),
        cost_estimate=ce,
    )(x_flat, w_bf16, b_f32)


def _make_body_kernel(num_stage: int):
    """One fused kernel per batch element: gc1+bn+tanh, num_stage residual GC blocks,
    gc7 + bias + skip connection from the fc1 output."""

    def kernel(*refs):
        x0_ref = refs[0]        # (1, N, Fin)  f32
        o_ref = refs[-1]        # (1, N, Fin)  f32
        idx = 1

        x0 = x0_ref[0]          # (N, Fin) f32 (kept f32 for the final residual)

        # --- gc1 + bn1 + tanh.  Fin < Fout -> cheaper association (att @ x) @ W.
        w, att, sc, sh = refs[idx], refs[idx + 1], refs[idx + 2], refs[idx + 3]
        idx += 4
        t = jnp.dot(att[...], x0.astype(jnp.bfloat16),
                    preferred_element_type=jnp.float32)                  # (N, Fin)
        h = jnp.dot(t.astype(jnp.bfloat16), w[...],
                    preferred_element_type=jnp.float32)                  # (N, Fh)
        y = jnp.tanh(h * sc[...] + sh[...])

        # --- residual GC blocks (each: two gc+bn+tanh, then + block input).
        for _ in range(num_stage):
            y_in = y
            for _ in range(2):
                w, att, sc, sh = refs[idx], refs[idx + 1], refs[idx + 2], refs[idx + 3]
                idx += 4
                h = jnp.dot(y.astype(jnp.bfloat16), w[...],
                            preferred_element_type=jnp.float32)          # (N, Fh)
                h = jnp.dot(att[...], h.astype(jnp.bfloat16),
                            preferred_element_type=jnp.float32)          # (N, Fh)
                y = jnp.tanh(h * sc[...] + sh[...])
            y = y + y_in

        # --- gc7 (Fh -> Fin) + bias + skip from fc1 output.
        w, att, b = refs[idx], refs[idx + 1], refs[idx + 2]
        h = jnp.dot(y.astype(jnp.bfloat16), w[...],
                    preferred_element_type=jnp.float32)                  # (N, Fin)
        h = jnp.dot(att[...], h.astype(jnp.bfloat16),
                    preferred_element_type=jnp.float32)                  # (N, Fin)
        o_ref[0] = h + b[...] + x0

    return kernel


def gcn_body(x0, layers, gc7_w, gc7_att, gc7_b):
    """Fully fused GC stack.  x0: (B, N, Fin) f32; layers: list of dicts with
    bf16 'w'/'att' and f32 folded 'scale'/'shift' (bias already folded into shift)."""
    B, N, Fin = x0.shape
    Fh = layers[0]["w"].shape[1]
    num_stage = (len(layers) - 1) // 2

    args = [x0]
    in_specs = [pl.BlockSpec((1, N, Fin), lambda b: (b, 0, 0))]
    for lyr in layers:
        for name in ("w", "att", "scale", "shift"):
            a = lyr[name]
            args.append(a)
            in_specs.append(pl.BlockSpec(a.shape, lambda b: (0, 0)))
    for a in (gc7_w, gc7_att, gc7_b):
        args.append(a)
        in_specs.append(pl.BlockSpec(a.shape, lambda b: (0, 0)))

    flops = 2 * B * (
        N * N * Fin + N * Fin * Fh                      # gc1
        + 2 * num_stage * (N * Fh * Fh + N * N * Fh)    # residual blocks
        + N * Fh * Fin + N * N * Fin                    # gc7
    )
    transcendentals = B * N * Fh * (1 + 2 * num_stage)
    bytes_accessed = sum(int(a.size) * a.dtype.itemsize for a in args) + B * N * Fin * 4
    ce = pl.CostEstimate(flops=flops, transcendentals=transcendentals,
                         bytes_accessed=bytes_accessed)

    return pl.pallas_call(
        _make_body_kernel(num_stage),
        out_shape=jax.ShapeDtypeStruct((B, N, Fin), jnp.float32),
        grid=(B,),
        in_specs=in_specs,
        out_specs=pl.BlockSpec((1, N, Fin), lambda b: (b, 0, 0)),
        compiler_params=pltpu.CompilerParams(
            dimension_semantics=("parallel",),      # shards batch over v7x's 2 TCs
            vmem_limit_bytes=32 * 1024 * 1024,
        ),
        cost_estimate=ce,
    )(*args)


# ----------------------------------------------------------------------------
# Parameter construction (mirrors the PyTorch __init__ shapes / init scheme)
# ----------------------------------------------------------------------------
def _uniform(key, shape, stdv):
    return jax.random.uniform(key, shape, jnp.float32, minval=-stdv, maxval=stdv)


def init_graph_conv(key, in_f, out_f, node_n):
    stdv = 1.0 / math.sqrt(out_f)
    kw, ka, kb = jax.random.split(key, 3)
    return {
        "w": _uniform(kw, (in_f, out_f), stdv),
        "att": _uniform(ka, (node_n, node_n), stdv),
        "b": _uniform(kb, (out_f,), stdv),
    }


def init_batchnorm(num_features):
    return {
        "gamma": jnp.ones((num_features,), jnp.float32),
        "beta": jnp.zeros((num_features,), jnp.float32),
        "running_mean": jnp.zeros((num_features,), jnp.float32),
        "running_var": jnp.ones((num_features,), jnp.float32),
        "eps": 1e-5,
    }


def init_gcn(key, input_feature, hidden_feature, num_stage, node_n):
    keys = jax.random.split(key, 4 + 2 * num_stage)
    fc1_in = 72 * input_feature
    fc1_out = node_n * input_feature
    fc_stdv = 1.0 / math.sqrt(fc1_in)
    params = {
        "fc1_w": _uniform(keys[0], (fc1_in, fc1_out), fc_stdv),
        "fc1_b": _uniform(keys[1], (fc1_out,), fc_stdv),
        "gc1": init_graph_conv(keys[2], input_feature, hidden_feature, node_n),
        "bn1": init_batchnorm(node_n * hidden_feature),
        "blocks": [],
        "gc7": init_graph_conv(keys[3], hidden_feature, input_feature, node_n),
    }
    for i in range(num_stage):
        params["blocks"].append({
            "gc1": init_graph_conv(keys[4 + 2 * i], hidden_feature, hidden_feature, node_n),
            "bn1": init_batchnorm(node_n * hidden_feature),
            "gc2": init_graph_conv(keys[5 + 2 * i], hidden_feature, hidden_feature, node_n),
            "bn2": init_batchnorm(node_n * hidden_feature),
        })
    return params


def _fold_bn(gc, bn, node_n, feat):
    """Eval-mode BatchNorm1d + GraphConv bias folded into per-(node, feature) affine."""
    scale = bn["gamma"] / jnp.sqrt(bn["running_var"] + bn["eps"])
    shift = bn["beta"] - bn["running_mean"] * scale
    scale = scale.reshape(node_n, feat)
    shift = shift.reshape(node_n, feat) + gc["b"][None, :] * scale   # bias folded in
    return scale, shift


def prepare_params(params, node_n, hidden_feature, input_feature):
    """One-time (outside jit) prep: bf16 matmul weights, BN/bias folded affines."""
    def mk_layer(gc, bn):
        scale, shift = _fold_bn(gc, bn, node_n, hidden_feature)
        return {"w": gc["w"].astype(jnp.bfloat16),
                "att": gc["att"].astype(jnp.bfloat16),
                "scale": scale, "shift": shift}

    prep = {
        "fc1_w": params["fc1_w"].astype(jnp.bfloat16),
        "fc1_b": params["fc1_b"].reshape(1, -1),
        "layers": [mk_layer(params["gc1"], params["bn1"])],
        "gc7_w": params["gc7"]["w"].astype(jnp.bfloat16),
        "gc7_att": params["gc7"]["att"].astype(jnp.bfloat16),
        "gc7_b": params["gc7"]["b"].reshape(1, -1),
    }
    for blk in params["blocks"]:
        prep["layers"].append(mk_layer(blk["gc1"], blk["bn1"]))
        prep["layers"].append(mk_layer(blk["gc2"], blk["bn2"]))
    return prep


# ----------------------------------------------------------------------------
# GCN forward: fc1 kernel + one fused GC-stack kernel
# ----------------------------------------------------------------------------
def gcn_forward(prep, x, *, node_n, input_feature):
    B = x.shape[0]
    x_flat = x.reshape(B, -1)                                   # (B, 72*Fin)
    x0_flat = fc1_linear(x_flat, prep["fc1_w"], prep["fc1_b"])  # (B, N*Fin), lane-dense
    x0 = x0_flat.reshape(B, node_n, input_feature)              # free HBM reshape
    return gcn_body(x0, prep["layers"], prep["gc7_w"], prep["gc7_att"], prep["gc7_b"])


# ----------------------------------------------------------------------------
if __name__ == "__main__":
    B = 2
    INPUT_FEATURE = 16
    HIDDEN_FEATURE = 32
    NODE_N = 48
    NUM_STAGE = 2

    key = jax.random.PRNGKey(0)
    k_params, k_x = jax.random.split(key)
    params = init_gcn(k_params, INPUT_FEATURE, HIDDEN_FEATURE, NUM_STAGE, NODE_N)
    prep = prepare_params(params, NODE_N, HIDDEN_FEATURE, INPUT_FEATURE)
    x = jax.random.normal(k_x, (B, 72, INPUT_FEATURE), dtype=jnp.float32)

    fwd = jax.jit(lambda p, xx: gcn_forward(
        p, xx, node_n=NODE_N, input_feature=INPUT_FEATURE))

    out = jax.block_until_ready(fwd(prep, x))
    assert out.shape == (B, NODE_N, INPUT_FEATURE), out.shape
    assert bool(jnp.all(jnp.isfinite(out)))
    print("KERNEL_OK")
</pallas_src>

<mosaic_0001>
module attributes {stable_mosaic.version = 11 : i64} {
  func.func @_fc1_kernel(%arg0: i32, %arg1: memref<2x1152xf32, #tpu.memory_space<vmem>>, %arg2: memref<1152x768xbf16, #tpu.memory_space<vmem>>, %arg3: memref<1x768xf32, #tpu.memory_space<vmem>>, %arg4: memref<2x768xf32, #tpu.memory_space<vmem>>) attributes {dimension_semantics = [#tpu.dimension_semantics<arbitrary>], iteration_bounds = array<i64: 1>, scalar_prefetch = 0 : i64, scratch_operands = 0 : i64, tpu.core_type = #tpu.core_type<tc>, window_params = [{pipeline_mode = #tpu.pipeline_mode<synchronous>, transform_indices = @transform_0, window_bounds = array<i64: 2, 1152>}, {pipeline_mode = #tpu.pipeline_mode<synchronous>, transform_indices = @transform_1, window_bounds = array<i64: 1152, 768>}, {pipeline_mode = #tpu.pipeline_mode<synchronous>, transform_indices = @transform_2, window_bounds = array<i64: 1, 768>}, {pipeline_mode = #tpu.pipeline_mode<synchronous>, transform_indices = @transform_3, window_bounds = array<i64: 2, 768>}]} {
    %c0 = arith.constant 0 : index
    %c0_0 = arith.constant 0 : index
    %0 = vector.load %arg1[%c0, %c0_0] : memref<2x1152xf32, #tpu.memory_space<vmem>>, vector<2x1152xf32>
    %1 = arith.truncf %0 : vector<2x1152xf32> to vector<2x1152xbf16>
    %c0_1 = arith.constant 0 : index
    %c0_2 = arith.constant 0 : index
    %2 = vector.load %arg2[%c0_1, %c0_2] : memref<1152x768xbf16, #tpu.memory_space<vmem>>, vector<1152x768xbf16>
    %cst = arith.constant dense<0.000000e+00> : vector<2x768xf32>
    %3 = tpu.matmul %1, %2, %cst {dimension_numbers = #tpu.dot_dimension_numbers<[1], [0], [0], [1], [0, 0, 1, 1], [], []>} : vector<2x1152xbf16>, vector<1152x768xbf16>, vector<2x768xf32> -> vector<2x768xf32>
    %c0_3 = arith.constant 0 : index
    %c0_4 = arith.constant 0 : index
    %4 = vector.load %arg3[%c0_3, %c0_4] : memref<1x768xf32, #tpu.memory_space<vmem>>, vector<1x768xf32>
    %5 = vector.broadcast %4 : vector<1x768xf32> to vector<2x768xf32>
    %6 = arith.addf %3, %5 : vector<2x768xf32>
    %c0_5 = arith.constant 0 : index
    %c0_6 = arith.constant 0 : index
    %7 = vector.load %arg4[%c0_5, %c0_6] : memref<2x768xf32, #tpu.memory_space<vmem>>, vector<2x768xf32>
    tpu.vector_store %arg4[%c0_5, %c0_6], %6 {strides = array<i32>} : memref<2x768xf32, #tpu.memory_space<vmem>>, vector<2x768xf32>,
    return
  }
  func.func @transform_0(%arg0: i32) -> (i32, i32) {
    %c0_i32 = arith.constant 0 : i32
    %c0_i32_0 = arith.constant 0 : i32
    %c0_i32_1 = arith.constant 0 : i32
    return %c0_i32, %c0_i32_0 : i32, i32
  }
  func.func @transform_1(%arg0: i32) -> (i32, i32) {
    %c0_i32 = arith.constant 0 : i32
    %c0_i32_0 = arith.constant 0 : i32
    %c0_i32_1 = arith.constant 0 : i32
    return %c0_i32, %c0_i32_0 : i32, i32
  }
  func.func @transform_2(%arg0: i32) -> (i32, i32) {
    %c0_i32 = arith.constant 0 : i32
    %c0_i32_0 = arith.constant 0 : i32
    %c0_i32_1 = arith.constant 0 : i32
    return %c0_i32, %c0_i32_0 : i32, i32
  }
  func.func @transform_3(%arg0: i32) -> (i32, i32) {
    %c0_i32 = arith.constant 0 : i32
    %c0_i32_0 = arith.constant 0 : i32
    %c0_i32_1 = arith.constant 0 : i32
    return %c0_i32, %c0_i32_0 : i32, i32
  }
}

module attributes {stable_mosaic.version = 11 : i64} {
  func.func @kernel(%arg0: i32, %arg1: memref<1x48x16xf32, #tpu.memory_space<vmem>>, %arg2: memref<16x32xbf16, #tpu.memory_space<vmem>>, %arg3: memref<48x48xbf16, #tpu.memory_space<vmem>>, %arg4: memref<48x32xf32, #tpu.memory_space<vmem>>, %arg5: memref<48x32xf32, #tpu.memory_space<vmem>>, %arg6: memref<32x32xbf16, #tpu.memory_space<vmem>>, %arg7: memref<48x48xbf16, #tpu.memory_space<vmem>>, %arg8: memref<48x32xf32, #tpu.memory_space<vmem>>, %arg9: memref<48x32xf32, #tpu.memory_space<vmem>>, %arg10: memref<32x32xbf16, #tpu.memory_space<vmem>>, %arg11: memref<48x48xbf16, #tpu.memory_space<vmem>>, %arg12: memref<48x32xf32, #tpu.memory_space<vmem>>, %arg13: memref<48x32xf32, #tpu.memory_space<vmem>>, %arg14: memref<32x32xbf16, #tpu.memory_space<vmem>>, %arg15: memref<48x48xbf16, #tpu.memory_space<vmem>>, %arg16: memref<48x32xf32, #tpu.memory_space<vmem>>, %arg17: memref<48x32xf32, #tpu.memory_space<vmem>>, %arg18: memref<32x32xbf16, #tpu.memory_space<vmem>>, %arg19: memref<48x48xbf16, #tpu.memory_space<vmem>>, %arg20: memref<48x32xf32, #tpu.memory_space<vmem>>, %arg21: memref<48x32xf32, #tpu.memory_space<vmem>>, %arg22: memref<32x16xbf16, #tpu.memory_space<vmem>>, %arg23: memref<48x48xbf16, #tpu.memory_space<vmem>>, %arg24: memref<1x16xf32, #tpu.memory_space<vmem>>, %arg25: memref<1x48x16xf32, #tpu.memory_space<vmem>>) attributes {dimension_semantics = [#tpu.dimension_semantics<parallel>], iteration_bounds = array<i64: 2>, scalar_prefetch = 0 : i64, scratch_operands = 0 : i64, tpu.core_type = #tpu.core_type<tc>, window_params = [{transform_indices = @transform_0, window_bounds = array<i64: 1, 48, 16>}, {pipeline_mode = #tpu.pipeline_mode<synchronous>, transform_indices = @transform_1, window_bounds = array<i64: 16, 32>}, {pipeline_mode = #tpu.pipeline_mode<synchronous>, transform_indices = @transform_2, window_bounds = array<i64: 48, 48>}, {pipeline_mode = #tpu.pipeline_mode<synchronous>, transform_indices = @transform_3, window_bounds = array<i64: 48, 32>}, {pipeline_mode = #tpu.pipeline_mode<synchronous>, transform_indices = @transform_4, window_bounds = array<i64: 48, 32>}, {pipeline_mode = #tpu.pipeline_mode<synchronous>, transform_indices = @transform_5, window_bounds = array<i64: 32, 32>}, {pipeline_mode = #tpu.pipeline_mode<synchronous>, transform_indices = @transform_6, window_bounds = array<i64: 48, 48>}, {pipeline_mode = #tpu.pipeline_mode<synchronous>, transform_indices = @transform_7, window_bounds = array<i64: 48, 32>}, {pipeline_mode = #tpu.pipeline_mode<synchronous>, transform_indices = @transform_8, window_bounds = array<i64: 48, 32>}, {pipeline_mode = #tpu.pipeline_mode<synchronous>, transform_indices = @transform_9, window_bounds = array<i64: 32, 32>}, {pipeline_mode = #tpu.pipeline_mode<synchronous>, transform_indices = @transform_10, window_bounds = array<i64: 48, 48>}, {pipeline_mode = #tpu.pipeline_mode<synchronous>, transform_indices = @transform_11, window_bounds = array<i64: 48, 32>}, {pipeline_mode = #tpu.pipeline_mode<synchronous>, transform_indices = @transform_12, window_bounds = array<i64: 48, 32>}, {pipeline_mode = #tpu.pipeline_mode<synchronous>, transform_indices = @transform_13, window_bounds = array<i64: 32, 32>}, {pipeline_mode = #tpu.pipeline_mode<synchronous>, transform_indices = @transform_14, window_bounds = array<i64: 48, 48>}, {pipeline_mode = #tpu.pipeline_mode<synchronous>, transform_indices = @transform_15, window_bounds = array<i64: 48, 32>}, {pipeline_mode = #tpu.pipeline_mode<synchronous>, transform_indices = @transform_16, window_bounds = array<i64: 48, 32>}, {pipeline_mode = #tpu.pipeline_mode<synchronous>, transform_indices = @transform_17, window_bounds = array<i64: 32, 32>}, {pipeline_mode = #tpu.pipeline_mode<synchronous>, transform_indices = @transform_18, window_bounds = array<i64: 48, 48>}, {pipeline_mode = #tpu.pipeline_mode<synchronous>, transform_indices = @transform_19, window_bounds = array<i64: 48, 32>}, {pipeline_mode = #tpu.pipeline_mode<synchronous>, transform_indices = @transform_20, window_bounds = array<i64: 48, 32>}, {pipeline_mode = #tpu.pipeline_mode<synchronous>, transform_indices = @transform_21, window_bounds = array<i64: 32, 16>}, {pipeline_mode = #tpu.pipeline_mode<synchronous>, transform_indices = @transform_22, window_bounds = array<i64: 48, 48>}, {pipeline_mode = #tpu.pipeline_mode<synchronous>, transform_indices = @transform_23, window_bounds = array<i64: 1, 16>}, {transform_indices = @transform_24, window_bounds = array<i64: 1, 48, 16>}]} {
    %c0 = arith.constant 0 : index
    %c0_0 = arith.constant 0 : index
    %c0_1 = arith.constant 0 : index
    %0 = vector.load %arg1[%c0, %c0_0, %c0_1] : memref<1x48x16xf32, #tpu.memory_space<vmem>>, vector<1x48x16xf32>
    %1 = vector.shape_cast %0 : vector<1x48x16xf32> to vector<48x16xf32>
    %c0_2 = arith.constant 0 : index
    %c0_3 = arith.constant 0 : index
    %2 = vector.load %arg3[%c0_2, %c0_3] : memref<48x48xbf16, #tpu.memory_space<vmem>>, vector<48x48xbf16>
    %3 = arith.truncf %1 : vector<48x16xf32> to vector<48x16xbf16>
    %cst = arith.constant dense<0.000000e+00> : vector<48x16xf32>
    %4 = tpu.matmul %2, %3, %cst {dimension_numbers = #tpu.dot_dimension_numbers<[1], [0], [0], [1], [0, 0, 1, 1], [], []>} : vector<48x48xbf16>, vector<48x16xbf16>, vector<48x16xf32> -> vector<48x16xf32>
    %5 = arith.truncf %4 : vector<48x16xf32> to vector<48x16xbf16>
    %c0_4 = arith.constant 0 : index
    %c0_5 = arith.constant 0 : index
    %6 = vector.load %arg2[%c0_4, %c0_5] : memref<16x32xbf16, #tpu.memory_space<vmem>>, vector<16x32xbf16>
    %cst_6 = arith.constant dense<0.000000e+00> : vector<48x32xf32>
    %7 = tpu.matmul %5, %6, %cst_6 {dimension_numbers = #tpu.dot_dimension_numbers<[1], [0], [0], [1], [0, 0, 1, 1], [], []>} : vector<48x16xbf16>, vector<16x32xbf16>, vector<48x32xf32> -> vector<48x32xf32>
    %c0_7 = arith.constant 0 : index
    %c0_8 = arith.constant 0 : index
    %8 = vector.load %arg4[%c0_7, %c0_8] : memref<48x32xf32, #tpu.memory_space<vmem>>, vector<48x32xf32>
    %9 = arith.mulf %7, %8 : vector<48x32xf32>
    %c0_9 = arith.constant 0 : index
    %c0_10 = arith.constant 0 : index
    %10 = vector.load %arg5[%c0_9, %c0_10] : memref<48x32xf32, #tpu.memory_space<vmem>>, vector<48x32xf32>
    %11 = arith.addf %9, %10 : vector<48x32xf32>
    %12 = math.tanh %11 : vector<48x32xf32>
    %13 = arith.truncf %12 : vector<48x32xf32> to vector<48x32xbf16>
    %c0_11 = arith.constant 0 : index
    %c0_12 = arith.constant 0 : index
    %14 = vector.load %arg6[%c0_11, %c0_12] : memref<32x32xbf16, #tpu.memory_space<vmem>>, vector<32x32xbf16>
    %cst_13 = arith.constant dense<0.000000e+00> : vector<48x32xf32>
    %15 = tpu.matmul %13, %14, %cst_13 {dimension_numbers = #tpu.dot_dimension_numbers<[1], [0], [0], [1], [0, 0, 1, 1], [], []>} : vector<48x32xbf16>, vector<32x32xbf16>, vector<48x32xf32> -> vector<48x32xf32>
    %c0_14 = arith.constant 0 : index
    %c0_15 = arith.constant 0 : index
    %16 = vector.load %arg7[%c0_14, %c0_15] : memref<48x48xbf16, #tpu.memory_space<vmem>>, vector<48x48xbf16>
    %17 = arith.truncf %15 : vector<48x32xf32> to vector<48x32xbf16>
    %cst_16 = arith.constant dense<0.000000e+00> : vector<48x32xf32>
    %18 = tpu.matmul %16, %17, %cst_16 {dimension_numbers = #tpu.dot_dimension_numbers<[1], [0], [0], [1], [0, 0, 1, 1], [], []>} : vector<48x48xbf16>, vector<48x32xbf16>, vector<48x32xf32> -> vector<48x32xf32>
    %c0_17 = arith.constant 0 : index
    %c0_18 = arith.constant 0 : index
    %19 = vector.load %arg8[%c0_17, %c0_18] : memref<48x32xf32, #tpu.memory_space<vmem>>, vector<48x32xf32>
    %20 = arith.mulf %18, %19 : vector<48x32xf32>
    %c0_19 = arith.constant 0 : index
    %c0_20 = arith.constant 0 : index
    %21 = vector.load %arg9[%c0_19, %c0_20] : memref<48x32xf32, #tpu.memory_space<vmem>>, vector<48x32xf32>
    %22 = arith.addf %20, %21 : vector<48x32xf32>
    %23 = math.tanh %22 : vector<48x32xf32>
    %24 = arith.truncf %23 : vector<48x32xf32> to vector<48x32xbf16>
    %c0_21 = arith.constant 0 : index
    %c0_22 = arith.constant 0 : index
    %25 = vector.load %arg10[%c0_21, %c0_22] : memref<32x32xbf16, #tpu.memory_space<vmem>>, vector<32x32xbf16>
    %cst_23 = arith.constant dense<0.000000e+00> : vector<48x32xf32>
    %26 = tpu.matmul %24, %25, %cst_23 {dimension_numbers = #tpu.dot_dimension_numbers<[1], [0], [0], [1], [0, 0, 1, 1], [], []>} : vector<48x32xbf16>, vector<32x32xbf16>, vector<48x32xf32> -> vector<48x32xf32>
    %c0_24 = arith.constant 0 : index
    %c0_25 = arith.constant 0 : index
    %27 = vector.load %arg11[%c0_24, %c0_25] : memref<48x48xbf16, #tpu.memory_space<vmem>>, vector<48x48xbf16>
    %28 = arith.truncf %26 : vector<48x32xf32> to vector<48x32xbf16>
    %cst_26 = arith.constant dense<0.000000e+00> : vector<48x32xf32>
    %29 = tpu.matmul %27, %28, %cst_26 {dimension_numbers = #tpu.dot_dimension_numbers<[1], [0], [0], [1], [0, 0, 1, 1], [], []>} : vector<48x48xbf16>, vector<48x32xbf16>, vector<48x32xf32> -> vector<48x32xf32>
    %c0_27 = arith.constant 0 : index
    %c0_28 = arith.constant 0 : index
    %30 = vector.load %arg12[%c0_27, %c0_28] : memref<48x32xf32, #tpu.memory_space<vmem>>, vector<48x32xf32>
    %31 = arith.mulf %29, %30 : vector<48x32xf32>
    %c0_29 = arith.constant 0 : index
    %c0_30 = arith.constant 0 : index
    %32 = vector.load %arg13[%c0_29, %c0_30] : memref<48x32xf32, #tpu.memory_space<vmem>>, vector<48x32xf32>
    %33 = arith.addf %31, %32 : vector<48x32xf32>
    %34 = math.tanh %33 : vector<48x32xf32>
    %35 = arith.addf %34, %12 : vector<48x32xf32>
    %36 = arith.truncf %35 : vector<48x32xf32> to vector<48x32xbf16>
    %c0_31 = arith.constant 0 : index
    %c0_32 = arith.constant 0 : index
    %37 = vector.load %arg14[%c0_31, %c0_32] : memref<32x32xbf16, #tpu.memory_space<vmem>>, vector<32x32xbf16>
    %cst_33 = arith.constant dense<0.000000e+00> : vector<48x32xf32>
    %38 = tpu.matmul %36, %37, %cst_33 {dimension_numbers = #tpu.dot_dimension_numbers<[1], [0], [0], [1], [0, 0, 1, 1], [], []>} : vector<48x32xbf16>, vector<32x32xbf16>, vector<48x32xf32> -> vector<48x32xf32>
    %c0_34 = arith.constant 0 : index
    %c0_35 = arith.constant 0 : index
    %39 = vector.load %arg15[%c0_34, %c0_35] : memref<48x48xbf16, #tpu.memory_space<vmem>>, vector<48x48xbf16>
    %40 = arith.truncf %38 : vector<48x32xf32> to vector<48x32xbf16>
    %cst_36 = arith.constant dense<0.000000e+00> : vector<48x32xf32>
    %41 = tpu.matmul %39, %40, %cst_36 {dimension_numbers = #tpu.dot_dimension_numbers<[1], [0], [0], [1], [0, 0, 1, 1], [], []>} : vector<48x48xbf16>, vector<48x32xbf16>, vector<48x32xf32> -> vector<48x32xf32>
    %c0_37 = arith.constant 0 : index
    %c0_38 = arith.constant 0 : index
    %42 = vector.load %arg16[%c0_37, %c0_38] : memref<48x32xf32, #tpu.memory_space<vmem>>, vector<48x32xf32>
    %43 = arith.mulf %41, %42 : vector<48x32xf32>
    %c0_39 = arith.constant 0 : index
    %c0_40 = arith.constant 0 : index
    %44 = vector.load %arg17[%c0_39, %c0_40] : memref<48x32xf32, #tpu.memory_space<vmem>>, vector<48x32xf32>
    %45 = arith.addf %43, %44 : vector<48x32xf32>
    %46 = math.tanh %45 : vector<48x32xf32>
    %47 = arith.truncf %46 : vector<48x32xf32> to vector<48x32xbf16>
    %c0_41 = arith.constant 0 : index
    %c0_42 = arith.constant 0 : index
    %48 = vector.load %arg18[%c0_41, %c0_42] : memref<32x32xbf16, #tpu.memory_space<vmem>>, vector<32x32xbf16>
    %cst_43 = arith.constant dense<0.000000e+00> : vector<48x32xf32>
    %49 = tpu.matmul %47, %48, %cst_43 {dimension_numbers = #tpu.dot_dimension_numbers<[1], [0], [0], [1], [0, 0, 1, 1], [], []>} : vector<48x32xbf16>, vector<32x32xbf16>, vector<48x32xf32> -> vector<48x32xf32>
    %c0_44 = arith.constant 0 : index
    %c0_45 = arith.constant 0 : index
    %50 = vector.load %arg19[%c0_44, %c0_45] : memref<48x48xbf16, #tpu.memory_space<vmem>>, vector<48x48xbf16>
    %51 = arith.truncf %49 : vector<48x32xf32> to vector<48x32xbf16>
    %cst_46 = arith.constant dense<0.000000e+00> : vector<48x32xf32>
    %52 = tpu.matmul %50, %51, %cst_46 {dimension_numbers = #tpu.dot_dimension_numbers<[1], [0], [0], [1], [0, 0, 1, 1], [], []>} : vector<48x48xbf16>, vector<48x32xbf16>, vector<48x32xf32> -> vector<48x32xf32>
    %c0_47 = arith.constant 0 : index
    %c0_48 = arith.constant 0 : index
    %53 = vector.load %arg20[%c0_47, %c0_48] : memref<48x32xf32, #tpu.memory_space<vmem>>, vector<48x32xf32>
    %54 = arith.mulf %52, %53 : vector<48x32xf32>
    %c0_49 = arith.constant 0 : index
    %c0_50 = arith.constant 0 : index
    %55 = vector.load %arg21[%c0_49, %c0_50] : memref<48x32xf32, #tpu.memory_space<vmem>>, vector<48x32xf32>
    %56 = arith.addf %54, %55 : vector<48x32xf32>
    %57 = math.tanh %56 : vector<48x32xf32>
    %58 = arith.addf %57, %35 : vector<48x32xf32>
    %59 = arith.truncf %58 : vector<48x32xf32> to vector<48x32xbf16>
    %c0_51 = arith.constant 0 : index
    %c0_52 = arith.constant 0 : index
    %60 = vector.load %arg22[%c0_51, %c0_52] : memref<32x16xbf16, #tpu.memory_space<vmem>>, vector<32x16xbf16>
    %cst_53 = arith.constant dense<0.000000e+00> : vector<48x16xf32>
    %61 = tpu.matmul %59, %60, %cst_53 {dimension_numbers = #tpu.dot_dimension_numbers<[1], [0], [0], [1], [0, 0, 1, 1], [], []>} : vector<48x32xbf16>, vector<32x16xbf16>, vector<48x16xf32> -> vector<48x16xf32>
    %c0_54 = arith.constant 0 : index
    %c0_55 = arith.constant 0 : index
    %62 = vector.load %arg23[%c0_54, %c0_55] : memref<48x48xbf16, #tpu.memory_space<vmem>>, vector<48x48xbf16>
    %63 = arith.truncf %61 : vector<48x16xf32> to vector<48x16xbf16>
    %cst_56 = arith.constant dense<0.000000e+00> : vector<48x16xf32>
    %64 = tpu.matmul %62, %63, %cst_56 {dimension_numbers = #tpu.dot_dimension_numbers<[1], [0], [0], [1], [0, 0, 1, 1], [], []>} : vector<48x48xbf16>, vector<48x16xbf16>, vector<48x16xf32> -> vector<48x16xf32>
    %c0_57 = arith.constant 0 : index
    %c0_58 = arith.constant 0 : index
    %65 = vector.load %arg24[%c0_57, %c0_58] : memref<1x16xf32, #tpu.memory_space<vmem>>, vector<1x16xf32>
    %66 = vector.broadcast %65 : vector<1x16xf32> to vector<48x16xf32>
    %67 = arith.addf %64, %66 : vector<48x16xf32>
    %68 = arith.addf %67, %1 : vector<48x16xf32>
    %c0_59 = arith.constant 0 : index
    %c0_60 = arith.constant 0 : index
    %c0_61 = arith.constant 0 : index
    %69 = vector.load %arg25[%c0_59, %c0_60, %c0_61] : memref<1x48x16xf32, #tpu.memory_space<vmem>>, vector<1x48x16xf32>
    %70 = vector.shape_cast %69 : vector<1x48x16xf32> to vector<48x16xf32>
    %71 = vector.shape_cast %68 : vector<48x16xf32> to vector<1x48x16xf32>
    tpu.vector_store %arg25[%c0_59, %c0_60, %c0_61], %71 {strides = array<i32>} : memref<1x48x16xf32, #tpu.memory_space<vmem>>, vector<1x48x16xf32>,
    return
  }
  func.func @transform_0(%arg0: i32) -> (i32, i32, i32) {
    %c0_i32 = arith.constant 0 : i32
    %c0_i32_0 = arith.constant 0 : i32
    %c0_i32_1 = arith.constant 0 : i32
    return %arg0, %c0_i32, %c0_i32_0 : i32, i32, i32
  }
  func.func @transform_1(%arg0: i32) -> (i32, i32) {
    %c0_i32 = arith.constant 0 : i32
    %c0_i32_0 = arith.constant 0 : i32
    %c0_i32_1 = arith.constant 0 : i32
    return %c0_i32, %c0_i32_0 : i32, i32
  }
  func.func @transform_2(%arg0: i32) -> (i32, i32) {
    %c0_i32 = arith.constant 0 : i32
    %c0_i32_0 = arith.constant 0 : i32
    %c0_i32_1 = arith.constant 0 : i32
    return %c0_i32, %c0_i32_0 : i32, i32
  }
  func.func @transform_3(%arg0: i32) -> (i32, i32) {
    %c0_i32 = arith.constant 0 : i32
    %c0_i32_0 = arith.constant 0 : i32
    %c0_i32_1 = arith.constant 0 : i32
    return %c0_i32, %c0_i32_0 : i32, i32
  }
  func.func @transform_4(%arg0: i32) -> (i32, i32) {
    %c0_i32 = arith.constant 0 : i32
    %c0_i32_0 = arith.constant 0 : i32
    %c0_i32_1 = arith.constant 0 : i32
    return %c0_i32, %c0_i32_0 : i32, i32
  }
  func.func @transform_5(%arg0: i32) -> (i32, i32) {
    %c0_i32 = arith.constant 0 : i32
    %c0_i32_0 = arith.constant 0 : i32
    %c0_i32_1 = arith.constant 0 : i32
    return %c0_i32, %c0_i32_0 : i32, i32
  }
  func.func @transform_6(%arg0: i32) -> (i32, i32) {
    %c0_i32 = arith.constant 0 : i32
    %c0_i32_0 = arith.constant 0 : i32
    %c0_i32_1 = arith.constant 0 : i32
    return %c0_i32, %c0_i32_0 : i32, i32
  }
  func.func @transform_7(%arg0: i32) -> (i32, i32) {
    %c0_i32 = arith.constant 0 : i32
    %c0_i32_0 = arith.constant 0 : i32
    %c0_i32_1 = arith.constant 0 : i32
    return %c0_i32, %c0_i32_0 : i32, i32
  }
  func.func @transform_8(%arg0: i32) -> (i32, i32) {
    %c0_i32 = arith.constant 0 : i32
    %c0_i32_0 = arith.constant 0 : i32
    %c0_i32_1 = arith.constant 0 : i32
    return %c0_i32, %c0_i32_0 : i32, i32
  }
  func.func @transform_9(%arg0: i32) -> (i32, i32) {
    %c0_i32 = arith.constant 0 : i32
    %c0_i32_0 = arith.constant 0 : i32
    %c0_i32_1 = arith.constant 0 : i32
    return %c0_i32, %c0_i32_0 : i32, i32
  }
  func.func @transform_10(%arg0: i32) -> (i32, i32) {
    %c0_i32 = arith.constant 0 : i32
    %c0_i32_0 = arith.constant 0 : i32
    %c0_i32_1 = arith.constant 0 : i32
    return %c0_i32, %c0_i32_0 : i32, i32
  }
  func.func @transform_11(%arg0: i32) -> (i32, i32) {
    %c0_i32 = arith.constant 0 : i32
    %c0_i32_0 = arith.constant 0 : i32
    %c0_i32_1 = arith.constant 0 : i32
    return %c0_i32, %c0_i32_0 : i32, i32
  }
  func.func @transform_12(%arg0: i32) -> (i32, i32) {
    %c0_i32 = arith.constant 0 : i32
    %c0_i32_0 = arith.constant 0 : i32
    %c0_i32_1 = arith.constant 0 : i32
    return %c0_i32, %c0_i32_0 : i32, i32
  }
  func.func @transform_13(%arg0: i32) -> (i32, i32) {
    %c0_i32 = arith.constant 0 : i32
    %c0_i32_0 = arith.constant 0 : i32
    %c0_i32_1 = arith.constant 0 : i32
    return %c0_i32, %c0_i32_0 : i32, i32
  }
  func.func @transform_14(%arg0: i32) -> (i32, i32) {
    %c0_i32 = arith.constant 0 : i32
    %c0_i32_0 = arith.constant 0 : i32
    %c0_i32_1 = arith.constant 0 : i32
    return %c0_i32, %c0_i32_0 : i32, i32
  }
  func.func @transform_15(%arg0: i32) -> (i32, i32) {
    %c0_i32 = arith.constant 0 : i32
    %c0_i32_0 = arith.constant 0 : i32
    %c0_i32_1 = arith.constant 0 : i32
    return %c0_i32, %c0_i32_0 : i32, i32
  }
  func.func @transform_16(%arg0: i32) -> (i32, i32) {
    %c0_i32 = arith.constant 0 : i32
    %c0_i32_0 = arith.constant 0 : i32
    %c0_i32_1 = arith.constant 0 : i32
    return %c0_i32, %c0_i32_0 : i32, i32
  }
  func.func @transform_17(%arg0: i32) -> (i32, i32) {
    %c0_i32 = arith.constant 0 : i32
    %c0_i32_0 = arith.constant 0 : i32
    %c0_i32_1 = arith.constant 0 : i32
    return %c0_i32, %c0_i32_0 : i32, i32
  }
  func.func @transform_18(%arg0: i32) -> (i32, i32) {
    %c0_i32 = arith.constant 0 : i32
    %c0_i32_0 = arith.constant 0 : i32
    %c0_i32_1 = arith.constant 0 : i32
    return %c0_i32, %c0_i32_0 : i32, i32
  }
  func.func @transform_19(%arg0: i32) -> (i32, i32) {
    %c0_i32 = arith.constant 0 : i32
    %c0_i32_0 = arith.constant 0 : i32
    %c0_i32_1 = arith.constant 0 : i32
    return %c0_i32, %c0_i32_0 : i32, i32
  }
  func.func @transform_20(%arg0: i32) -> (i32, i32) {
    %c0_i32 = arith.constant 0 : i32
    %c0_i32_0 = arith.constant 0 : i32
    %c0_i32_1 = arith.constant 0 : i32
    return %c0_i32, %c0_i32_0 : i32, i32
  }
  func.func @transform_21(%arg0: i32) -> (i32, i32) {
    %c0_i32 = arith.constant 0 : i32
    %c0_i32_0 = arith.constant 0 : i32
    %c0_i32_1 = arith.constant 0 : i32
    return %c0_i32, %c0_i32_0 : i32, i32
  }
  func.func @transform_22(%arg0: i32) -> (i32, i32) {
    %c0_i32 = arith.constant 0 : i32
    %c0_i32_0 = arith.constant 0 : i32
    %c0_i32_1 = arith.constant 0 : i32
    return %c0_i32, %c0_i32_0 : i32, i32
  }
  func.func @transform_23(%arg0: i32) -> (i32, i32) {
    %c0_i32 = arith.constant 0 : i32
    %c0_i32_0 = arith.constant 0 : i32
    %c0_i32_1 = arith.constant 0 : i32
    return %c0_i32, %c0_i32_0 : i32, i32
  }
  func.func @transform_24(%arg0: i32) -> (i32, i32, i32) {
    %c0_i32 = arith.constant 0 : i32
    %c0_i32_0 = arith.constant 0 : i32
    %c0_i32_1 = arith.constant 0 : i32
    return %arg0, %c0_i32, %c0_i32_0 : i32, i32, i32
  }
}

</mosaic_0001>

<llo_original>
// kernel: _lambda_.3
$region0: #{_lambda_.3}
  #allocation0 [shape = 'u32[]', space=smem, size = 0x4, offset = 0x4, fixed_abs, tag = 'smem constant byte address 0x4 - core index']
  #allocation1 [shape = 'u32[144,128]{1,0:T(1,128)}', space=vmem, size = 0x12000, scoped, tag = 'internal scratch']
  %s0 = inlined_call_operand.vmem [shape: f32[2,48,16], index: 0, kind: input, shape index: {}]
  %s1 = inlined_call_operand.vmem [shape: bf16[16,32], index: 1, kind: input, shape index: {}]
  %s2 = inlined_call_operand.vmem [shape: bf16[48,48], index: 2, kind: input, shape index: {}]
  %s3 = inlined_call_operand.vmem [shape: f32[48,32], index: 3, kind: input, shape index: {}]
  %s4 = inlined_call_operand.vmem [shape: f32[48,32], index: 4, kind: input, shape index: {}]
  %s5 = inlined_call_operand.vmem [shape: bf16[32,32], index: 5, kind: input, shape index: {}]
  %s6 = inlined_call_operand.vmem [shape: bf16[48,48], index: 6, kind: input, shape index: {}]
  %s7 = inlined_call_operand.vmem [shape: f32[48,32], index: 7, kind: input, shape index: {}]
  %s8 = inlined_call_operand.vmem [shape: f32[48,32], index: 8, kind: input, shape index: {}]
  %s9 = inlined_call_operand.vmem [shape: bf16[32,32], index: 9, kind: input, shape index: {}]
  %s10 = inlined_call_operand.vmem [shape: bf16[48,48], index: 10, kind: input, shape index: {}]
  %s11 = inlined_call_operand.vmem [shape: f32[48,32], index: 11, kind: input, shape index: {}]
  %s12 = inlined_call_operand.vmem [shape: f32[48,32], index: 12, kind: input, shape index: {}]
  %s13 = inlined_call_operand.vmem [shape: bf16[32,32], index: 13, kind: input, shape index: {}]
  %s14 = inlined_call_operand.vmem [shape: bf16[48,48], index: 14, kind: input, shape index: {}]
  %s15 = inlined_call_operand.vmem [shape: f32[48,32], index: 15, kind: input, shape index: {}]
  %s16 = inlined_call_operand.vmem [shape: f32[48,32], index: 16, kind: input, shape index: {}]
  %s17 = inlined_call_operand.vmem [shape: bf16[32,32], index: 17, kind: input, shape index: {}]
  %s18 = inlined_call_operand.vmem [shape: bf16[48,48], index: 18, kind: input, shape index: {}]
  %s19 = inlined_call_operand.vmem [shape: f32[48,32], index: 19, kind: input, shape index: {}]
  %s20 = inlined_call_operand.vmem [shape: f32[48,32], index: 20, kind: input, shape index: {}]
  %s21 = inlined_call_operand.vmem [shape: bf16[32,16], index: 21, kind: input, shape index: {}]
  %s22 = inlined_call_operand.vmem [shape: bf16[48,48], index: 22, kind: input, shape index: {}]
  %s23 = inlined_call_operand.vmem [shape: f32[1,16], index: 23, kind: input, shape index: {}]
  %s24 = inlined_call_operand.vmem [shape: f32[2,48,16], index: 24, kind: output, shape index: {}]
  %s25 = sld [smem:[#allocation0]]
  $region129: #{_lambda_.3} parent=0
    _
  %s27 = ssub.s32 1, %s25
  %s28 = scalar_select 0, %s27, %s25
  loop: start=0, step=1, limit=4
  $region2: #{_lambda_.3} parent=0 // loop_pre_header
    _
  $region3: #{_lambda_.3} parent=0 // loop_header
    %s30 = sphi 0, %s34
    %p31 = scmp.ge.s32.totalorder %s30, 4
    %s40 = sphi 0, %s42
    %s43 = sphi 0, %s40
    %s44 = sphi 0, %s43
    %s60 = sphi 0, %s44
    %s64 = sphi 0, %s64
    %s66 = sphi 0, %s64
    %s67 = sphi 0, %s66
    %s81 = sphi 0, %s67
    %s85 = sphi 0, %s85
    %s87 = sphi 0, %s85
    %s88 = sphi 0, %s87
    %s102 = sphi 0, %s88
    %s106 = sphi 0, %s106
    %s108 = sphi 0, %s106
    %s109 = sphi 0, %s108
    %s123 = sphi 0, %s109
    %s127 = sphi 0, %s127
    %s129 = sphi 0, %s127
    %s130 = sphi 0, %s129
    %s144 = sphi 0, %s130
    %s148 = sphi 0, %s148
    %s150 = sphi 0, %s148
    %s151 = sphi 0, %s150
    %s165 = sphi 0, %s151
    %s169 = sphi 0, %s169
    %s171 = sphi 0, %s169
    %s172 = sphi 0, %s171
    %s186 = sphi 0, %s172
    %s190 = sphi 0, %s190
    %s192 = sphi 0, %s190
    %s193 = sphi 0, %s192
    %s207 = sphi 0, %s193
    %s211 = sphi 0, %s211
    %s213 = sphi 0, %s211
    %s214 = sphi 0, %s213
    %s228 = sphi 0, %s214
    %s232 = sphi 0, %s232
    %s234 = sphi 0, %s232
    %s235 = sphi 0, %s234
    %s249 = sphi 0, %s235
    %s253 = sphi 0, %s253
    %s255 = sphi 0, %s253
    %s256 = sphi 0, %s255
    %s270 = sphi 0, %s256
    %s274 = sphi 0, %s274
    %s276 = sphi 0, %s274
    %s277 = sphi 0, %s276
    %s291 = sphi 0, %s277
    %s295 = sphi 0, %s295
    %s297 = sphi 0, %s295
    %s298 = sphi 0, %s297
    %s312 = sphi 0, %s298
    %s316 = sphi 0, %s316
    %s318 = sphi 0, %s316
    %s319 = sphi 0, %s318
    %s333 = sphi 0, %s319
    %s337 = sphi 0, %s337
    %s339 = sphi 0, %s337
    %s340 = sphi 0, %s339
    %s354 = sphi 0, %s340
    %s358 = sphi 0, %s358
    %s360 = sphi 0, %s358
    %s361 = sphi 0, %s360
    %s375 = sphi 0, %s361
    %s379 = sphi 0, %s379
    %s381 = sphi 0, %s379
    %s382 = sphi 0, %s381
    %s396 = sphi 0, %s382
    %s400 = sphi 0, %s400
    %s402 = sphi 0, %s400
    %s403 = sphi 0, %s402
    %s417 = sphi 0, %s403
    %s421 = sphi 0, %s421
    %s423 = sphi 0, %s421
    %s424 = sphi 0, %s423
    %s438 = sphi 0, %s424
    %s442 = sphi 0, %s442
    %s444 = sphi 0, %s442
    %s445 = sphi 0, %s444
    %s459 = sphi 0, %s445
    %s463 = sphi 0, %s463
    %s465 = sphi 0, %s463
    %s466 = sphi 0, %s465
    %s480 = sphi 0, %s466
    %s484 = sphi 0, %s484
    %s486 = sphi 0, %s484
    %s487 = sphi 0, %s486
    %s501 = sphi 0, %s487
    %s505 = sphi 0, %s505
    %s507 = sphi 0, %s505
    %s508 = sphi 0, %s507
    %s522 = sphi 0, %s508
    %s526 = sphi 0, %s526
    %s528 = sphi 0, %s526
    %s529 = sphi 0, %s528
    %s543 = sphi 0, %s529
    %s549 = sphi 0, %s551
    %s552 = sphi 0, %s549
    %s553 = sphi 0, %s552
    %s569 = sphi 0, %s553
  $region4: #{_lambda_.3} parent=0 // loop_header_branch
    %33 = sbr.rel (%p31) target = $region8
  $region5: #{_lambda_.3} parent=0 // loop_body
    %s35 = ssub.s32 %s30, 1
    %s36 = ssub.s32 %s30, 2
    %s37 = sadd.s32 %s30, 1
    %s38 = ssub.s32 %s30, %s37
    %p39 = scmp.eq.s32.totalorder %s38, 0
    %s41 = sadd.s32 %s40, 1
    %s42 = scalar_select %p39, %s40, %s41
    %p45 = pneg %p39
    %p46 = scmp.eq.s32.totalorder %s30, 1
    %p47 = por %p45, %p46
    %p48 = scmp.ne.s32.totalorder %s40, %s43
    %p49 = scmp.eq.s32.totalorder %s30, 0
    %p50 = por %p48, %p49
    %p51 = scmp.ne.s32.totalorder %s40, %s43
    %p52 = scmp.eq.s32.totalorder %s35, 1
    %p53 = por %p51, %p52
    %p54 = scmp.ne.s32.totalorder %s43, %s44
    %p55 = scmp.eq.s32.totalorder %s35, 0
    %p56 = por %p54, %p55
    %p57 = scmp.ne.s32.totalorder %s43, %s44
    %p58 = scmp.eq.s32.totalorder %s36, 1
    %p59 = por %p57, %p58
    %p61 = scmp.ne.s32.totalorder %s44, %s60
    %p62 = scmp.eq.s32.totalorder %s36, 0
    %p63 = por %p61, %p62
    %s65 = sadd.s32 %s64, 1
    %p68 = scmp.eq.s32.totalorder %s30, 1
    %p69 = scmp.ne.s32.totalorder %s64, %s66
    %p70 = scmp.eq.s32.totalorder %s30, 0
    %p71 = por %p69, %p70
    %p72 = scmp.ne.s32.totalorder %s64, %s66
    %p73 = scmp.eq.s32.totalorder %s35, 1
    %p74 = por %p72, %p73
    %p75 = scmp.ne.s32.totalorder %s66, %s67
    %p76 = scmp.eq.s32.totalorder %s35, 0
    %p77 = por %p75, %p76
    %p78 = scmp.ne.s32.totalorder %s66, %s67
    %p79 = scmp.eq.s32.totalorder %s36, 1
    %p80 = por %p78, %p79
    %p82 = scmp.ne.s32.totalorder %s67, %s81
    %p83 = scmp.eq.s32.totalorder %s36, 0
    %p84 = por %p82, %p83
    %s86 = sadd.s32 %s85, 1
    %p89 = scmp.eq.s32.totalorder %s30, 1
    %p90 = scmp.ne.s32.totalorder %s85, %s87
    %p91 = scmp.eq.s32.totalorder %s30, 0
    %p92 = por %p90, %p91
    %p93 = scmp.ne.s32.totalorder %s85, %s87
    %p94 = scmp.eq.s32.totalorder %s35, 1
    %p95 = por %p93, %p94
    %p96 = scmp.ne.s32.totalorder %s87, %s88
    %p97 = scmp.eq.s32.totalorder %s35, 0
    %p98 = por %p96, %p97
    %p99 = scmp.ne.s32.totalorder %s87, %s88
    %p100 = scmp.eq.s32.totalorder %s36, 1
    %p101 = por %p99, %p100
    %p103 = scmp.ne.s32.totalorder %s88, %s102
    %p104 = scmp.eq.s32.totalorder %s36, 0
    %p105 = por %p103, %p104
    %s107 = sadd.s32 %s106, 1
    %p110 = scmp.eq.s32.totalorder %s30, 1
    %p111 = scmp.ne.s32.totalorder %s106, %s108
    %p112 = scmp.eq.s32.totalorder %s30, 0
    %p113 = por %p111, %p112
    %p114 = scmp.ne.s32.totalorder %s106, %s108
    %p115 = scmp.eq.s32.totalorder %s35, 1
    %p116 = por %p114, %p115
    %p117 = scmp.ne.s32.totalorder %s108, %s109
    %p118 = scmp.eq.s32.totalorder %s35, 0
    %p119 = por %p117, %p118
    %p120 = scmp.ne.s32.totalorder %s108, %s109
    %p121 = scmp.eq.s32.totalorder %s36, 1
    %p122 = por %p120, %p121
    %p124 = scmp.ne.s32.totalorder %s109, %s123
    %p125 = scmp.eq.s32.totalorder %s36, 0
    %p126 = por %p124, %p125
    %s128 = sadd.s32 %s127, 1
    %p131 = scmp.eq.s32.totalorder %s30, 1
    %p132 = scmp.ne.s32.totalorder %s127, %s129
    %p133 = scmp.eq.s32.totalorder %s30, 0
    %p134 = por %p132, %p133
    %p135 = scmp.ne.s32.totalorder %s127, %s129
    %p136 = scmp.eq.s32.totalorder %s35, 1
    %p137 = por %p135, %p136
    %p138 = scmp.ne.s32.totalorder %s129, %s130
    %p139 = scmp.eq.s32.totalorder %s35, 0
    %p140 = por %p138, %p139
    %p141 = scmp.ne.s32.totalorder %s129, %s130
    %p142 = scmp.eq.s32.totalorder %s36, 1
    %p143 = por %p141, %p142
    %p145 = scmp.ne.s32.totalorder %s130, %s144
    %p146 = scmp.eq.s32.totalorder %s36, 0
    %p147 = por %p145, %p146
    %s149 = sadd.s32 %s148, 1
    %p152 = scmp.eq.s32.totalorder %s30, 1
    %p153 = scmp.ne.s32.totalorder %s148, %s150
    %p154 = scmp.eq.s32.totalorder %s30, 0
    %p155 = por %p153, %p154
    %p156 = scmp.ne.s32.totalorder %s148, %s150
    %p157 = scmp.eq.s32.totalorder %s35, 1
    %p158 = por %p156, %p157
    %p159 = scmp.ne.s32.totalorder %s150, %s151
    %p160 = scmp.eq.s32.totalorder %s35, 0
    %p161 = por %p159, %p160
    %p162 = scmp.ne.s32.totalorder %s150, %s151
    %p163 = scmp.eq.s32.totalorder %s36, 1
    %p164 = por %p162, %p163
    %p166 = scmp.ne.s32.totalorder %s151, %s165
    %p167 = scmp.eq.s32.totalorder %s36, 0
    %p168 = por %p166, %p167
    %s170 = sadd.s32 %s169, 1
    %p173 = scmp.eq.s32.totalorder %s30, 1
    %p174 = scmp.ne.s32.totalorder %s169, %s171
    %p175 = scmp.eq.s32.totalorder %s30, 0
    %p176 = por %p174, %p175
    %p177 = scmp.ne.s32.totalorder %s169, %s171
    %p178 = scmp.eq.s32.totalorder %s35, 1
    %p179 = por %p177, %p178
    %p180 = scmp.ne.s32.totalorder %s171, %s172
    %p181 = scmp.eq.s32.totalorder %s35, 0
    %p182 = por %p180, %p181
    %p183 = scmp.ne.s32.totalorder %s171, %s172
    %p184 = scmp.eq.s32.totalorder %s36, 1
    %p185 = por %p183, %p184
    %p187 = scmp.ne.s32.totalorder %s172, %s186
    %p188 = scmp.eq.s32.totalorder %s36, 0
    %p189 = por %p187, %p188
    %s191 = sadd.s32 %s190, 1
    %p194 = scmp.eq.s32.totalorder %s30, 1
    %p195 = scmp.ne.s32.totalorder %s190, %s192
    %p196 = scmp.eq.s32.totalorder %s30, 0
    %p197 = por %p195, %p196
    %p198 = scmp.ne.s32.totalorder %s190, %s192
    %p199 = scmp.eq.s32.totalorder %s35, 1
    %p200 = por %p198, %p199
    %p201 = scmp.ne.s32.totalorder %s192, %s193
    %p202 = scmp.eq.s32.totalorder %s35, 0
    %p203 = por %p201, %p202
    %p204 = scmp.ne.s32.totalorder %s192, %s193
    %p205 = scmp.eq.s32.totalorder %s36, 1
    %p206 = por %p204, %p205
    %p208 = scmp.ne.s32.totalorder %s193, %s207
    %p209 = scmp.eq.s32.totalorder %s36, 0
    %p210 = por %p208, %p209
    %s212 = sadd.s32 %s211, 1
    %p215 = scmp.eq.s32.totalorder %s30, 1
    %p216 = scmp.ne.s32.totalorder %s211, %s213
    %p217 = scmp.eq.s32.totalorder %s30, 0
    %p218 = por %p216, %p217
    %p219 = scmp.ne.s32.totalorder %s211, %s213
    %p220 = scmp.eq.s32.totalorder %s35, 1
    %p221 = por %p219, %p220
    %p222 = scmp.ne.s32.totalorder %s213, %s214
    %p223 = scmp.eq.s32.totalorder %s35, 0
    %p224 = por %p222, %p223
    %p225 = scmp.ne.s32.totalorder %s213, %s214
    %p226 = scmp.eq.s32.totalorder %s36, 1
    %p227 = por %p225, %p226
    %p229 = scmp.ne.s32.totalorder %s214, %s228
    %p230 = scmp.eq.s32.totalorder %s36, 0
    %p231 = por %p229, %p230
    %s233 = sadd.s32 %s232, 1
    %p236 = scmp.eq.s32.totalorder %s30, 1
    %p237 = scmp.ne.s32.totalorder %s232, %s234
    %p238 = scmp.eq.s32.totalorder %s30, 0
    %p239 = por %p237, %p238
    %p240 = scmp.ne.s32.totalorder %s232, %s234
    %p241 = scmp.eq.s32.totalorder %s35, 1
    %p242 = por %p240, %p241
    %p243 = scmp.ne.s32.totalorder %s234, %s235
    %p244 = scmp.eq.s32.totalorder %s35, 0
    %p245 = por %p243, %p244
    %p246 = scmp.ne.s32.totalorder %s234, %s235
    %p247 = scmp.eq.s32.totalorder %s36, 1
    %p248 = por %p246, %p247
    %p250 = scmp.ne.s32.totalorder %s235, %s249
    %p251 = scmp.eq.s32.totalorder %s36, 0
    %p252 = por %p250, %p251
    %s254 = sadd.s32 %s253, 1
    %p257 = scmp.eq.s32.totalorder %s30, 1
    %p258 = scmp.ne.s32.totalorder %s253, %s255
    %p259 = scmp.eq.s32.totalorder %s30, 0
    %p260 = por %p258, %p259
    %p261 = scmp.ne.s32.totalorder %s253, %s255
    %p262 = scmp.eq.s32.totalorder %s35, 1
    %p263 = por %p261, %p262
    %p264 = scmp.ne.s32.totalorder %s255, %s256
    %p265 = scmp.eq.s32.totalorder %s35, 0
    %p266 = por %p264, %p265
    %p267 = scmp.ne.s32.totalorder %s255, %s256
    %p268 = scmp.eq.s32.totalorder %s36, 1
    %p269 = por %p267, %p268
    %p271 = scmp.ne.s32.totalorder %s256, %s270
    %p272 = scmp.eq.s32.totalorder %s36, 0
    %p273 = por %p271, %p272
    %s275 = sadd.s32 %s274, 1
    %p278 = scmp.eq.s32.totalorder %s30, 1
    %p279 = scmp.ne.s32.totalorder %s274, %s276
    %p280 = scmp.eq.s32.totalorder %s30, 0
    %p281 = por %p279, %p280
    %p282 = scmp.ne.s32.totalorder %s274, %s276
    %p283 = scmp.eq.s32.totalorder %s35, 1
    %p284 = por %p282, %p283
    %p285 = scmp.ne.s32.totalorder %s276, %s277
    %p286 = scmp.eq.s32.totalorder %s35, 0
    %p287 = por %p285, %p286
    %p288 = scmp.ne.s32.totalorder %s276, %s277
    %p289 = scmp.eq.s32.totalorder %s36, 1
    %p290 = por %p288, %p289
    %p292 = scmp.ne.s32.totalorder %s277, %s291
    %p293 = scmp.eq.s32.totalorder %s36, 0
    %p294 = por %p292, %p293
    %s296 = sadd.s32 %s295, 1
    %p299 = scmp.eq.s32.totalorder %s30, 1
    %p300 = scmp.ne.s32.totalorder %s295, %s297
    %p301 = scmp.eq.s32.totalorder %s30, 0
    %p302 = por %p300, %p301
    %p303 = scmp.ne.s32.totalorder %s295, %s297
    %p304 = scmp.eq.s32.totalorder %s35, 1
    %p305 = por %p303, %p304
    %p306 = scmp.ne.s32.totalorder %s297, %s298
    %p307 = scmp.eq.s32.totalorder %s35, 0
    %p308 = por %p306, %p307
    %p309 = scmp.ne.s32.totalorder %s297, %s298
    %p310 = scmp.eq.s32.totalorder %s36, 1
    %p311 = por %p309, %p310
    %p313 = scmp.ne.s32.totalorder %s298, %s312
    %p314 = scmp.eq.s32.totalorder %s36, 0
    %p315 = por %p313, %p314
    %s317 = sadd.s32 %s316, 1
    %p320 = scmp.eq.s32.totalorder %s30, 1
    %p321 = scmp.ne.s32.totalorder %s316, %s318
    %p322 = scmp.eq.s32.totalorder %s30, 0
    %p323 = por %p321, %p322
    %p324 = scmp.ne.s32.totalorder %s316, %s318
    %p325 = scmp.eq.s32.totalorder %s35, 1
    %p326 = por %p324, %p325
    %p327 = scmp.ne.s32.totalorder %s318, %s319
    %p328 = scmp.eq.s32.totalorder %s35, 0
    %p329 = por %p327, %p328
    %p330 = scmp.ne.s32.totalorder %s318, %s319
    %p331 = scmp.eq.s32.totalorder %s36, 1
    %p332 = por %p330, %p331
    %p334 = scmp.ne.s32.totalorder %s319, %s333
    %p335 = scmp.eq.s32.totalorder %s36, 0
    %p336 = por %p334, %p335
    %s338 = sadd.s32 %s337, 1
    %p341 = scmp.eq.s32.totalorder %s30, 1
    %p342 = scmp.ne.s32.totalorder %s337, %s339
    %p343 = scmp.eq.s32.totalorder %s30, 0
    %p344 = por %p342, %p343
    %p345 = scmp.ne.s32.totalorder %s337, %s339
    %p346 = scmp.eq.s32.totalorder %s35, 1
    %p347 = por %p345, %p346
    %p348 = scmp.ne.s32.totalorder %s339, %s340
    %p349 = scmp.eq.s32.totalorder %s35, 0
    %p350 = por %p348, %p349
    %p351 = scmp.ne.s32.totalorder %s339, %s340
    %p352 = scmp.eq.s32.totalorder %s36, 1
    %p353 = por %p351, %p352
    %p355 = scmp.ne.s32.totalorder %s340, %s354
    %p356 = scmp.eq.s32.totalorder %s36, 0
    %p357 = por %p355, %p356
    %s359 = sadd.s32 %s358, 1
    %p362 = scmp.eq.s32.totalorder %s30, 1
    %p363 = scmp.ne.s32.totalorder %s358, %s360
    %p364 = scmp.eq.s32.totalorder %s30, 0
    %p365 = por %p363, %p364
    %p366 = scmp.ne.s32.totalorder %s358, %s360
    %p367 = scmp.eq.s32.totalorder %s35, 1
    %p368 = por %p366, %p367
    %p369 = scmp.ne.s32.totalorder %s360, %s361
    %p370 = scmp.eq.s32.totalorder %s35, 0
    %p371 = por %p369, %p370
    %p372 = scmp.ne.s32.totalorder %s360, %s361
    %p373 = scmp.eq.s32.totalorder %s36, 1
    %p374 = por %p372, %p373
    %p376 = scmp.ne.s32.totalorder %s361, %s375
    %p377 = scmp.eq.s32.totalorder %s36, 0
    %p378 = por %p376, %p377
    %s380 = sadd.s32 %s379, 1
    %p383 = scmp.eq.s32.totalorder %s30, 1
    %p384 = scmp.ne.s32.totalorder %s379, %s381
    %p385 = scmp.eq.s32.totalorder %s30, 0
    %p386 = por %p384, %p385
    %p387 = scmp.ne.s32.totalorder %s379, %s381
    %p388 = scmp.eq.s32.totalorder %s35, 1
    %p389 = por %p387, %p388
    %p390 = scmp.ne.s32.totalorder %s381, %s382
    %p391 = scmp.eq.s32.totalorder %s35, 0
    %p392 = por %p390, %p391
    %p393 = scmp.ne.s32.totalorder %s381, %s382
    %p394 = scmp.eq.s32.totalorder %s36, 1
    %p395 = por %p393, %p394
    %p397 = scmp.ne.s32.totalorder %s382, %s396
    %p398 = scmp.eq.s32.totalorder %s36, 0
    %p399 = por %p397, %p398
    %s401 = sadd.s32 %s400, 1
    %p404 = scmp.eq.s32.totalorder %s30, 1
    %p405 = scmp.ne.s32.totalorder %s400, %s402
    %p406 = scmp.eq.s32.totalorder %s30, 0
    %p407 = por %p405, %p406
    %p408 = scmp.ne.s32.totalorder %s400, %s402
    %p409 = scmp.eq.s32.totalorder %s35, 1
    %p410 = por %p408, %p409
    %p411 = scmp.ne.s32.totalorder %s402, %s403
    %p412 = scmp.eq.s32.totalorder %s35, 0
    %p413 = por %p411, %p412
    %p414 = scmp.ne.s32.totalorder %s402, %s403
    %p415 = scmp.eq.s32.totalorder %s36, 1
    %p416 = por %p414, %p415
    %p418 = scmp.ne.s32.totalorder %s403, %s417
    %p419 = scmp.eq.s32.totalorder %s36, 0
    %p420 = por %p418, %p419
    %s422 = sadd.s32 %s421, 1
    %p425 = scmp.eq.s32.totalorder %s30, 1
    %p426 = scmp.ne.s32.totalorder %s421, %s423
    %p427 = scmp.eq.s32.totalorder %s30, 0
    %p428 = por %p426, %p427
    %p429 = scmp.ne.s32.totalorder %s421, %s423
    %p430 = scmp.eq.s32.totalorder %s35, 1
    %p431 = por %p429, %p430
    %p432 = scmp.ne.s32.totalorder %s423, %s424
    %p433 = scmp.eq.s32.totalorder %s35, 0
    %p434 = por %p432, %p433
    %p435 = scmp.ne.s32.totalorder %s423, %s424
    %p436 = scmp.eq.s32.totalorder %s36, 1
    %p437 = por %p435, %p436
    %p439 = scmp.ne.s32.totalorder %s424, %s438
    %p440 = scmp.eq.s32.totalorder %s36, 0
    %p441 = por %p439, %p440
    %s443 = sadd.s32 %s442, 1
    %p446 = scmp.eq.s32.totalorder %s30, 1
    %p447 = scmp.ne.s32.totalorder %s442, %s444
    %p448 = scmp.eq.s32.totalorder %s30, 0
    %p449 = por %p447, %p448
    %p450 = scmp.ne.s32.totalorder %s442, %s444
    %p451 = scmp.eq.s32.totalorder %s35, 1
    %p452 = por %p450, %p451
    %p453 = scmp.ne.s32.totalorder %s444, %s445
    %p454 = scmp.eq.s32.totalorder %s35, 0
    %p455 = por %p453, %p454
    %p456 = scmp.ne.s32.totalorder %s444, %s445
    %p457 = scmp.eq.s32.totalorder %s36, 1
    %p458 = por %p456, %p457
    %p460 = scmp.ne.s32.totalorder %s445, %s459
    %p461 = scmp.eq.s32.totalorder %s36, 0
    %p462 = por %p460, %p461
    %s464 = sadd.s32 %s463, 1
    %p467 = scmp.eq.s32.totalorder %s30, 1
    %p468 = scmp.ne.s32.totalorder %s463, %s465
    %p469 = scmp.eq.s32.totalorder %s30, 0
    %p470 = por %p468, %p469
    %p471 = scmp.ne.s32.totalorder %s463, %s465
    %p472 = scmp.eq.s32.totalorder %s35, 1
    %p473 = por %p471, %p472
    %p474 = scmp.ne.s32.totalorder %s465, %s466
    %p475 = scmp.eq.s32.totalorder %s35, 0
    %p476 = por %p474, %p475
    %p477 = scmp.ne.s32.totalorder %s465, %s466
    %p478 = scmp.eq.s32.totalorder %s36, 1
    %p479 = por %p477, %p478
    %p481 = scmp.ne.s32.totalorder %s466, %s480
    %p482 = scmp.eq.s32.totalorder %s36, 0
    %p483 = por %p481, %p482
    %s485 = sadd.s32 %s484, 1
    %p488 = scmp.eq.s32.totalorder %s30, 1
    %p489 = scmp.ne.s32.totalorder %s484, %s486
    %p490 = scmp.eq.s32.totalorder %s30, 0
    %p491 = por %p489, %p490
    %p492 = scmp.ne.s32.totalorder %s484, %s486
    %p493 = scmp.eq.s32.totalorder %s35, 1
    %p494 = por %p492, %p493
    %p495 = scmp.ne.s32.totalorder %s486, %s487
    %p496 = scmp.eq.s32.totalorder %s35, 0
    %p497 = por %p495, %p496
    %p498 = scmp.ne.s32.totalorder %s486, %s487
    %p499 = scmp.eq.s32.totalorder %s36, 1
    %p500 = por %p498, %p499
    %p502 = scmp.ne.s32.totalorder %s487, %s501
    %p503 = scmp.eq.s32.totalorder %s36, 0
    %p504 = por %p502, %p503
    %s506 = sadd.s32 %s505, 1
    %p509 = scmp.eq.s32.totalorder %s30, 1
    %p510 = scmp.ne.s32.totalorder %s505, %s507
    %p511 = scmp.eq.s32.totalorder %s30, 0
    %p512 = por %p510, %p511
    %p513 = scmp.ne.s32.totalorder %s505, %s507
    %p514 = scmp.eq.s32.totalorder %s35, 1
    %p515 = por %p513, %p514
    %p516 = scmp.ne.s32.totalorder %s507, %s508
    %p517 = scmp.eq.s32.totalorder %s35, 0
    %p518 = por %p516, %p517
    %p519 = scmp.ne.s32.totalorder %s507, %s508
    %p520 = scmp.eq.s32.totalorder %s36, 1
    %p521 = por %p519, %p520
    %p523 = scmp.ne.s32.totalorder %s508, %s522
    %p524 = scmp.eq.s32.totalorder %s36, 0
    %p525 = por %p523, %p524
    %s527 = sadd.s32 %s526, 1
    %p530 = scmp.eq.s32.totalorder %s30, 1
    %p531 = scmp.ne.s32.totalorder %s526, %s528
    %p532 = scmp.eq.s32.totalorder %s30, 0
    %p533 = por %p531, %p532
    %p534 = scmp.ne.s32.totalorder %s526, %s528
    %p535 = scmp.eq.s32.totalorder %s35, 1
    %p536 = por %p534, %p535
    %p537 = scmp.ne.s32.totalorder %s528, %s529
    %p538 = scmp.eq.s32.totalorder %s35, 0
    %p539 = por %p537, %p538
    %p540 = scmp.ne.s32.totalorder %s528, %s529
    %p541 = scmp.eq.s32.totalorder %s36, 1
    %p542 = por %p540, %p541
    %p544 = scmp.ne.s32.totalorder %s529, %s543
    %p545 = scmp.eq.s32.totalorder %s36, 0
    %p546 = por %p544, %p545
    %s547 = ssub.s32 %s30, %s37
    %p548 = scmp.eq.s32.totalorder %s547, 0
    %s550 = sadd.s32 %s549, 1
    %s551 = scalar_select %p548, %s549, %s550
    %p554 = pneg %p548
    %p555 = scmp.eq.s32.totalorder %s30, 1
    %p556 = por %p554, %p555
    %p557 = scmp.ne.s32.totalorder %s549, %s552
    %p558 = scmp.eq.s32.totalorder %s30, 0
    %p559 = por %p557, %p558
    %p560 = scmp.ne.s32.totalorder %s549, %s552
    %p561 = scmp.eq.s32.totalorder %s35, 1
    %p562 = por %p560, %p561
    %p563 = scmp.ne.s32.totalorder %s552, %s553
    %p564 = scmp.eq.s32.totalorder %s35, 0
    %p565 = por %p563, %p564
    %p566 = scmp.ne.s32.totalorder %s552, %s553
    %p567 = scmp.eq.s32.totalorder %s36, 1
    %p568 = por %p566, %p567
    %p570 = scmp.ne.s32.totalorder %s553, %s569
    %p571 = scmp.eq.s32.totalorder %s36, 0
    %p572 = por %p570, %p571
    %p573 = scmp.le.s32.totalorder 1, %s30
    %p574 = scmp.lt.s32.totalorder %s30, 3
    %p575 = pnand %p573, %p574
    %p576 = pneg %p575
    // Predicated region
    $region9: #{_lambda_.3} parent=5 // pred_check
      _
    $region10: #{_lambda_.3} parent=5 // pred_check_branch
      %578 = sbr.rel (%p575) target = $region12
    $region11: #{_lambda_.3} parent=5 // pred_region
      %s579 = ssub.s32 %s30, 1
      // Predicated region
      $region13: #{_lambda_.3} parent=11 // pred_check
        %p580 = pneg %p77
      $region14: #{_lambda_.3} parent=11 // pred_check_branch
        %582 = sbr.rel (%p580) target = $region16
      $region15: #{_lambda_.3} parent=11 // pred_region
        _
      $region16: #{_lambda_.3} parent=11 // pred_fallthru
        _
      // Predicated region
      $region17: #{_lambda_.3} parent=11 // pred_check
        %p583 = pneg %p98
      $region18: #{_lambda_.3} parent=11 // pred_check_branch
        %585 = sbr.rel (%p583) target = $region20
      $region19: #{_lambda_.3} parent=11 // pred_region
        _
      $region20: #{_lambda_.3} parent=11 // pred_fallthru
        _
      // Predicated region
      $region21: #{_lambda_.3} parent=11 // pred_check
        %p586 = pneg %p119
      $region22: #{_lambda_.3} parent=11 // pred_check_branch
        %588 = sbr.rel (%p586) target = $region24
      $region23: #{_lambda_.3} parent=11 // pred_region
        _
      $region24: #{_lambda_.3} parent=11 // pred_fallthru
        _
      // Predicated region
      $region25: #{_lambda_.3} parent=11 // pred_check
        %p589 = pneg %p140
      $region26: #{_lambda_.3} parent=11 // pred_check_branch
        %591 = sbr.rel (%p589) target = $region28
      $region27: #{_lambda_.3} parent=11 // pred_region
        _
      $region28: #{_lambda_.3} parent=11 // pred_fallthru
        _
      // Predicated region
      $region29: #{_lambda_.3} parent=11 // pred_check
        %p592 = pneg %p161
      $region30: #{_lambda_.3} parent=11 // pred_check_branch
        %594 = sbr.rel (%p592) target = $region32
      $region31: #{_lambda_.3} parent=11 // pred_region
        _
      $region32: #{_lambda_.3} parent=11 // pred_fallthru
        _
      // Predicated region
      $region33: #{_lambda_.3} parent=11 // pred_check
        %p595 = pneg %p182
      $region34: #{_lambda_.3} parent=11 // pred_check_branch
        %597 = sbr.rel (%p595) target = $region36
      $region35: #{_lambda_.3} parent=11 // pred_region
        _
      $region36: #{_lambda_.3} parent=11 // pred_fallthru
        _
      // Predicated region
      $region37: #{_lambda_.3} parent=11 // pred_check
        %p598 = pneg %p203
      $region38: #{_lambda_.3} parent=11 // pred_check_branch
        %600 = sbr.rel (%p598) target = $region40
      $region39: #{_lambda_.3} parent=11 // pred_region
        _
      $region40: #{_lambda_.3} parent=11 // pred_fallthru
        _
      // Predicated region
      $region41: #{_lambda_.3} parent=11 // pred_check
        %p601 = pneg %p224
      $region42: #{_lambda_.3} parent=11 // pred_check_branch
        %603 = sbr.rel (%p601) target = $region44
      $region43: #{_lambda_.3} parent=11 // pred_region
        _
      $region44: #{_lambda_.3} parent=11 // pred_fallthru
        _
      // Predicated region
      $region45: #{_lambda_.3} parent=11 // pred_check
        %p604 = pneg %p245
      $region46: #{_lambda_.3} parent=11 // pred_check_branch
        %606 = sbr.rel (%p604) target = $region48
      $region47: #{_lambda_.3} parent=11 // pred_region
        _
      $region48: #{_lambda_.3} parent=11 // pred_fallthru
        _
      // Predicated region
      $region49: #{_lambda_.3} parent=11 // pred_check
        %p607 = pneg %p266
      $region50: #{_lambda_.3} parent=11 // pred_check_branch
        %609 = sbr.rel (%p607) target = $region52
      $region51: #{_lambda_.3} parent=11 // pred_region
        _
      $region52: #{_lambda_.3} parent=11 // pred_fallthru
        _
      // Predicated region
      $region53: #{_lambda_.3} parent=11 // pred_check
        %p610 = pneg %p287
      $region54: #{_lambda_.3} parent=11 // pred_check_branch
        %612 = sbr.rel (%p610) target = $region56
      $region55: #{_lambda_.3} parent=11 // pred_region
        _
      $region56: #{_lambda_.3} parent=11 // pred_fallthru
        _
      // Predicated region
      $region57: #{_lambda_.3} parent=11 // pred_check
        %p613 = pneg %p308
      $region58: #{_lambda_.3} parent=11 // pred_check_branch
        %615 = sbr.rel (%p613) target = $region60
      $region59: #{_lambda_.3} parent=11 // pred_region
        _
      $region60: #{_lambda_.3} parent=11 // pred_fallthru
        _
      // Predicated region
      $region61: #{_lambda_.3} parent=11 // pred_check
        %p616 = pneg %p329
      $region62: #{_lambda_.3} parent=11 // pred_check_branch
        %618 = sbr.rel (%p616) target = $region64
      $region63: #{_lambda_.3} parent=11 // pred_region
        _
      $region64: #{_lambda_.3} parent=11 // pred_fallthru
        _
      // Predicated region
      $region65: #{_lambda_.3} parent=11 // pred_check
        %p619 = pneg %p350
      $region66: #{_lambda_.3} parent=11 // pred_check_branch
        %621 = sbr.rel (%p619) target = $region68
      $region67: #{_lambda_.3} parent=11 // pred_region
        _
      $region68: #{_lambda_.3} parent=11 // pred_fallthru
        _
      // Predicated region
      $region69: #{_lambda_.3} parent=11 // pred_check
        %p622 = pneg %p371
      $region70: #{_lambda_.3} parent=11 // pred_check_branch
        %624 = sbr.rel (%p622) target = $region72
      $region71: #{_lambda_.3} parent=11 // pred_region
        _
      $region72: #{_lambda_.3} parent=11 // pred_fallthru
        _
      // Predicated region
      $region73: #{_lambda_.3} parent=11 // pred_check
        %p625 = pneg %p392
      $region74: #{_lambda_.3} parent=11 // pred_check_branch
        %627 = sbr.rel (%p625) target = $region76
      $region75: #{_lambda_.3} parent=11 // pred_region
        _
      $region76: #{_lambda_.3} parent=11 // pred_fallthru
        _
      // Predicated region
      $region77: #{_lambda_.3} parent=11 // pred_check
        %p628 = pneg %p413
      $region78: #{_lambda_.3} parent=11 // pred_check_branch
        %630 = sbr.rel (%p628) target = $region80
      $region79: #{_lambda_.3} parent=11 // pred_region
        _
      $region80: #{_lambda_.3} parent=11 // pred_fallthru
        _
      // Predicated region
      $region81: #{_lambda_.3} parent=11 // pred_check
        %p631 = pneg %p434
      $region82: #{_lambda_.3} parent=11 // pred_check_branch
        %633 = sbr.rel (%p631) target = $region84
      $region83: #{_lambda_.3} parent=11 // pred_region
        _
      $region84: #{_lambda_.3} parent=11 // pred_fallthru
        _
      // Predicated region
      $region85: #{_lambda_.3} parent=11 // pred_check
        %p634 = pneg %p455
      $region86: #{_lambda_.3} parent=11 // pred_check_branch
        %636 = sbr.rel (%p634) target = $region88
      $region87: #{_lambda_.3} parent=11 // pred_region
        _
      $region88: #{_lambda_.3} parent=11 // pred_fallthru
        _
      // Predicated region
      $region89: #{_lambda_.3} parent=11 // pred_check
        %p637 = pneg %p476
      $region90: #{_lambda_.3} parent=11 // pred_check_branch
        %639 = sbr.rel (%p637) target = $region92
      $region91: #{_lambda_.3} parent=11 // pred_region
        _
      $region92: #{_lambda_.3} parent=11 // pred_fallthru
        _
      // Predicated region
      $region93: #{_lambda_.3} parent=11 // pred_check
        %p640 = pneg %p497
      $region94: #{_lambda_.3} parent=11 // pred_check_branch
        %642 = sbr.rel (%p640) target = $region96
      $region95: #{_lambda_.3} parent=11 // pred_region
        _
      $region96: #{_lambda_.3} parent=11 // pred_fallthru
        _
      // Predicated region
      $region97: #{_lambda_.3} parent=11 // pred_check
        %p643 = pneg %p518
      $region98: #{_lambda_.3} parent=11 // pred_check_branch
        %645 = sbr.rel (%p643) target = $region100
      $region99: #{_lambda_.3} parent=11 // pred_region
        _
      $region100: #{_lambda_.3} parent=11 // pred_fallthru
        _
      // Predicated region
      $region101: #{_lambda_.3} parent=11 // pred_check
        %p646 = pneg %p539
      $region102: #{_lambda_.3} parent=11 // pred_check_branch
        %648 = sbr.rel (%p646) target = $region104
      $region103: #{_lambda_.3} parent=11 // pred_region
        _
      $region104: #{_lambda_.3} parent=11 // pred_fallthru
        _
    $region12: #{_lambda_.3} parent=5 // pred_fallthru
      _
    %p649 = scmp.lt.s32.totalorder %s30, 2
    // Predicated region
    $region105: #{_lambda_.3} parent=5 // pred_check
      %p650 = pneg %p649
    $region106: #{_lambda_.3} parent=5 // pred_check_branch
      %652 = sbr.rel (%p650) target = $region108
    $region107: #{_lambda_.3} parent=5 // pred_region
      // Predicated region
      $region109: #{_lambda_.3} parent=107 // pred_check
        %p653 = pneg %p50
      $region110: #{_lambda_.3} parent=107 // pred_check_branch
        %655 = sbr.rel (%p653) target = $region112
      $region111: #{_lambda_.3} parent=107 // pred_region
        %p656 = scmp.lt.s32.totalorder %s30, 1
        %s657 = scalar_select %p656, %s30, 1
        %s658 = smul.addr %s657, 6
        %s659 = smul.addr %s658, 8
        %s660 = scalar_lea.vmem %s0, %s659
      $region112: #{_lambda_.3} parent=107 // pred_fallthru
        _
    $region108: #{_lambda_.3} parent=5 // pred_fallthru
      _
    %p661 = scmp.le.s32.totalorder 1, %s30
    %p662 = scmp.lt.s32.totalorder %s30, 3
    %p663 = pnand %p661, %p662
    %p664 = pneg %p663
    // Predicated region
    $region113: #{_lambda_.3} parent=5 // pred_check
      _
    $region114: #{_lambda_.3} parent=5 // pred_check_branch
      %666 = sbr.rel (%p663) target = $region116
    $region115: #{_lambda_.3} parent=5 // pred_region
      %s667 = ssub.s32 %s30, 1
      %p668 = scmp.lt.s32.totalorder %s35, 1
      %s669 = scalar_select %p668, %s35, 1
      %s670 = smul.addr %s669, 6
      %s671 = smul.addr %s670, 8
      %s672 = scalar_lea.vmem %s0, %s671
      %p673 = pneg %p56
      %p674 = pneg %p53
      %p675 = pneg %p77
      %p676 = pneg %p74
      %p677 = pneg %p98
      %p678 = pneg %p95
      %p679 = pneg %p119
      %p680 = pneg %p116
      %p681 = pneg %p140
      %p682 = pneg %p137
      %p683 = pneg %p161
      %p684 = pneg %p158
      %p685 = pneg %p182
      %p686 = pneg %p179
      %p687 = pneg %p203
      %p688 = pneg %p200
      %p689 = pneg %p224
      %p690 = pneg %p221
      %p691 = pneg %p245
      %p692 = pneg %p242
      %p693 = pneg %p266
      %p694 = pneg %p263
      %p695 = pneg %p287
      %p696 = pneg %p284
      %p697 = pneg %p308
      %p698 = pneg %p305
      %p699 = pneg %p329
      %p700 = pneg %p326
      %p701 = pneg %p350
      %p702 = pneg %p347
      %p703 = pneg %p371
      %p704 = pneg %p368
      %p705 = pneg %p392
      %p706 = pneg %p389
      %p707 = pneg %p413
      %p708 = pneg %p410
      %p709 = pneg %p434
      %p710 = pneg %p431
      %p711 = pneg %p455
      %p712 = pneg %p452
      %p713 = pneg %p476
      %p714 = pneg %p473
      %p715 = pneg %p497
      %p716 = pneg %p494
      %p717 = pneg %p518
      %p718 = pneg %p515
      %p719 = pneg %p539
      %p720 = pneg %p536
      %p721 = pneg %p565
      %p722 = pneg %p562
      %p723 = scmp.lt.s32.totalorder %s35, 1
      %s724 = scalar_select %p723, %s35, 1
      %s725 = smul.addr %s724, 6
      %s726 = smul.addr %s725, 8
      %s727 = scalar_lea.vmem %s24, %s726
      %p728 = scmp.lt.s32.totalorder %s35, 1
      %s729 = scalar_select %p728, %s35, 1
      %s730 = smul.addr %s729, 6
      %s731 = smul.addr %s730, 8
      %s732 = scalar_lea.vmem %s0, %s731
      %p733 = scmp.lt.s32.totalorder %s35, 1
      %s734 = scalar_select %p733, %s35, 1
      %s735 = smul.addr %s734, 6
      %s736 = smul.addr %s735, 8
      %s737 = scalar_lea.vmem %s24, %s736
      %v739 = vld [vmem:[%s732] sm:$0xff]
      %v740 = vld [vmem:[%s732 + $0x8] sm:$0xff]
      %v741 = vld [vmem:[%s732 + $0x10] sm:$0xff]
      %v742 = vld [vmem:[%s732 + $0x18] sm:$0xff]
      %v743 = vld [vmem:[%s732 + $0x20] sm:$0xff]
      %v744 = vld [vmem:[%s732 + $0x28] sm:$0xff]
      %v745 = vld [vmem:[%s2] sm:$0xf]
      %v746 = vld [vmem:[%s2 + $0x4] sm:$0xf]
      %v747 = vld [vmem:[%s2 + $0x8] sm:$0xf]
      %v748 = vld [vmem:[%s2 + $0xc] sm:$0xf]
      %v749 = vld [vmem:[%s2 + $0x10] sm:$0xf]
      %v750 = vld [vmem:[%s2 + $0x14] sm:$0xf]
      %v751 = vpack.c.bf16 %v740, %v739
      %v752 = vpack.c.bf16 %v742, %v741
      %v753 = vpack.c.bf16 %v744, %v743
      %v760 = vunpack.c.l.b16 %v745
      %v761 = vunpack.c.l.b16 %v746
      %v762 = vunpack.c.l.b16 %v747
      %v763 = vunpack.c.l.b16 %v748
      %v764 = vunpack.c.l.b16 %v749
      %v765 = vunpack.c.l.b16 %v750
      %v766 = vpack.c.b16 %v761, %v760
      %v767 = vpack.c.b16 %v763, %v762
      %v768 = vpack.c.b16 %v765, %v764
      %vm769 = vcmask 392192
      %v771 = vsel %vm769, %v766, 0
      %v774 = vsel %vm769, %v767, 0
      %v777 = vsel %vm769, %v768, 0
      %779 = vmatprep.subr.bf16.mxu0 0
      %780 = vmatpush1.bf16.msra.mxu0 0
      %781 = vmatprep.subr.bf16.mxu0 0
      %782 = vmatpush1.bf16.msra.mxu0 0
      %783 = vmatprep.subr.bf16.mxu0 0
      %784 = vmatpush1.bf16.msra.mxu0 0
      %785 = vmatprep.subr.bf16.mxu0 0
      %786 = vmatpush1.bf16.msra.mxu0 0
      %787 = vmatprep.subr.bf16.mxu0 0
      %788 = vmatpush1.bf16.msra.mxu0 0
      %789 = vmatprep.subr.bf16.mxu0 0
      %790 = vmatpush1.bf16.msra.mxu0 %v753
      %791 = vmatprep.subr.bf16.mxu0 0
      %792 = vmatpush1.bf16.msra.mxu0 %v752
      %793 = vmatprep.subr.bf16.mxu0 0
      %794 = vmatpush1.bf16.msra.mxu0 %v751
      %795 = vmatprep.subr.bf16.mxu0 0
      %796 = vmatpush2.bf16.msra.mxu0 0
      %797 = vmatprep.subr.bf16.mxu0 0
      %798 = vmatpush2.bf16.msra.mxu0 0
      %799 = vmatprep.subr.bf16.mxu0 0
      %800 = vmatpush2.bf16.msra.mxu0 0
      %801 = vmatprep.subr.bf16.mxu0 0
      %802 = vmatpush2.bf16.msra.mxu0 0
      %803 = vmatprep.subr.bf16.mxu0 0
      %804 = vmatpush2.bf16.msra.mxu0 0
      %805 = vmatprep.subr.bf16.mxu0 0
      %806 = vmatpush2.bf16.msra.mxu0 0
      %807 = vmatprep.subr.bf16.mxu0 0
      %808 = vmatpush2.bf16.msra.mxu0 0
      %809 = vmatprep.subr.bf16.mxu0 0
      %810 = vmatpush2.bf16.msra.mxu0 0
      %811 = vmatprep.mubr.bf16.mxu0 0
      %812 = vmatmul.mubr.bf16.gmra.mxu0 %v771
      %v813 = vpop.f32.mrf.mxu0
      %v814 = vadd.f32 0.0, %v813
      %v815 = vpop.f32.mrf.mxu0
      %v816 = vpop.f32.mrf.mxu0
      %v817 = vadd.f32 0.0, %v816
      %v818 = vpop.f32.mrf.mxu0
      %819 = vmatprep.mubr.bf16.mxu0 0
      %820 = vmatmul.mubr.bf16.gmra.mxu0 %v774
      %v821 = vpop.f32.mrf.mxu0
      %v822 = vadd.f32 0.0, %v821
      %v823 = vpop.f32.mrf.mxu0
      %v824 = vpop.f32.mrf.mxu0
      %v825 = vadd.f32 0.0, %v824
      %v826 = vpop.f32.mrf.mxu0
      %827 = vmatprep.mubr.bf16.mxu0 0
      %828 = vmatmul.mubr.bf16.gmra.mxu0 %v777
      %v829 = vpop.f32.mrf.mxu0
      %v830 = vadd.f32 0.0, %v829
      %v831 = vpop.f32.mrf.mxu0
      %v832 = vpop.f32.mrf.mxu0
      %v833 = vadd.f32 0.0, %v832
      %v834 = vpop.f32.mrf.mxu0
      %835 = vdwg.mxu0
      %v836 = vpack.c.bf16 %v817, %v814
      %v837 = vpack.c.bf16 %v825, %v822
      %v838 = vpack.c.bf16 %v833, %v830
      %v839 = vld [vmem:[%s1] sm:$0xf]
      %v840 = vld [vmem:[%s1 + $0x4] sm:$0xf]
      %v843 = vunpack.c.l.b16 %v839
      %v844 = vunpack.c.l.b16 %v840
      %v845 = vpack.c.b16 %v844, %v843
      %vm847 = vcmask 130048
      %v849 = vsel %vm847, %v836, 0
      %v852 = vsel %vm847, %v837, 0
      %v855 = vsel %vm847, %v838, 0
      %857 = vmatprep.subr.bf16.mxu0 0
      %858 = vmatpush1.bf16.msra.mxu0 0
      %859 = vmatprep.subr.bf16.mxu0 0
      %860 = vmatpush1.bf16.msra.mxu0 0
      %861 = vmatprep.subr.bf16.mxu0 0
      %862 = vmatpush1.bf16.msra.mxu0 0
      %863 = vmatprep.subr.bf16.mxu0 0
      %864 = vmatpush1.bf16.msra.mxu0 0
      %865 = vmatprep.subr.bf16.mxu0 0
      %866 = vmatpush1.bf16.msra.mxu0 0
      %867 = vmatprep.subr.bf16.mxu0 0
      %868 = vmatpush1.bf16.msra.mxu0 0
      %869 = vmatprep.subr.bf16.mxu0 0
      %870 = vmatpush1.bf16.msra.mxu0 0
      %871 = vmatprep.subr.bf16.mxu0 0
      %872 = vmatpush1.bf16.msra.mxu0 %v845
      %873 = vmatprep.subr.bf16.mxu0 0
      %874 = vmatpush2.bf16.msra.mxu0 0
      %875 = vmatprep.subr.bf16.mxu0 0
      %876 = vmatpush2.bf16.msra.mxu0 0
      %877 = vmatprep.subr.bf16.mxu0 0
      %878 = vmatpush2.bf16.msra.mxu0 0
      %879 = vmatprep.subr.bf16.mxu0 0
      %880 = vmatpush2.bf16.msra.mxu0 0
      %881 = vmatprep.subr.bf16.mxu0 0
      %882 = vmatpush2.bf16.msra.mxu0 0
      %883 = vmatprep.subr.bf16.mxu0 0
      %884 = vmatpush2.bf16.msra.mxu0 0
      %885 = vmatprep.subr.bf16.mxu0 0
      %886 = vmatpush2.bf16.msra.mxu0 0
      %887 = vmatprep.subr.bf16.mxu0 0
      %888 = vmatpush2.bf16.msra.mxu0 0
      %889 = vmatprep.mubr.bf16.mxu0 0
      %890 = vmatmul.mubr.bf16.gmra.mxu0 %v849
      %v891 = vpop.f32.mrf.mxu0
      %v892 = vadd.f32 0.0, %v891
      %v893 = vpop.f32.mrf.mxu0
      %v894 = vpop.f32.mrf.mxu0
      %v895 = vadd.f32 0.0, %v894
      %v896 = vpop.f32.mrf.mxu0
      %897 = vmatprep.mubr.bf16.mxu0 0
      %898 = vmatmul.mubr.bf16.gmra.mxu0 %v852
      %v899 = vpop.f32.mrf.mxu0
      %v900 = vadd.f32 0.0, %v899
      %v901 = vpop.f32.mrf.mxu0
      %v902 = vpop.f32.mrf.mxu0
      %v903 = vadd.f32 0.0, %v902
      %v904 = vpop.f32.mrf.mxu0
      %905 = vmatprep.mubr.bf16.mxu0 0
      %906 = vmatmul.mubr.bf16.gmra.mxu0 %v855
      %v907 = vpop.f32.mrf.mxu0
      %v908 = vadd.f32 0.0, %v907
      %v909 = vpop.f32.mrf.mxu0
      %v910 = vpop.f32.mrf.mxu0
      %v911 = vadd.f32 0.0, %v910
      %v912 = vpop.f32.mrf.mxu0
      %913 = vdwg.mxu0
      %v914 = vld [vmem:[%s3] sm:$0xff]
      %v915 = vld [vmem:[%s3 + $0x8] sm:$0xff]
      %v916 = vld [vmem:[%s3 + $0x10] sm:$0xff]
      %v917 = vld [vmem:[%s3 + $0x18] sm:$0xff]
      %v918 = vld [vmem:[%s3 + $0x20] sm:$0xff]
      %v919 = vld [vmem:[%s3 + $0x28] sm:$0xff]
      %v920 = vmul.f32 %v892, %v914
      %v921 = vmul.f32 %v895, %v915
      %v922 = vmul.f32 %v900, %v916
      %v923 = vmul.f32 %v903, %v917
      %v924 = vmul.f32 %v908, %v918
      %v925 = vmul.f32 %v911, %v919
      %v926 = vld [vmem:[%s4] sm:$0xff]
      %v927 = vld [vmem:[%s4 + $0x8] sm:$0xff]
      %v928 = vld [vmem:[%s4 + $0x10] sm:$0xff]
      %v929 = vld [vmem:[%s4 + $0x18] sm:$0xff]
      %v930 = vld [vmem:[%s4 + $0x20] sm:$0xff]
      %v931 = vld [vmem:[%s4 + $0x28] sm:$0xff]
      %v932 = vadd.f32 %v920, %v926
      %v933 = vadd.f32 %v921, %v927
      %v934 = vadd.f32 %v922, %v928
      %v935 = vadd.f32 %v923, %v929
      %v936 = vadd.f32 %v924, %v930
      %v937 = vadd.f32 %v925, %v931
      %v938 = vtanh.pop %v932
      %v939 = vtanh.pop %v933
      %v940 = vtanh.pop %v934
      %v941 = vtanh.pop %v935
      %v942 = vtanh.pop %v936
      %v943 = vtanh.pop %v937
      %v944 = vpack.c.bf16 %v939, %v938
      %v945 = vpack.c.bf16 %v941, %v940
      %v946 = vpack.c.bf16 %v943, %v942
      %v947 = vld [vmem:[%s5] sm:$0xf]
      %v948 = vld [vmem:[%s5 + $0x4] sm:$0xf]
      %v949 = vld [vmem:[%s5 + $0x8] sm:$0xf]
      %v950 = vld [vmem:[%s5 + $0xc] sm:$0xf]
      %v955 = vunpack.c.l.b16 %v947
      %v956 = vunpack.c.l.b16 %v948
      %v957 = vunpack.c.l.b16 %v949
      %v958 = vunpack.c.l.b16 %v950
      %v959 = vpack.c.b16 %v956, %v955
      %v960 = vpack.c.b16 %v958, %v957
      %vm963 = vcmask 261120
      %v965 = vsel %vm963, %v944, 0
      %v968 = vsel %vm963, %v945, 0
      %v971 = vsel %vm963, %v946, 0
      %973 = vmatprep.subr.bf16.mxu0 0
      %974 = vmatpush1.bf16.msra.mxu0 0
      %975 = vmatprep.subr.bf16.mxu0 0
      %976 = vmatpush1.bf16.msra.mxu0 0
      %977 = vmatprep.subr.bf16.mxu0 0
      %978 = vmatpush1.bf16.msra.mxu0 0
      %979 = vmatprep.subr.bf16.mxu0 0
      %980 = vmatpush1.bf16.msra.mxu0 0
      %981 = vmatprep.subr.bf16.mxu0 0
      %982 = vmatpush1.bf16.msra.mxu0 0
      %983 = vmatprep.subr.bf16.mxu0 0
      %984 = vmatpush1.bf16.msra.mxu0 0
      %985 = vmatprep.subr.bf16.mxu0 0
      %986 = vmatpush1.bf16.msra.mxu0 %v960
      %987 = vmatprep.subr.bf16.mxu0 0
      %988 = vmatpush1.bf16.msra.mxu0 %v959
      %989 = vmatprep.subr.bf16.mxu0 0
      %990 = vmatpush2.bf16.msra.mxu0 0
      %991 = vmatprep.subr.bf16.mxu0 0
      %992 = vmatpush2.bf16.msra.mxu0 0
      %993 = vmatprep.subr.bf16.mxu0 0
      %994 = vmatpush2.bf16.msra.mxu0 0
      %995 = vmatprep.subr.bf16.mxu0 0
      %996 = vmatpush2.bf16.msra.mxu0 0
      %997 = vmatprep.subr.bf16.mxu0 0
      %998 = vmatpush2.bf16.msra.mxu0 0
      %999 = vmatprep.subr.bf16.mxu0 0
      %1000 = vmatpush2.bf16.msra.mxu0 0
      %1001 = vmatprep.subr.bf16.mxu0 0
      %1002 = vmatpush2.bf16.msra.mxu0 0
      %1003 = vmatprep.subr.bf16.mxu0 0
      %1004 = vmatpush2.bf16.msra.mxu0 0
      %1005 = vmatprep.mubr.bf16.mxu0 0
      %1006 = vmatmul.mubr.bf16.gmra.mxu0 %v965
      %v1007 = vpop.f32.mrf.mxu0
      %v1008 = vadd.f32 0.0, %v1007
      %v1009 = vpop.f32.mrf.mxu0
      %v1010 = vpop.f32.mrf.mxu0
      %v1011 = vadd.f32 0.0, %v1010
      %v1012 = vpop.f32.mrf.mxu0
      %1013 = vmatprep.mubr.bf16.mxu0 0
      %1014 = vmatmul.mubr.bf16.gmra.mxu0 %v968
      %v1015 = vpop.f32.mrf.mxu0
      %v1016 = vadd.f32 0.0, %v1015
      %v1017 = vpop.f32.mrf.mxu0
      %v1018 = vpop.f32.mrf.mxu0
      %v1019 = vadd.f32 0.0, %v1018
      %v1020 = vpop.f32.mrf.mxu0
      %1021 = vmatprep.mubr.bf16.mxu0 0
      %1022 = vmatmul.mubr.bf16.gmra.mxu0 %v971
      %v1023 = vpop.f32.mrf.mxu0
      %v1024 = vadd.f32 0.0, %v1023
      %v1025 = vpop.f32.mrf.mxu0
      %v1026 = vpop.f32.mrf.mxu0
      %v1027 = vadd.f32 0.0, %v1026
      %v1028 = vpop.f32.mrf.mxu0
      %1029 = vdwg.mxu0
      %v1030 = vld [vmem:[%s6] sm:$0xf]
      %v1031 = vld [vmem:[%s6 + $0x4] sm:$0xf]
      %v1032 = vld [vmem:[%s6 + $0x8] sm:$0xf]
      %v1033 = vld [vmem:[%s6 + $0xc] sm:$0xf]
      %v1034 = vld [vmem:[%s6 + $0x10] sm:$0xf]
      %v1035 = vld [vmem:[%s6 + $0x14] sm:$0xf]
      %v1036 = vpack.c.bf16 %v1011, %v1008
      %v1037 = vpack.c.bf16 %v1019, %v1016
      %v1038 = vpack.c.bf16 %v1027, %v1024
      %v1045 = vunpack.c.l.b16 %v1030
      %v1046 = vunpack.c.l.b16 %v1031
      %v1047 = vunpack.c.l.b16 %v1032
      %v1048 = vunpack.c.l.b16 %v1033
      %v1049 = vunpack.c.l.b16 %v1034
      %v1050 = vunpack.c.l.b16 %v1035
      %v1051 = vpack.c.b16 %v1046, %v1045
      %v1052 = vpack.c.b16 %v1048, %v1047
      %v1053 = vpack.c.b16 %v1050, %v1049
      %v1055 = vsel %vm769, %v1051, 0
      %v1058 = vsel %vm769, %v1052, 0
      %v1061 = vsel %vm769, %v1053, 0
      %1063 = vmatprep.subr.bf16.mxu0 0
      %1064 = vmatpush1.bf16.msra.mxu0 0
      %1065 = vmatprep.subr.bf16.mxu0 0
      %1066 = vmatpush1.bf16.msra.mxu0 0
      %1067 = vmatprep.subr.bf16.mxu0 0
      %1068 = vmatpush1.bf16.msra.mxu0 0
      %1069 = vmatprep.subr.bf16.mxu0 0
      %1070 = vmatpush1.bf16.msra.mxu0 0
      %1071 = vmatprep.subr.bf16.mxu0 0
      %1072 = vmatpush1.bf16.msra.mxu0 0
      %1073 = vmatprep.subr.bf16.mxu0 0
      %1074 = vmatpush1.bf16.msra.mxu0 %v1038
      %1075 = vmatprep.subr.bf16.mxu0 0
      %1076 = vmatpush1.bf16.msra.mxu0 %v1037
      %1077 = vmatprep.subr.bf16.mxu0 0
      %1078 = vmatpush1.bf16.msra.mxu0 %v1036
      %1079 = vmatprep.subr.bf16.mxu0 0
      %1080 = vmatpush2.bf16.msra.mxu0 0
      %1081 = vmatprep.subr.bf16.mxu0 0
      %1082 = vmatpush2.bf16.msra.mxu0 0
      %1083 = vmatprep.subr.bf16.mxu0 0
      %1084 = vmatpush2.bf16.msra.mxu0 0
      %1085 = vmatprep.subr.bf16.mxu0 0
      %1086 = vmatpush2.bf16.msra.mxu0 0
      %1087 = vmatprep.subr.bf16.mxu0 0
      %1088 = vmatpush2.bf16.msra.mxu0 0
      %1089 = vmatprep.subr.bf16.mxu0 0
      %1090 = vmatpush2.bf16.msra.mxu0 0
      %1091 = vmatprep.subr.bf16.mxu0 0
      %1092 = vmatpush2.bf16.msra.mxu0 0
      %1093 = vmatprep.subr.bf16.mxu0 0
      %1094 = vmatpush2.bf16.msra.mxu0 0
      %1095 = vmatprep.mubr.bf16.mxu0 0
      %1096 = vmatmul.mubr.bf16.gmra.mxu0 %v1055
      %v1097 = vpop.f32.mrf.mxu0
      %v1098 = vadd.f32 0.0, %v1097
      %v1099 = vpop.f32.mrf.mxu0
      %v1100 = vpop.f32.mrf.mxu0
      %v1101 = vadd.f32 0.0, %v1100
      %v1102 = vpop.f32.mrf.mxu0
      %1103 = vmatprep.mubr.bf16.mxu0 0
      %1104 = vmatmul.mubr.bf16.gmra.mxu0 %v1058
      %v1105 = vpop.f32.mrf.mxu0
      %v1106 = vadd.f32 0.0, %v1105
      %v1107 = vpop.f32.mrf.mxu0
      %v1108 = vpop.f32.mrf.mxu0
      %v1109 = vadd.f32 0.0, %v1108
      %v1110 = vpop.f32.mrf.mxu0
      %1111 = vmatprep.mubr.bf16.mxu0 0
      %1112 = vmatmul.mubr.bf16.gmra.mxu0 %v1061
      %v1113 = vpop.f32.mrf.mxu0
      %v1114 = vadd.f32 0.0, %v1113
      %v1115 = vpop.f32.mrf.mxu0
      %v1116 = vpop.f32.mrf.mxu0
      %v1117 = vadd.f32 0.0, %v1116
      %v1118 = vpop.f32.mrf.mxu0
      %1119 = vdwg.mxu0
      %v1120 = vld [vmem:[%s7] sm:$0xff]
      %v1121 = vld [vmem:[%s7 + $0x8] sm:$0xff]
      %v1122 = vld [vmem:[%s7 + $0x10] sm:$0xff]
      %v1123 = vld [vmem:[%s7 + $0x18] sm:$0xff]
      %v1124 = vld [vmem:[%s7 + $0x20] sm:$0xff]
      %v1125 = vld [vmem:[%s7 + $0x28] sm:$0xff]
      %v1126 = vmul.f32 %v1098, %v1120
      %v1127 = vmul.f32 %v1101, %v1121
      %v1128 = vmul.f32 %v1106, %v1122
      %v1129 = vmul.f32 %v1109, %v1123
      %v1130 = vmul.f32 %v1114, %v1124
      %v1131 = vmul.f32 %v1117, %v1125
      %v1132 = vld [vmem:[%s8] sm:$0xff]
      %v1133 = vld [vmem:[%s8 + $0x8] sm:$0xff]
      %v1134 = vld [vmem:[%s8 + $0x10] sm:$0xff]
      %v1135 = vld [vmem:[%s8 + $0x18] sm:$0xff]
      %v1136 = vld [vmem:[%s8 + $0x20] sm:$0xff]
      %v1137 = vld [vmem:[%s8 + $0x28] sm:$0xff]
      %v1138 = vadd.f32 %v1126, %v1132
      %v1139 = vadd.f32 %v1127, %v1133
      %v1140 = vadd.f32 %v1128, %v1134
      %v1141 = vadd.f32 %v1129, %v1135
      %v1142 = vadd.f32 %v1130, %v1136
      %v1143 = vadd.f32 %v1131, %v1137
      %v1144 = vtanh.pop %v1138
      %v1145 = vtanh.pop %v1139
      %v1146 = vtanh.pop %v1140
      %v1147 = vtanh.pop %v1141
      %v1148 = vtanh.pop %v1142
      %v1149 = vtanh.pop %v1143
      %v1150 = vpack.c.bf16 %v1145, %v1144
      %v1151 = vpack.c.bf16 %v1147, %v1146
      %v1152 = vpack.c.bf16 %v1149, %v1148
      %v1153 = vld [vmem:[%s9] sm:$0xf]
      %v1154 = vld [vmem:[%s9 + $0x4] sm:$0xf]
      %v1155 = vld [vmem:[%s9 + $0x8] sm:$0xf]
      %v1156 = vld [vmem:[%s9 + $0xc] sm:$0xf]
      %v1161 = vunpack.c.l.b16 %v1153
      %v1162 = vunpack.c.l.b16 %v1154
      %v1163 = vunpack.c.l.b16 %v1155
      %v1164 = vunpack.c.l.b16 %v1156
      %v1165 = vpack.c.b16 %v1162, %v1161
      %v1166 = vpack.c.b16 %v1164, %v1163
      %v1170 = vsel %vm963, %v1150, 0
      %v1173 = vsel %vm963, %v1151, 0
      %v1176 = vsel %vm963, %v1152, 0
      %1178 = vmatprep.subr.bf16.mxu0 0
      %1179 = vmatpush1.bf16.msra.mxu0 0
      %1180 = vmatprep.subr.bf16.mxu0 0
      %1181 = vmatpush1.bf16.msra.mxu0 0
      %1182 = vmatprep.subr.bf16.mxu0 0
      %1183 = vmatpush1.bf16.msra.mxu0 0
      %1184 = vmatprep.subr.bf16.mxu0 0
      %1185 = vmatpush1.bf16.msra.mxu0 0
      %1186 = vmatprep.subr.bf16.mxu0 0
      %1187 = vmatpush1.bf16.msra.mxu0 0
      %1188 = vmatprep.subr.bf16.mxu0 0
      %1189 = vmatpush1.bf16.msra.mxu0 0
      %1190 = vmatprep.subr.bf16.mxu0 0
      %1191 = vmatpush1.bf16.msra.mxu0 %v1166
      %1192 = vmatprep.subr.bf16.mxu0 0
      %1193 = vmatpush1.bf16.msra.mxu0 %v1165
      %1194 = vmatprep.subr.bf16.mxu0 0
      %1195 = vmatpush2.bf16.msra.mxu0 0
      %1196 = vmatprep.subr.bf16.mxu0 0
      %1197 = vmatpush2.bf16.msra.mxu0 0
      %1198 = vmatprep.subr.bf16.mxu0 0
      %1199 = vmatpush2.bf16.msra.mxu0 0
      %1200 = vmatprep.subr.bf16.mxu0 0
      %1201 = vmatpush2.bf16.msra.mxu0 0
      %1202 = vmatprep.subr.bf16.mxu0 0
      %1203 = vmatpush2.bf16.msra.mxu0 0
      %1204 = vmatprep.subr.bf16.mxu0 0
      %1205 = vmatpush2.bf16.msra.mxu0 0
      %1206 = vmatprep.subr.bf16.mxu0 0
      %1207 = vmatpush2.bf16.msra.mxu0 0
      %1208 = vmatprep.subr.bf16.mxu0 0
      %1209 = vmatpush2.bf16.msra.mxu0 0
      %1210 = vmatprep.mubr.bf16.mxu0 0
      %1211 = vmatmul.mubr.bf16.gmra.mxu0 %v1170
      %v1212 = vpop.f32.mrf.mxu0
      %v1213 = vadd.f32 0.0, %v1212
      %v1214 = vpop.f32.mrf.mxu0
      %v1215 = vpop.f32.mrf.mxu0
      %v1216 = vadd.f32 0.0, %v1215
      %v1217 = vpop.f32.mrf.mxu0
      %1218 = vmatprep.mubr.bf16.mxu0 0
      %1219 = vmatmul.mubr.bf16.gmra.mxu0 %v1173
      %v1220 = vpop.f32.mrf.mxu0
      %v1221 = vadd.f32 0.0, %v1220
      %v1222 = vpop.f32.mrf.mxu0
      %v1223 = vpop.f32.mrf.mxu0
      %v1224 = vadd.f32 0.0, %v1223
      %v1225 = vpop.f32.mrf.mxu0
      %1226 = vmatprep.mubr.bf16.mxu0 0
      %1227 = vmatmul.mubr.bf16.gmra.mxu0 %v1176
      %v1228 = vpop.f32.mrf.mxu0
      %v1229 = vadd.f32 0.0, %v1228
      %v1230 = vpop.f32.mrf.mxu0
      %v1231 = vpop.f32.mrf.mxu0
      %v1232 = vadd.f32 0.0, %v1231
      %v1233 = vpop.f32.mrf.mxu0
      %1234 = vdwg.mxu0
      %v1235 = vld [vmem:[%s10] sm:$0xf]
      %v1236 = vld [vmem:[%s10 + $0x4] sm:$0xf]
      %v1237 = vld [vmem:[%s10 + $0x8] sm:$0xf]
      %v1238 = vld [vmem:[%s10 + $0xc] sm:$0xf]
      %v1239 = vld [vmem:[%s10 + $0x10] sm:$0xf]
      %v1240 = vld [vmem:[%s10 + $0x14] sm:$0xf]
      %v1241 = vpack.c.bf16 %v1216, %v1213
      %v1242 = vpack.c.bf16 %v1224, %v1221
      %v1243 = vpack.c.bf16 %v1232, %v1229
      %v1250 = vunpack.c.l.b16 %v1235
      %v1251 = vunpack.c.l.b16 %v1236
      %v1252 = vunpack.c.l.b16 %v1237
      %v1253 = vunpack.c.l.b16 %v1238
      %v1254 = vunpack.c.l.b16 %v1239
      %v1255 = vunpack.c.l.b16 %v1240
      %v1256 = vpack.c.b16 %v1251, %v1250
      %v1257 = vpack.c.b16 %v1253, %v1252
      %v1258 = vpack.c.b16 %v1255, %v1254
      %v1260 = vsel %vm769, %v1256, 0
      %v1263 = vsel %vm769, %v1257, 0
      %v1266 = vsel %vm769, %v1258, 0
      %1268 = vmatprep.subr.bf16.mxu0 0
      %1269 = vmatpush1.bf16.msra.mxu0 0
      %1270 = vmatprep.subr.bf16.mxu0 0
      %1271 = vmatpush1.bf16.msra.mxu0 0
      %1272 = vmatprep.subr.bf16.mxu0 0
      %1273 = vmatpush1.bf16.msra.mxu0 0
      %1274 = vmatprep.subr.bf16.mxu0 0
      %1275 = vmatpush1.bf16.msra.mxu0 0
      %1276 = vmatprep.subr.bf16.mxu0 0
      %1277 = vmatpush1.bf16.msra.mxu0 0
      %1278 = vmatprep.subr.bf16.mxu0 0
      %1279 = vmatpush1.bf16.msra.mxu0 %v1243
      %1280 = vmatprep.subr.bf16.mxu0 0
      %1281 = vmatpush1.bf16.msra.mxu0 %v1242
      %1282 = vmatprep.subr.bf16.mxu0 0
      %1283 = vmatpush1.bf16.msra.mxu0 %v1241
      %1284 = vmatprep.subr.bf16.mxu0 0
      %1285 = vmatpush2.bf16.msra.mxu0 0
      %1286 = vmatprep.subr.bf16.mxu0 0
      %1287 = vmatpush2.bf16.msra.mxu0 0
      %1288 = vmatprep.subr.bf16.mxu0 0
      %1289 = vmatpush2.bf16.msra.mxu0 0
      %1290 = vmatprep.subr.bf16.mxu0 0
      %1291 = vmatpush2.bf16.msra.mxu0 0
      %1292 = vmatprep.subr.bf16.mxu0 0
      %1293 = vmatpush2.bf16.msra.mxu0 0
      %1294 = vmatprep.subr.bf16.mxu0 0
      %1295 = vmatpush2.bf16.msra.mxu0 0
      %1296 = vmatprep.subr.bf16.mxu0 0
      %1297 = vmatpush2.bf16.msra.mxu0 0
      %1298 = vmatprep.subr.bf16.mxu0 0
      %1299 = vmatpush2.bf16.msra.mxu0 0
      %1300 = vmatprep.mubr.bf16.mxu0 0
      %1301 = vmatmul.mubr.bf16.gmra.mxu0 %v1260
      %v1302 = vpop.f32.mrf.mxu0
      %v1303 = vadd.f32 0.0, %v1302
      %v1304 = vpop.f32.mrf.mxu0
      %v1305 = vpop.f32.mrf.mxu0
      %v1306 = vadd.f32 0.0, %v1305
      %v1307 = vpop.f32.mrf.mxu0
      %1308 = vmatprep.mubr.bf16.mxu0 0
      %1309 = vmatmul.mubr.bf16.gmra.mxu0 %v1263
      %v1310 = vpop.f32.mrf.mxu0
      %v1311 = vadd.f32 0.0, %v1310
      %v1312 = vpop.f32.mrf.mxu0
      %v1313 = vpop.f32.mrf.mxu0
      %v1314 = vadd.f32 0.0, %v1313
      %v1315 = vpop.f32.mrf.mxu0
      %1316 = vmatprep.mubr.bf16.mxu0 0
      %1317 = vmatmul.mubr.bf16.gmra.mxu0 %v1266
      %v1318 = vpop.f32.mrf.mxu0
      %v1319 = vadd.f32 0.0, %v1318
      %v1320 = vpop.f32.mrf.mxu0
      %v1321 = vpop.f32.mrf.mxu0
      %v1322 = vadd.f32 0.0, %v1321
      %v1323 = vpop.f32.mrf.mxu0
      %1324 = vdwg.mxu0
      %v1325 = vld [vmem:[%s11] sm:$0xff]
      %v1326 = vld [vmem:[%s11 + $0x8] sm:$0xff]
      %v1327 = vld [vmem:[%s11 + $0x10] sm:$0xff]
      %v1328 = vld [vmem:[%s11 + $0x18] sm:$0xff]
      %v1329 = vld [vmem:[%s11 + $0x20] sm:$0xff]
      %v1330 = vld [vmem:[%s11 + $0x28] sm:$0xff]
      %v1331 = vmul.f32 %v1303, %v1325
      %v1332 = vmul.f32 %v1306, %v1326
      %v1333 = vmul.f32 %v1311, %v1327
      %v1334 = vmul.f32 %v1314, %v1328
      %v1335 = vmul.f32 %v1319, %v1329
      %v1336 = vmul.f32 %v1322, %v1330
      %v1337 = vld [vmem:[%s12] sm:$0xff]
      %v1338 = vld [vmem:[%s12 + $0x8] sm:$0xff]
      %v1339 = vld [vmem:[%s12 + $0x10] sm:$0xff]
      %v1340 = vld [vmem:[%s12 + $0x18] sm:$0xff]
      %v1341 = vld [vmem:[%s12 + $0x20] sm:$0xff]
      %v1342 = vld [vmem:[%s12 + $0x28] sm:$0xff]
      %v1343 = vadd.f32 %v1331, %v1337
      %v1344 = vadd.f32 %v1332, %v1338
      %v1345 = vadd.f32 %v1333, %v1339
      %v1346 = vadd.f32 %v1334, %v1340
      %v1347 = vadd.f32 %v1335, %v1341
      %v1348 = vadd.f32 %v1336, %v1342
      %v1349 = vtanh.pop %v1343
      %v1350 = vtanh.pop %v1344
      %v1351 = vtanh.pop %v1345
      %v1352 = vtanh.pop %v1346
      %v1353 = vtanh.pop %v1347
      %v1354 = vtanh.pop %v1348
      %v1355 = vadd.f32 %v1349, %v938
      %v1356 = vadd.f32 %v1350, %v939
      %v1357 = vadd.f32 %v1351, %v940
      %v1358 = vadd.f32 %v1352, %v941
      %v1359 = vadd.f32 %v1353, %v942
      %v1360 = vadd.f32 %v1354, %v943
      %v1361 = vpack.c.bf16 %v1356, %v1355
      %v1362 = vpack.c.bf16 %v1358, %v1357
      %v1363 = vpack.c.bf16 %v1360, %v1359
      %v1364 = vld [vmem:[%s13] sm:$0xf]
      %v1365 = vld [vmem:[%s13 + $0x4] sm:$0xf]
      %v1366 = vld [vmem:[%s13 + $0x8] sm:$0xf]
      %v1367 = vld [vmem:[%s13 + $0xc] sm:$0xf]
      %v1372 = vunpack.c.l.b16 %v1364
      %v1373 = vunpack.c.l.b16 %v1365
      %v1374 = vunpack.c.l.b16 %v1366
      %v1375 = vunpack.c.l.b16 %v1367
      %v1376 = vpack.c.b16 %v1373, %v1372
      %v1377 = vpack.c.b16 %v1375, %v1374
      %v1381 = vsel %vm963, %v1361, 0
      %v1384 = vsel %vm963, %v1362, 0
      %v1387 = vsel %vm963, %v1363, 0
      %1389 = vmatprep.subr.bf16.mxu0 0
      %1390 = vmatpush1.bf16.msra.mxu0 0
      %1391 = vmatprep.subr.bf16.mxu0 0
      %1392 = vmatpush1.bf16.msra.mxu0 0
      %1393 = vmatprep.subr.bf16.mxu0 0
      %1394 = vmatpush1.bf16.msra.mxu0 0
      %1395 = vmatprep.subr.bf16.mxu0 0
      %1396 = vmatpush1.bf16.msra.mxu0 0
      %1397 = vmatprep.subr.bf16.mxu0 0
      %1398 = vmatpush1.bf16.msra.mxu0 0
      %1399 = vmatprep.subr.bf16.mxu0 0
      %1400 = vmatpush1.bf16.msra.mxu0 0
      %1401 = vmatprep.subr.bf16.mxu0 0
      %1402 = vmatpush1.bf16.msra.mxu0 %v1377
      %1403 = vmatprep.subr.bf16.mxu0 0
      %1404 = vmatpush1.bf16.msra.mxu0 %v1376
      %1405 = vmatprep.subr.bf16.mxu0 0
      %1406 = vmatpush2.bf16.msra.mxu0 0
      %1407 = vmatprep.subr.bf16.mxu0 0
      %1408 = vmatpush2.bf16.msra.mxu0 0
      %1409 = vmatprep.subr.bf16.mxu0 0
      %1410 = vmatpush2.bf16.msra.mxu0 0
      %1411 = vmatprep.subr.bf16.mxu0 0
      %1412 = vmatpush2.bf16.msra.mxu0 0
      %1413 = vmatprep.subr.bf16.mxu0 0
      %1414 = vmatpush2.bf16.msra.mxu0 0
      %1415 = vmatprep.subr.bf16.mxu0 0
      %1416 = vmatpush2.bf16.msra.mxu0 0
      %1417 = vmatprep.subr.bf16.mxu0 0
      %1418 = vmatpush2.bf16.msra.mxu0 0
      %1419 = vmatprep.subr.bf16.mxu0 0
      %1420 = vmatpush2.bf16.msra.mxu0 0
      %1421 = vmatprep.mubr.bf16.mxu0 0
      %1422 = vmatmul.mubr.bf16.gmra.mxu0 %v1381
      %v1423 = vpop.f32.mrf.mxu0
      %v1424 = vadd.f32 0.0, %v1423
      %v1425 = vpop.f32.mrf.mxu0
      %v1426 = vpop.f32.mrf.mxu0
      %v1427 = vadd.f32 0.0, %v1426
      %v1428 = vpop.f32.mrf.mxu0
      %1429 = vmatprep.mubr.bf16.mxu0 0
      %1430 = vmatmul.mubr.bf16.gmra.mxu0 %v1384
      %v1431 = vpop.f32.mrf.mxu0
      %v1432 = vadd.f32 0.0, %v1431
      %v1433 = vpop.f32.mrf.mxu0
      %v1434 = vpop.f32.mrf.mxu0
      %v1435 = vadd.f32 0.0, %v1434
      %v1436 = vpop.f32.mrf.mxu0
      %1437 = vmatprep.mubr.bf16.mxu0 0
      %1438 = vmatmul.mubr.bf16.gmra.mxu0 %v1387
      %v1439 = vpop.f32.mrf.mxu0
      %v1440 = vadd.f32 0.0, %v1439
      %v1441 = vpop.f32.mrf.mxu0
      %v1442 = vpop.f32.mrf.mxu0
      %v1443 = vadd.f32 0.0, %v1442
      %v1444 = vpop.f32.mrf.mxu0
      %1445 = vdwg.mxu0
      %v1446 = vld [vmem:[%s14] sm:$0xf]
      %v1447 = vld [vmem:[%s14 + $0x4] sm:$0xf]
      %v1448 = vld [vmem:[%s14 + $0x8] sm:$0xf]
      %v1449 = vld [vmem:[%s14 + $0xc] sm:$0xf]
      %v1450 = vld [vmem:[%s14 + $0x10] sm:$0xf]
      %v1451 = vld [vmem:[%s14 + $0x14] sm:$0xf]
      %v1452 = vpack.c.bf16 %v1427, %v1424
      %v1453 = vpack.c.bf16 %v1435, %v1432
      %v1454 = vpack.c.bf16 %v1443, %v1440
      %v1461 = vunpack.c.l.b16 %v1446
      %v1462 = vunpack.c.l.b16 %v1447
      %v1463 = vunpack.c.l.b16 %v1448
      %v1464 = vunpack.c.l.b16 %v1449
      %v1465 = vunpack.c.l.b16 %v1450
      %v1466 = vunpack.c.l.b16 %v1451
      %v1467 = vpack.c.b16 %v1462, %v1461
      %v1468 = vpack.c.b16 %v1464, %v1463
      %v1469 = vpack.c.b16 %v1466, %v1465
      %v1471 = vsel %vm769, %v1467, 0
      %v1474 = vsel %vm769, %v1468, 0
      %v1477 = vsel %vm769, %v1469, 0
      %1479 = vmatprep.subr.bf16.mxu0 0
      %1480 = vmatpush1.bf16.msra.mxu0 0
      %1481 = vmatprep.subr.bf16.mxu0 0
      %1482 = vmatpush1.bf16.msra.mxu0 0
      %1483 = vmatprep.subr.bf16.mxu0 0
      %1484 = vmatpush1.bf16.msra.mxu0 0
      %1485 = vmatprep.subr.bf16.mxu0 0
      %1486 = vmatpush1.bf16.msra.mxu0 0
      %1487 = vmatprep.subr.bf16.mxu0 0
      %1488 = vmatpush1.bf16.msra.mxu0 0
      %1489 = vmatprep.subr.bf16.mxu0 0
      %1490 = vmatpush1.bf16.msra.mxu0 %v1454
      %1491 = vmatprep.subr.bf16.mxu0 0
      %1492 = vmatpush1.bf16.msra.mxu0 %v1453
      %1493 = vmatprep.subr.bf16.mxu0 0
      %1494 = vmatpush1.bf16.msra.mxu0 %v1452
      %1495 = vmatprep.subr.bf16.mxu0 0
      %1496 = vmatpush2.bf16.msra.mxu0 0
      %1497 = vmatprep.subr.bf16.mxu0 0
      %1498 = vmatpush2.bf16.msra.mxu0 0
      %1499 = vmatprep.subr.bf16.mxu0 0
      %1500 = vmatpush2.bf16.msra.mxu0 0
      %1501 = vmatprep.subr.bf16.mxu0 0
      %1502 = vmatpush2.bf16.msra.mxu0 0
      %1503 = vmatprep.subr.bf16.mxu0 0
      %1504 = vmatpush2.bf16.msra.mxu0 0
      %1505 = vmatprep.subr.bf16.mxu0 0
      %1506 = vmatpush2.bf16.msra.mxu0 0
      %1507 = vmatprep.subr.bf16.mxu0 0
      %1508 = vmatpush2.bf16.msra.mxu0 0
      %1509 = vmatprep.subr.bf16.mxu0 0
      %1510 = vmatpush2.bf16.msra.mxu0 0
      %1511 = vmatprep.mubr.bf16.mxu0 0
      %1512 = vmatmul.mubr.bf16.gmra.mxu0 %v1471
      %v1513 = vpop.f32.mrf.mxu0
      %v1514 = vadd.f32 0.0, %v1513
      %v1515 = vpop.f32.mrf.mxu0
      %v1516 = vpop.f32.mrf.mxu0
      %v1517 = vadd.f32 0.0, %v1516
      %v1518 = vpop.f32.mrf.mxu0
      %1519 = vmatprep.mubr.bf16.mxu0 0
      %1520 = vmatmul.mubr.bf16.gmra.mxu0 %v1474
      %v1521 = vpop.f32.mrf.mxu0
      %v1522 = vadd.f32 0.0, %v1521
      %v1523 = vpop.f32.mrf.mxu0
      %v1524 = vpop.f32.mrf.mxu0
      %v1525 = vadd.f32 0.0, %v1524
      %v1526 = vpop.f32.mrf.mxu0
      %1527 = vmatprep.mubr.bf16.mxu0 0
      %1528 = vmatmul.mubr.bf16.gmra.mxu0 %v1477
      %v1529 = vpop.f32.mrf.mxu0
      %v1530 = vadd.f32 0.0, %v1529
      %v1531 = vpop.f32.mrf.mxu0
      %v1532 = vpop.f32.mrf.mxu0
      %v1533 = vadd.f32 0.0, %v1532
      %v1534 = vpop.f32.mrf.mxu0
      %1535 = vdwg.mxu0
      %v1536 = vld [vmem:[%s15] sm:$0xff]
      %v1537 = vld [vmem:[%s15 + $0x8] sm:$0xff]
      %v1538 = vld [vmem:[%s15 + $0x10] sm:$0xff]
      %v1539 = vld [vmem:[%s15 + $0x18] sm:$0xff]
      %v1540 = vld [vmem:[%s15 + $0x20] sm:$0xff]
      %v1541 = vld [vmem:[%s15 + $0x28] sm:$0xff]
      %v1542 = vmul.f32 %v1514, %v1536
      %v1543 = vmul.f32 %v1517, %v1537
      %v1544 = vmul.f32 %v1522, %v1538
      %v1545 = vmul.f32 %v1525, %v1539
      %v1546 = vmul.f32 %v1530, %v1540
      %v1547 = vmul.f32 %v1533, %v1541
      %v1548 = vld [vmem:[%s16] sm:$0xff]
      %v1549 = vld [vmem:[%s16 + $0x8] sm:$0xff]
      %v1550 = vld [vmem:[%s16 + $0x10] sm:$0xff]
      %v1551 = vld [vmem:[%s16 + $0x18] sm:$0xff]
      %v1552 = vld [vmem:[%s16 + $0x20] sm:$0xff]
      %v1553 = vld [vmem:[%s16 + $0x28] sm:$0xff]
      %v1554 = vadd.f32 %v1542, %v1548
      %v1555 = vadd.f32 %v1543, %v1549
      %v1556 = vadd.f32 %v1544, %v1550
      %v1557 = vadd.f32 %v1545, %v1551
      %v1558 = vadd.f32 %v1546, %v1552
      %v1559 = vadd.f32 %v1547, %v1553
      %v1560 = vtanh.pop %v1554
      %v1561 = vtanh.pop %v1555
      %v1562 = vtanh.pop %v1556
      %v1563 = vtanh.pop %v1557
      %v1564 = vtanh.pop %v1558
      %v1565 = vtanh.pop %v1559
      %v1566 = vpack.c.bf16 %v1561, %v1560
      %v1567 = vpack.c.bf16 %v1563, %v1562
      %v1568 = vpack.c.bf16 %v1565, %v1564
      %v1569 = vld [vmem:[%s17] sm:$0xf]
      %v1570 = vld [vmem:[%s17 + $0x4] sm:$0xf]
      %v1571 = vld [vmem:[%s17 + $0x8] sm:$0xf]
      %v1572 = vld [vmem:[%s17 + $0xc] sm:$0xf]
      %v1577 = vunpack.c.l.b16 %v1569
      %v1578 = vunpack.c.l.b16 %v1570
      %v1579 = vunpack.c.l.b16 %v1571
      %v1580 = vunpack.c.l.b16 %v1572
      %v1581 = vpack.c.b16 %v1578, %v1577
      %v1582 = vpack.c.b16 %v1580, %v1579
      %v1586 = vsel %vm963, %v1566, 0
      %v1589 = vsel %vm963, %v1567, 0
      %v1592 = vsel %vm963, %v1568, 0
      %1594 = vmatprep.subr.bf16.mxu0 0
      %1595 = vmatpush1.bf16.msra.mxu0 0
      %1596 = vmatprep.subr.bf16.mxu0 0
      %1597 = vmatpush1.bf16.msra.mxu0 0
      %1598 = vmatprep.subr.bf16.mxu0 0
      %1599 = vmatpush1.bf16.msra.mxu0 0
      %1600 = vmatprep.subr.bf16.mxu0 0
      %1601 = vmatpush1.bf16.msra.mxu0 0
      %1602 = vmatprep.subr.bf16.mxu0 0
      %1603 = vmatpush1.bf16.msra.mxu0 0
      %1604 = vmatprep.subr.bf16.mxu0 0
      %1605 = vmatpush1.bf16.msra.mxu0 0
      %1606 = vmatprep.subr.bf16.mxu0 0
      %1607 = vmatpush1.bf16.msra.mxu0 %v1582
      %1608 = vmatprep.subr.bf16.mxu0 0
      %1609 = vmatpush1.bf16.msra.mxu0 %v1581
      %1610 = vmatprep.subr.bf16.mxu0 0
      %1611 = vmatpush2.bf16.msra.mxu0 0
      %1612 = vmatprep.subr.bf16.mxu0 0
      %1613 = vmatpush2.bf16.msra.mxu0 0
      %1614 = vmatprep.subr.bf16.mxu0 0
      %1615 = vmatpush2.bf16.msra.mxu0 0
      %1616 = vmatprep.subr.bf16.mxu0 0
      %1617 = vmatpush2.bf16.msra.mxu0 0
      %1618 = vmatprep.subr.bf16.mxu0 0
      %1619 = vmatpush2.bf16.msra.mxu0 0
      %1620 = vmatprep.subr.bf16.mxu0 0
      %1621 = vmatpush2.bf16.msra.mxu0 0
      %1622 = vmatprep.subr.bf16.mxu0 0
      %1623 = vmatpush2.bf16.msra.mxu0 0
      %1624 = vmatprep.subr.bf16.mxu0 0
      %1625 = vmatpush2.bf16.msra.mxu0 0
      %1626 = vmatprep.mubr.bf16.mxu0 0
      %1627 = vmatmul.mubr.bf16.gmra.mxu0 %v1586
      %v1628 = vpop.f32.mrf.mxu0
      %v1629 = vadd.f32 0.0, %v1628
      %v1630 = vpop.f32.mrf.mxu0
      %v1631 = vpop.f32.mrf.mxu0
      %v1632 = vadd.f32 0.0, %v1631
      %v1633 = vpop.f32.mrf.mxu0
      %1634 = vmatprep.mubr.bf16.mxu0 0
      %1635 = vmatmul.mubr.bf16.gmra.mxu0 %v1589
      %v1636 = vpop.f32.mrf.mxu0
      %v1637 = vadd.f32 0.0, %v1636
      %v1638 = vpop.f32.mrf.mxu0
      %v1639 = vpop.f32.mrf.mxu0
      %v1640 = vadd.f32 0.0, %v1639
      %v1641 = vpop.f32.mrf.mxu0
      %1642 = vmatprep.mubr.bf16.mxu0 0
      %1643 = vmatmul.mubr.bf16.gmra.mxu0 %v1592
      %v1644 = vpop.f32.mrf.mxu0
      %v1645 = vadd.f32 0.0, %v1644
      %v1646 = vpop.f32.mrf.mxu0
      %v1647 = vpop.f32.mrf.mxu0
      %v1648 = vadd.f32 0.0, %v1647
      %v1649 = vpop.f32.mrf.mxu0
      %1650 = vdwg.mxu0
      %v1651 = vld [vmem:[%s18] sm:$0xf]
      %v1652 = vld [vmem:[%s18 + $0x4] sm:$0xf]
      %v1653 = vld [vmem:[%s18 + $0x8] sm:$0xf]
      %v1654 = vld [vmem:[%s18 + $0xc] sm:$0xf]
      %v1655 = vld [vmem:[%s18 + $0x10] sm:$0xf]
      %v1656 = vld [vmem:[%s18 + $0x14] sm:$0xf]
      %v1657 = vpack.c.bf16 %v1632, %v1629
      %v1658 = vpack.c.bf16 %v1640, %v1637
      %v1659 = vpack.c.bf16 %v1648, %v1645
      %v1666 = vunpack.c.l.b16 %v1651
      %v1667 = vunpack.c.l.b16 %v1652
      %v1668 = vunpack.c.l.b16 %v1653
      %v1669 = vunpack.c.l.b16 %v1654
      %v1670 = vunpack.c.l.b16 %v1655
      %v1671 = vunpack.c.l.b16 %v1656
      %v1672 = vpack.c.b16 %v1667, %v1666
      %v1673 = vpack.c.b16 %v1669, %v1668
      %v1674 = vpack.c.b16 %v1671, %v1670
      %v1676 = vsel %vm769, %v1672, 0
      %v1679 = vsel %vm769, %v1673, 0
      %v1682 = vsel %vm769, %v1674, 0
      %1684 = vmatprep.subr.bf16.mxu0 0
      %1685 = vmatpush1.bf16.msra.mxu0 0
      %1686 = vmatprep.subr.bf16.mxu0 0
      %1687 = vmatpush1.bf16.msra.mxu0 0
      %1688 = vmatprep.subr.bf16.mxu0 0
      %1689 = vmatpush1.bf16.msra.mxu0 0
      %1690 = vmatprep.subr.bf16.mxu0 0
      %1691 = vmatpush1.bf16.msra.mxu0 0
      %1692 = vmatprep.subr.bf16.mxu0 0
      %1693 = vmatpush1.bf16.msra.mxu0 0
      %1694 = vmatprep.subr.bf16.mxu0 0
      %1695 = vmatpush1.bf16.msra.mxu0 %v1659
      %1696 = vmatprep.subr.bf16.mxu0 0
      %1697 = vmatpush1.bf16.msra.mxu0 %v1658
      %1698 = vmatprep.subr.bf16.mxu0 0
      %1699 = vmatpush1.bf16.msra.mxu0 %v1657
      %1700 = vmatprep.subr.bf16.mxu0 0
      %1701 = vmatpush2.bf16.msra.mxu0 0
      %1702 = vmatprep.subr.bf16.mxu0 0
      %1703 = vmatpush2.bf16.msra.mxu0 0
      %1704 = vmatprep.subr.bf16.mxu0 0
      %1705 = vmatpush2.bf16.msra.mxu0 0
      %1706 = vmatprep.subr.bf16.mxu0 0
      %1707 = vmatpush2.bf16.msra.mxu0 0
      %1708 = vmatprep.subr.bf16.mxu0 0
      %1709 = vmatpush2.bf16.msra.mxu0 0
      %1710 = vmatprep.subr.bf16.mxu0 0
      %1711 = vmatpush2.bf16.msra.mxu0 0
      %1712 = vmatprep.subr.bf16.mxu0 0
      %1713 = vmatpush2.bf16.msra.mxu0 0
      %1714 = vmatprep.subr.bf16.mxu0 0
      %1715 = vmatpush2.bf16.msra.mxu0 0
      %1716 = vmatprep.mubr.bf16.mxu0 0
      %1717 = vmatmul.mubr.bf16.gmra.mxu0 %v1676
      %v1718 = vpop.f32.mrf.mxu0
      %v1719 = vadd.f32 0.0, %v1718
      %v1720 = vpop.f32.mrf.mxu0
      %v1721 = vpop.f32.mrf.mxu0
      %v1722 = vadd.f32 0.0, %v1721
      %v1723 = vpop.f32.mrf.mxu0
      %1724 = vmatprep.mubr.bf16.mxu0 0
      %1725 = vmatmul.mubr.bf16.gmra.mxu0 %v1679
      %v1726 = vpop.f32.mrf.mxu0
      %v1727 = vadd.f32 0.0, %v1726
      %v1728 = vpop.f32.mrf.mxu0
      %v1729 = vpop.f32.mrf.mxu0
      %v1730 = vadd.f32 0.0, %v1729
      %v1731 = vpop.f32.mrf.mxu0
      %1732 = vmatprep.mubr.bf16.mxu0 0
      %1733 = vmatmul.mubr.bf16.gmra.mxu0 %v1682
      %v1734 = vpop.f32.mrf.mxu0
      %v1735 = vadd.f32 0.0, %v1734
      %v1736 = vpop.f32.mrf.mxu0
      %v1737 = vpop.f32.mrf.mxu0
      %v1738 = vadd.f32 0.0, %v1737
      %v1739 = vpop.f32.mrf.mxu0
      %1740 = vdwg.mxu0
      %v1741 = vld [vmem:[%s19] sm:$0xff]
      %v1742 = vld [vmem:[%s19 + $0x8] sm:$0xff]
      %v1743 = vld [vmem:[%s19 + $0x10] sm:$0xff]
      %v1744 = vld [vmem:[%s19 + $0x18] sm:$0xff]
      %v1745 = vld [vmem:[%s19 + $0x20] sm:$0xff]
      %v1746 = vld [vmem:[%s19 + $0x28] sm:$0xff]
      %v1747 = vmul.f32 %v1719, %v1741
      %v1748 = vmul.f32 %v1722, %v1742
      %v1749 = vmul.f32 %v1727, %v1743
      %v1750 = vmul.f32 %v1730, %v1744
      %v1751 = vmul.f32 %v1735, %v1745
      %v1752 = vmul.f32 %v1738, %v1746
      %v1753 = vld [vmem:[%s20] sm:$0xff]
      %v1754 = vld [vmem:[%s20 + $0x8] sm:$0xff]
      %v1755 = vld [vmem:[%s20 + $0x10] sm:$0xff]
      %v1756 = vld [vmem:[%s20 + $0x18] sm:$0xff]
      %v1757 = vld [vmem:[%s20 + $0x20] sm:$0xff]
      %v1758 = vld [vmem:[%s20 + $0x28] sm:$0xff]
      %v1759 = vadd.f32 %v1747, %v1753
      %v1760 = vadd.f32 %v1748, %v1754
      %v1761 = vadd.f32 %v1749, %v1755
      %v1762 = vadd.f32 %v1750, %v1756
      %v1763 = vadd.f32 %v1751, %v1757
      %v1764 = vadd.f32 %v1752, %v1758
      %v1765 = vtanh.pop %v1759
      %v1766 = vtanh.pop %v1760
      %v1767 = vtanh.pop %v1761
      %v1768 = vtanh.pop %v1762
      %v1769 = vtanh.pop %v1763
      %v1770 = vtanh.pop %v1764
      %v1771 = vadd.f32 %v1765, %v1355
      %v1772 = vadd.f32 %v1766, %v1356
      %v1773 = vadd.f32 %v1767, %v1357
      %v1774 = vadd.f32 %v1768, %v1358
      %v1775 = vadd.f32 %v1769, %v1359
      %v1776 = vadd.f32 %v1770, %v1360
      %v1777 = vpack.c.bf16 %v1772, %v1771
      %v1778 = vpack.c.bf16 %v1774, %v1773
      %v1779 = vpack.c.bf16 %v1776, %v1775
      %v1780 = vld [vmem:[%s21] sm:$0xf]
      %v1781 = vld [vmem:[%s21 + $0x4] sm:$0xf]
      %v1782 = vld [vmem:[%s21 + $0x8] sm:$0xf]
      %v1783 = vld [vmem:[%s21 + $0xc] sm:$0xf]
      %v1788 = vunpack.c.l.b16 %v1780
      %v1789 = vunpack.c.l.b16 %v1781
      %v1790 = vunpack.c.l.b16 %v1782
      %v1791 = vunpack.c.l.b16 %v1783
      %v1792 = vpack.c.b16 %v1789, %v1788
      %v1793 = vpack.c.b16 %v1791, %v1790
      %v1797 = vsel %vm963, %v1777, 0
      %v1800 = vsel %vm963, %v1778, 0
      %v1803 = vsel %vm963, %v1779, 0
      %1805 = vmatprep.subr.bf16.mxu0 0
      %1806 = vmatpush1.bf16.msra.mxu0 0
      %1807 = vmatprep.subr.bf16.mxu0 0
      %1808 = vmatpush1.bf16.msra.mxu0 0
      %1809 = vmatprep.subr.bf16.mxu0 0
      %1810 = vmatpush1.bf16.msra.mxu0 0
      %1811 = vmatprep.subr.bf16.mxu0 0
      %1812 = vmatpush1.bf16.msra.mxu0 0
      %1813 = vmatprep.subr.bf16.mxu0 0
      %1814 = vmatpush1.bf16.msra.mxu0 0
      %1815 = vmatprep.subr.bf16.mxu0 0
      %1816 = vmatpush1.bf16.msra.mxu0 0
      %1817 = vmatprep.subr.bf16.mxu0 0
      %1818 = vmatpush1.bf16.msra.mxu0 %v1793
      %1819 = vmatprep.subr.bf16.mxu0 0
      %1820 = vmatpush1.bf16.msra.mxu0 %v1792
      %1821 = vmatprep.subr.bf16.mxu0 0
      %1822 = vmatpush2.bf16.msra.mxu0 0
      %1823 = vmatprep.subr.bf16.mxu0 0
      %1824 = vmatpush2.bf16.msra.mxu0 0
      %1825 = vmatprep.subr.bf16.mxu0 0
      %1826 = vmatpush2.bf16.msra.mxu0 0
      %1827 = vmatprep.subr.bf16.mxu0 0
      %1828 = vmatpush2.bf16.msra.mxu0 0
      %1829 = vmatprep.subr.bf16.mxu0 0
      %1830 = vmatpush2.bf16.msra.mxu0 0
      %1831 = vmatprep.subr.bf16.mxu0 0
      %1832 = vmatpush2.bf16.msra.mxu0 0
      %1833 = vmatprep.subr.bf16.mxu0 0
      %1834 = vmatpush2.bf16.msra.mxu0 0
      %1835 = vmatprep.subr.bf16.mxu0 0
      %1836 = vmatpush2.bf16.msra.mxu0 0
      %1837 = vmatprep.mubr.bf16.mxu0 0
      %1838 = vmatmul.mubr.bf16.gmra.mxu0 %v1797
      %v1839 = vpop.f32.mrf.mxu0
      %v1840 = vadd.f32 0.0, %v1839
      %v1841 = vpop.f32.mrf.mxu0
      %v1842 = vpop.f32.mrf.mxu0
      %v1843 = vadd.f32 0.0, %v1842
      %v1844 = vpop.f32.mrf.mxu0
      %1845 = vmatprep.mubr.bf16.mxu0 0
      %1846 = vmatmul.mubr.bf16.gmra.mxu0 %v1800
      %v1847 = vpop.f32.mrf.mxu0
      %v1848 = vadd.f32 0.0, %v1847
      %v1849 = vpop.f32.mrf.mxu0
      %v1850 = vpop.f32.mrf.mxu0
      %v1851 = vadd.f32 0.0, %v1850
      %v1852 = vpop.f32.mrf.mxu0
      %1853 = vmatprep.mubr.bf16.mxu0 0
      %1854 = vmatmul.mubr.bf16.gmra.mxu0 %v1803
      %v1855 = vpop.f32.mrf.mxu0
      %v1856 = vadd.f32 0.0, %v1855
      %v1857 = vpop.f32.mrf.mxu0
      %v1858 = vpop.f32.mrf.mxu0
      %v1859 = vadd.f32 0.0, %v1858
      %v1860 = vpop.f32.mrf.mxu0
      %1861 = vdwg.mxu0
      %v1862 = vld [vmem:[%s22] sm:$0xf]
      %v1863 = vld [vmem:[%s22 + $0x4] sm:$0xf]
      %v1864 = vld [vmem:[%s22 + $0x8] sm:$0xf]
      %v1865 = vld [vmem:[%s22 + $0xc] sm:$0xf]
      %v1866 = vld [vmem:[%s22 + $0x10] sm:$0xf]
      %v1867 = vld [vmem:[%s22 + $0x14] sm:$0xf]
      %v1868 = vpack.c.bf16 %v1843, %v1840
      %v1869 = vpack.c.bf16 %v1851, %v1848
      %v1870 = vpack.c.bf16 %v1859, %v1856
      %v1871 = vld [vmem:[%s23] sm:$0x1]
      %v1873 = vlaneseq
      %v1874 = vshrl.u32 %v1873, 7
      %v1875 = vsub.s32 0, %v1874
      %v1876 = vrot.slane %v1871, %v1875
      %v1884 = vunpack.c.l.b16 %v1862
      %v1885 = vunpack.c.l.b16 %v1863
      %v1886 = vunpack.c.l.b16 %v1864
      %v1887 = vunpack.c.l.b16 %v1865
      %v1888 = vunpack.c.l.b16 %v1866
      %v1889 = vunpack.c.l.b16 %v1867
      %v1890 = vpack.c.b16 %v1885, %v1884
      %v1891 = vpack.c.b16 %v1887, %v1886
      %v1892 = vpack.c.b16 %v1889, %v1888
      %v1894 = vsel %vm769, %v1890, 0
      %v1897 = vsel %vm769, %v1891, 0
      %v1900 = vsel %vm769, %v1892, 0
      %1902 = vmatprep.subr.bf16.mxu0 0
      %1903 = vmatpush1.bf16.msra.mxu0 0
      %1904 = vmatprep.subr.bf16.mxu0 0
      %1905 = vmatpush1.bf16.msra.mxu0 0
      %1906 = vmatprep.subr.bf16.mxu0 0
      %1907 = vmatpush1.bf16.msra.mxu0 0
      %1908 = vmatprep.subr.bf16.mxu0 0
      %1909 = vmatpush1.bf16.msra.mxu0 0
      %1910 = vmatprep.subr.bf16.mxu0 0
      %1911 = vmatpush1.bf16.msra.mxu0 0
      %1912 = vmatprep.subr.bf16.mxu0 0
      %1913 = vmatpush1.bf16.msra.mxu0 %v1870
      %1914 = vmatprep.subr.bf16.mxu0 0
      %1915 = vmatpush1.bf16.msra.mxu0 %v1869
      %1916 = vmatprep.subr.bf16.mxu0 0
      %1917 = vmatpush1.bf16.msra.mxu0 %v1868
      %1918 = vmatprep.subr.bf16.mxu0 0
      %1919 = vmatpush2.bf16.msra.mxu0 0
      %1920 = vmatprep.subr.bf16.mxu0 0
      %1921 = vmatpush2.bf16.msra.mxu0 0
      %1922 = vmatprep.subr.bf16.mxu0 0
      %1923 = vmatpush2.bf16.msra.mxu0 0
      %1924 = vmatprep.subr.bf16.mxu0 0
      %1925 = vmatpush2.bf16.msra.mxu0 0
      %1926 = vmatprep.subr.bf16.mxu0 0
      %1927 = vmatpush2.bf16.msra.mxu0 0
      %1928 = vmatprep.subr.bf16.mxu0 0
      %1929 = vmatpush2.bf16.msra.mxu0 0
      %1930 = vmatprep.subr.bf16.mxu0 0
      %1931 = vmatpush2.bf16.msra.mxu0 0
      %1932 = vmatprep.subr.bf16.mxu0 0
      %1933 = vmatpush2.bf16.msra.mxu0 0
      %1934 = vmatprep.mubr.bf16.mxu0 0
      %1935 = vmatmul.mubr.bf16.gmra.mxu0 %v1894
      %v1936 = vpop.f32.mrf.mxu0
      %v1937 = vadd.f32 %v1876, %v1936
      %v1938 = vpop.f32.mrf.mxu0
      %v1939 = vpop.f32.mrf.mxu0
      %v1940 = vadd.f32 %v1876, %v1939
      %v1941 = vpop.f32.mrf.mxu0
      %1942 = vmatprep.mubr.bf16.mxu0 0
      %1943 = vmatmul.mubr.bf16.gmra.mxu0 %v1897
      %v1944 = vpop.f32.mrf.mxu0
      %v1945 = vadd.f32 %v1876, %v1944
      %v1946 = vpop.f32.mrf.mxu0
      %v1947 = vpop.f32.mrf.mxu0
      %v1948 = vadd.f32 %v1876, %v1947
      %v1949 = vpop.f32.mrf.mxu0
      %1950 = vmatprep.mubr.bf16.mxu0 0
      %1951 = vmatmul.mubr.bf16.gmra.mxu0 %v1900
      %v1952 = vpop.f32.mrf.mxu0
      %v1953 = vadd.f32 %v1876, %v1952
      %v1954 = vpop.f32.mrf.mxu0
      %v1955 = vpop.f32.mrf.mxu0
      %v1956 = vadd.f32 %v1876, %v1955
      %v1957 = vpop.f32.mrf.mxu0
      %1958 = vdwg.mxu0
      %v1959 = vadd.f32 %v1937, %v739
      %v1960 = vadd.f32 %v1940, %v740
      %v1961 = vadd.f32 %v1945, %v741
      %v1962 = vadd.f32 %v1948, %v742
      %v1963 = vadd.f32 %v1953, %v743
      %v1964 = vadd.f32 %v1956, %v744
      %1965 = vst.msk [vmem:[%s737] sm:$0xff] %vm847, %v1959
      %1966 = vst.msk [vmem:[%s737 + $0x8] sm:$0xff] %vm847, %v1960
      %1967 = vst.msk [vmem:[%s737 + $0x10] sm:$0xff] %vm847, %v1961
      %1968 = vst.msk [vmem:[%s737 + $0x18] sm:$0xff] %vm847, %v1962
      %1969 = vst.msk [vmem:[%s737 + $0x20] sm:$0xff] %vm847, %v1963
      %1970 = vst.msk [vmem:[%s737 + $0x28] sm:$0xff] %vm847, %v1964
      %p1971 = scmp.lt.s32.totalorder %s35, 1
      %s1972 = scalar_select %p1971, %s35, 1
      %s1973 = smul.addr %s1972, 6
      %s1974 = smul.addr %s1973, 8
      %s1975 = scalar_lea.vmem %s24, %s1974
      // Predicated region
      $region117: #{_lambda_.3} parent=115 // pred_check
        %p1976 = pneg %p562
      $region118: #{_lambda_.3} parent=115 // pred_check_branch
        %1978 = sbr.rel (%p1976) target = $region120
      $region119: #{_lambda_.3} parent=115 // pred_region
        _
      $region120: #{_lambda_.3} parent=115 // pred_fallthru
        _
    $region116: #{_lambda_.3} parent=5 // pred_fallthru
      _
    %p1979 = scmp.le.s32.totalorder 2, %s30
    // Predicated region
    $region121: #{_lambda_.3} parent=5 // pred_check
      %p1980 = pneg %p1979
    $region122: #{_lambda_.3} parent=5 // pred_check_branch
      %1982 = sbr.rel (%p1980) target = $region124
    $region123: #{_lambda_.3} parent=5 // pred_region
      %s1983 = ssub.s32 %s30, 2
      // Predicated region
      $region125: #{_lambda_.3} parent=123 // pred_check
        %p1984 = pneg %p568
      $region126: #{_lambda_.3} parent=123 // pred_check_branch
        %1986 = sbr.rel (%p1984) target = $region128
      $region127: #{_lambda_.3} parent=123 // pred_region
        %p1987 = scmp.lt.s32.totalorder %s36, 1
        %s1988 = scalar_select %p1987, %s36, 1
        %s1989 = smul.addr %s1988, 6
        %s1990 = smul.addr %s1989, 8
        %s1991 = scalar_lea.vmem %s24, %s1990
      $region128: #{_lambda_.3} parent=123 // pred_fallthru
        _
    $region124: #{_lambda_.3} parent=5 // pred_fallthru
      _
  $region6: #{_lambda_.3} parent=0 // loop_footer
    %s34 = sadd.s32 1, %s30
  $region7: #{_lambda_.3} parent=0 // loop_footer_branch
    %29 = sbr.rel target = $region3
  $region8: #{_lambda_.3} parent=0 // loop_exit
    _

// kernel: _lambda_.2
$region0: #{_lambda_.2}
  #allocation0 [shape = 'u32[]', space=smem, size = 0x4, offset = 0x4, fixed_abs, tag = 'smem constant byte address 0x4 - core index']
  #allocation1 [shape = 'u32[144,128]{1,0:T(1,128)}', space=vmem, size = 0x12000, scoped, tag = 'internal scratch']
  %s0 = inlined_call_operand.vmem [shape: f32[2,1152], index: 0, kind: input, shape index: {}]
  %s1 = inlined_call_operand.hbm [shape: bf16[1152,768], index: 1, kind: input, shape index: {}]
  %s2 = inlined_call_operand.hbm [shape: f32[1,768], index: 2, kind: input, shape index: {}]
  %s3 = inlined_call_operand.vmem [shape: f32[2,768], index: 3, kind: output, shape index: {}]
  %s4 = sld [smem:[#allocation0]]
  $region30: #{_lambda_.2} parent=0
    _
  %s6 = ssub.s32 1, %s4
  %s7 = scalar_select 0, %s6, %s4
  $region1: #{_lambda_.2} parent=0
    #allocation2 [shape = 'u8[1769472]{0}', space=vmem, size = 0x1b0000, scoped, tag = 'input window, operand 1, single buffered']
    #allocation3 [shape = 's32[1]{0}', space=sflag, size = 0x4, scoped, tag = 'scoped memory for _lambda_.2']
    #allocation4 [shape = 'u8[3072]{0}', space=vmem, size = 0xc00, scoped, tag = 'input window, operand 2, single buffered']
    #allocation5 [shape = 's32[1]{0}', space=sflag, size = 0x4, scoped, tag = 'scoped memory for _lambda_.2']
    %8 = vsyncpa [#allocation3], 0
    %9 = vsyncpa [#allocation5], 0
    // Predicated region
    $region2: #{_lambda_.2} parent=1 // pred_check
      _
    $region3: #{_lambda_.2} parent=1 // pred_check_branch
      %11 = sbr.rel (0) target = $region5
    $region4: #{_lambda_.2} parent=1 // pred_region
      _
    $region5: #{_lambda_.2} parent=1 // pred_fallthru
      _
    // Predicated region
    $region6: #{_lambda_.2} parent=1 // pred_check
      _
    $region7: #{_lambda_.2} parent=1 // pred_check_branch
      %13 = sbr.rel (0) target = $region9
    $region8: #{_lambda_.2} parent=1 // pred_region
      %s15 = ssub.s32 55296, 55296
      %16 = vsyncadd [#allocation3], %s15
      %s17 = sshll.u32 [#allocation2], 4
      %s18 = int_to_ptr.vmem [resolvable:$true] %s17
      %23 = dma.hbm_to_vmem [thread:$0]  %s1, 55296, %s18, [#allocation3], 384, 384, 24
    $region9: #{_lambda_.2} parent=1 // pred_fallthru
      _
    // Predicated region
    $region10: #{_lambda_.2} parent=1 // pred_check
      _
    $region11: #{_lambda_.2} parent=1 // pred_check_branch
      %25 = sbr.rel (0) target = $region13
    $region12: #{_lambda_.2} parent=1 // pred_region
      %s27 = ssub.s32 96, 96
      %28 = vsyncadd [#allocation5], %s27
      %s30 = sshll.u32 [#allocation4], 4
      %s31 = int_to_ptr.vmem [resolvable:$true] %s30
      %33 = dma.hbm_to_vmem [thread:$0]  %s2, 96, %s31, [#allocation5]
    $region13: #{_lambda_.2} parent=1 // pred_fallthru
      _
    // Predicated region
    $region14: #{_lambda_.2} parent=1 // pred_check
      _
    $region15: #{_lambda_.2} parent=1 // pred_check_branch
      %35 = sbr.rel (0) target = $region17
    $region16: #{_lambda_.2} parent=1 // pred_region
      %36 = dma.done [#allocation3], 55296
    $region17: #{_lambda_.2} parent=1 // pred_fallthru
      _
    // Predicated region
    $region18: #{_lambda_.2} parent=1 // pred_check
      _
    $region19: #{_lambda_.2} parent=1 // pred_check_branch
      %38 = sbr.rel (0) target = $region21
    $region20: #{_lambda_.2} parent=1 // pred_region
      %39 = dma.done [#allocation5], 96
    $region21: #{_lambda_.2} parent=1 // pred_fallthru
      _
    %v41 = vld [vmem:[%s0] sm:$0xff]
    %v42 = vld [vmem:[%s0 + $0x8] sm:$0xff]
    %v43 = vld [vmem:[%s0 + $0x10] sm:$0x3]
    %v47 = vcombine.high %v41, %v41
    %v49 = vunpack.c.l.s4 1983009808
    %v50 = vunpack.c.0.s8 %v49
    %v51 = vlaneseq
    %v52 = vshrl.u32 %v51, 7
    %v53 = vsub.s32 %v50, %v52
    %v54 = vrot.slane %v41, %v53
    %v56 = vunpack.c.l.s4 1983009808
    %v57 = vunpack.c.0.s8 %v56
    %v58 = vlaneseq
    %v59 = vshrl.u32 %v58, 7
    %v60 = vsub.s32 %v57, %v59
    %v61 = vrot.slane %v47, %v60
    %v62 = vcombine.high %v54, %v54
    %v63 = vcombine.high %v61, %v61
    %v64 = vcombine.high %v42, %v42
    %v66 = vunpack.c.l.s4 1983009808
    %v67 = vunpack.c.0.s8 %v66
    %v68 = vlaneseq
    %v69 = vshrl.u32 %v68, 7
    %v70 = vsub.s32 %v67, %v69
    %v71 = vrot.slane %v42, %v70
    %v73 = vunpack.c.l.s4 1983009808
    %v74 = vunpack.c.0.s8 %v73
    %v75 = vlaneseq
    %v76 = vshrl.u32 %v75, 7
    %v77 = vsub.s32 %v74, %v76
    %v78 = vrot.slane %v64, %v77
    %v79 = vcombine.high %v71, %v71
    %v80 = vcombine.high %v78, %v78
    %v82 = vunpack.c.l.s4 1983009808
    %v83 = vunpack.c.0.s8 %v82
    %v84 = vlaneseq
    %v85 = vshrl.u32 %v84, 7
    %v86 = vsub.s32 %v83, %v85
    %v87 = vrot.slane %v43, %v86
    %v97 = vpack.c.bf16 %v54, %v54
    %v98 = vpack.c.bf16 %v62, %v62
    %v99 = vpack.c.bf16 %v61, %v61
    %v100 = vpack.c.bf16 %v63, %v63
    %v101 = vpack.c.bf16 %v71, %v71
    %v102 = vpack.c.bf16 %v79, %v79
    %v103 = vpack.c.bf16 %v78, %v78
    %v104 = vpack.c.bf16 %v80, %v80
    %v105 = vpack.c.bf16 %v87, %v87
    %v106 = vld [vmem:[#allocation2] sm:$0xff]
    %v107 = vld [vmem:[#allocation2 + $0x8] sm:$0xff]
    %v108 = vld [vmem:[#allocation2 + $0x10] sm:$0xff]
    %v109 = vld [vmem:[#allocation2 + $0x18] sm:$0xff]
    %v110 = vld [vmem:[#allocation2 + $0x20] sm:$0xff]
    %v111 = vld [vmem:[#allocation2 + $0x28] sm:$0xff]
    %v112 = vld [vmem:[#allocation2 + $0x30] sm:$0xff]
    %v113 = vld [vmem:[#allocation2 + $0x38] sm:$0xff]
    %v114 = vld [vmem:[#allocation2 + $0x40] sm:$0xff]
    %v115 = vld [vmem:[#allocation2 + $0x48] sm:$0xff]
    %v116 = vld [vmem:[#allocation2 + $0x50] sm:$0xff]
    %v117 = vld [vmem:[#allocation2 + $0x58] sm:$0xff]
    %v118 = vld [vmem:[#allocation2 + $0x60] sm:$0xff]
    %v119 = vld [vmem:[#allocation2 + $0x68] sm:$0xff]
    %v120 = vld [vmem:[#allocation2 + $0x70] sm:$0xff]
    %v121 = vld [vmem:[#allocation2 + $0x78] sm:$0xff]
    %v122 = vld [vmem:[#allocation2 + $0x80] sm:$0xff]
    %v123 = vld [vmem:[#allocation2 + $0x88] sm:$0xff]
    %v124 = vld [vmem:[#allocation2 + $0x90] sm:$0xff]
    %v125 = vld [vmem:[#allocation2 + $0x98] sm:$0xff]
    %v126 = vld [vmem:[#allocation2 + $0xa0] sm:$0xff]
    %v127 = vld [vmem:[#allocation2 + $0xa8] sm:$0xff]
    %v128 = vld [vmem:[#allocation2 + $0xb0] sm:$0xff]
    %v129 = vld [vmem:[#allocation2 + $0xb8] sm:$0xff]
    %v130 = vld [vmem:[#allocation2 + $0xc0] sm:$0xff]
    %v131 = vld [vmem:[#allocation2 + $0xc8] sm:$0xff]
    %v132 = vld [vmem:[#allocation2 + $0xd0] sm:$0xff]
    %v133 = vld [vmem:[#allocation2 + $0xd8] sm:$0xff]
    %v134 = vld [vmem:[#allocation2 + $0xe0] sm:$0xff]
    %v135 = vld [vmem:[#allocation2 + $0xe8] sm:$0xff]
    %v136 = vld [vmem:[#allocation2 + $0xf0] sm:$0xff]
    %v137 = vld [vmem:[#allocation2 + $0xf8] sm:$0xff]
    %v138 = vld [vmem:[#allocation2 + $0x100] sm:$0xff]
    %v139 = vld [vmem:[#allocation2 + $0x108] sm:$0xff]
    %v140 = vld [vmem:[#allocation2 + $0x110] sm:$0xff]
    %v141 = vld [vmem:[#allocation2 + $0x118] sm:$0xff]
    %v142 = vld [vmem:[#allocation2 + $0x120] sm:$0xff]
    %v143 = vld [vmem:[#allocation2 + $0x128] sm:$0xff]
    %v144 = vld [vmem:[#allocation2 + $0x130] sm:$0xff]
    %v145 = vld [vmem:[#allocation2 + $0x138] sm:$0xff]
    %v146 = vld [vmem:[#allocation2 + $0x140] sm:$0xff]
    %v147 = vld [vmem:[#allocation2 + $0x148] sm:$0xff]
    %v148 = vld [vmem:[#allocation2 + $0x150] sm:$0xff]
    %v149 = vld [vmem:[#allocation2 + $0x158] sm:$0xff]
    %v150 = vld [vmem:[#allocation2 + $0x160] sm:$0xff]
    %v151 = vld [vmem:[#allocation2 + $0x168] sm:$0xff]
    %v152 = vld [vmem:[#allocation2 + $0x170] sm:$0xff]
    %v153 = vld [vmem:[#allocation2 + $0x178] sm:$0xff]
    %v154 = vld [vmem:[#allocation2 + $0x180] sm:$0xff]
    %v155 = vld [vmem:[#allocation2 + $0x188] sm:$0xff]
    %v156 = vld [vmem:[#allocation2 + $0x190] sm:$0xff]
    %v157 = vld [vmem:[#allocation2 + $0x198] sm:$0xff]
    %v158 = vld [vmem:[#allocation2 + $0x1a0] sm:$0xff]
    %v159 = vld [vmem:[#allocation2 + $0x1a8] sm:$0xff]
    %v160 = vld [vmem:[#allocation2 + $0x1b0] sm:$0xff]
    %v161 = vld [vmem:[#allocation2 + $0x1b8] sm:$0xff]
    %v162 = vld [vmem:[#allocation2 + $0x1c0] sm:$0xff]
    %v163 = vld [vmem:[#allocation2 + $0x1c8] sm:$0xff]
    %v164 = vld [vmem:[#allocation2 + $0x1d0] sm:$0xff]
    %v165 = vld [vmem:[#allocation2 + $0x1d8] sm:$0xff]
    %v166 = vld [vmem:[#allocation2 + $0x1e0] sm:$0xff]
    %v167 = vld [vmem:[#allocation2 + $0x1e8] sm:$0xff]
    %v168 = vld [vmem:[#allocation2 + $0x1f0] sm:$0xff]
    %v169 = vld [vmem:[#allocation2 + $0x1f8] sm:$0xff]
    %v170 = vld [vmem:[#allocation2 + $0x200] sm:$0xff]
    %v171 = vld [vmem:[#allocation2 + $0x208] sm:$0xff]
    %v172 = vld [vmem:[#allocation2 + $0x210] sm:$0xff]
    %v173 = vld [vmem:[#allocation2 + $0x218] sm:$0xff]
    %v174 = vld [vmem:[#allocation2 + $0x220] sm:$0xff]
    %v175 = vld [vmem:[#allocation2 + $0x228] sm:$0xff]
    %v176 = vld [vmem:[#allocation2 + $0x230] sm:$0xff]
    %v177 = vld [vmem:[#allocation2 + $0x238] sm:$0xff]
    %v178 = vld [vmem:[#allocation2 + $0x240] sm:$0xff]
    %v179 = vld [vmem:[#allocation2 + $0x248] sm:$0xff]
    %v180 = vld [vmem:[#allocation2 + $0x250] sm:$0xff]
    %v181 = vld [vmem:[#allocation2 + $0x258] sm:$0xff]
    %v182 = vld [vmem:[#allocation2 + $0x260] sm:$0xff]
    %v183 = vld [vmem:[#allocation2 + $0x268] sm:$0xff]
    %v184 = vld [vmem:[#allocation2 + $0x270] sm:$0xff]
    %v185 = vld [vmem:[#allocation2 + $0x278] sm:$0xff]
    %v186 = vld [vmem:[#allocation2 + $0x280] sm:$0xff]
    %v187 = vld [vmem:[#allocation2 + $0x288] sm:$0xff]
    %v188 = vld [vmem:[#allocation2 + $0x290] sm:$0xff]
    %v189 = vld [vmem:[#allocation2 + $0x298] sm:$0xff]
    %v190 = vld [vmem:[#allocation2 + $0x2a0] sm:$0xff]
    %v191 = vld [vmem:[#allocation2 + $0x2a8] sm:$0xff]
    %v192 = vld [vmem:[#allocation2 + $0x2b0] sm:$0xff]
    %v193 = vld [vmem:[#allocation2 + $0x2b8] sm:$0xff]
    %v194 = vld [vmem:[#allocation2 + $0x2c0] sm:$0xff]
    %v195 = vld [vmem:[#allocation2 + $0x2c8] sm:$0xff]
    %v196 = vld [vmem:[#allocation2 + $0x2d0] sm:$0xff]
    %v197 = vld [vmem:[#allocation2 + $0x2d8] sm:$0xff]
    %v198 = vld [vmem:[#allocation2 + $0x2e0] sm:$0xff]
    %v199 = vld [vmem:[#allocation2 + $0x2e8] sm:$0xff]
    %v200 = vld [vmem:[#allocation2 + $0x2f0] sm:$0xff]
    %v201 = vld [vmem:[#allocation2 + $0x2f8] sm:$0xff]
    %v202 = vld [vmem:[#allocation2 + $0x300] sm:$0xff]
    %v203 = vld [vmem:[#allocation2 + $0x308] sm:$0xff]
    %v204 = vld [vmem:[#allocation2 + $0x310] sm:$0xff]
    %v205 = vld [vmem:[#allocation2 + $0x318] sm:$0xff]
    %v206 = vld [vmem:[#allocation2 + $0x320] sm:$0xff]
    %v207 = vld [vmem:[#allocation2 + $0x328] sm:$0xff]
    %v208 = vld [vmem:[#allocation2 + $0x330] sm:$0xff]
    %v209 = vld [vmem:[#allocation2 + $0x338] sm:$0xff]
    %v210 = vld [vmem:[#allocation2 + $0x340] sm:$0xff]
    %v211 = vld [vmem:[#allocation2 + $0x348] sm:$0xff]
    %v212 = vld [vmem:[#allocation2 + $0x350] sm:$0xff]
    %v213 = vld [vmem:[#allocation2 + $0x358] sm:$0xff]
    %v214 = vld [vmem:[#allocation2 + $0x360] sm:$0xff]
    %v215 = vld [vmem:[#allocation2 + $0x368] sm:$0xff]
    %v216 = vld [vmem:[#allocation2 + $0x370] sm:$0xff]
    %v217 = vld [vmem:[#allocation2 + $0x378] sm:$0xff]
    %v218 = vld [vmem:[#allocation2 + $0x380] sm:$0xff]
    %v219 = vld [vmem:[#allocation2 + $0x388] sm:$0xff]
    %v220 = vld [vmem:[#allocation2 + $0x390] sm:$0xff]
    %v221 = vld [vmem:[#allocation2 + $0x398] sm:$0xff]
    %v222 = vld [vmem:[#allocation2 + $0x3a0] sm:$0xff]
    %v223 = vld [vmem:[#allocation2 + $0x3a8] sm:$0xff]
    %v224 = vld [vmem:[#allocation2 + $0x3b0] sm:$0xff]
    %v225 = vld [vmem:[#allocation2 + $0x3b8] sm:$0xff]
    %v226 = vld [vmem:[#allocation2 + $0x3c0] sm:$0xff]
    %v227 = vld [vmem:[#allocation2 + $0x3c8] sm:$0xff]
    %v228 = vld [vmem:[#allocation2 + $0x3d0] sm:$0xff]
    %v229 = vld [vmem:[#allocation2 + $0x3d8] sm:$0xff]
    %v230 = vld [vmem:[#allocation2 + $0x3e0] sm:$0xff]
    %v231 = vld [vmem:[#allocation2 + $0x3e8] sm:$0xff]
    %v232 = vld [vmem:[#allocation2 + $0x3f0] sm:$0xff]
    %v233 = vld [vmem:[#allocation2 + $0x3f8] sm:$0xff]
    %v234 = vld [vmem:[#allocation2 + $0x400] sm:$0xff]
    %v235 = vld [vmem:[#allocation2 + $0x408] sm:$0xff]
    %v236 = vld [vmem:[#allocation2 + $0x410] sm:$0xff]
    %v237 = vld [vmem:[#allocation2 + $0x418] sm:$0xff]
    %v238 = vld [vmem:[#allocation2 + $0x420] sm:$0xff]
    %v239 = vld [vmem:[#allocation2 + $0x428] sm:$0xff]
    %v240 = vld [vmem:[#allocation2 + $0x430] sm:$0xff]
    %v241 = vld [vmem:[#allocation2 + $0x438] sm:$0xff]
    %v242 = vld [vmem:[#allocation2 + $0x440] sm:$0xff]
    %v243 = vld [vmem:[#allocation2 + $0x448] sm:$0xff]
    %v244 = vld [vmem:[#allocation2 + $0x450] sm:$0xff]
    %v245 = vld [vmem:[#allocation2 + $0x458] sm:$0xff]
    %v246 = vld [vmem:[#allocation2 + $0x460] sm:$0xff]
    %v247 = vld [vmem:[#allocation2 + $0x468] sm:$0xff]
    %v248 = vld [vmem:[#allocation2 + $0x470] sm:$0xff]
    %v249 = vld [vmem:[#allocation2 + $0x478] sm:$0xff]
    %v250 = vld [vmem:[#allocation2 + $0x480] sm:$0xff]
    %v251 = vld [vmem:[#allocation2 + $0x488] sm:$0xff]
    %v252 = vld [vmem:[#allocation2 + $0x490] sm:$0xff]
    %v253 = vld [vmem:[#allocation2 + $0x498] sm:$0xff]
    %v254 = vld [vmem:[#allocation2 + $0x4a0] sm:$0xff]
    %v255 = vld [vmem:[#allocation2 + $0x4a8] sm:$0xff]
    %v256 = vld [vmem:[#allocation2 + $0x4b0] sm:$0xff]
    %v257 = vld [vmem:[#allocation2 + $0x4b8] sm:$0xff]
    %v258 = vld [vmem:[#allocation2 + $0x4c0] sm:$0xff]
    %v259 = vld [vmem:[#allocation2 + $0x4c8] sm:$0xff]
    %v260 = vld [vmem:[#allocation2 + $0x4d0] sm:$0xff]
    %v261 = vld [vmem:[#allocation2 + $0x4d8] sm:$0xff]
    %v262 = vld [vmem:[#allocation2 + $0x4e0] sm:$0xff]
    %v263 = vld [vmem:[#allocation2 + $0x4e8] sm:$0xff]
    %v264 = vld [vmem:[#allocation2 + $0x4f0] sm:$0xff]
    %v265 = vld [vmem:[#allocation2 + $0x4f8] sm:$0xff]
    %v266 = vld [vmem:[#allocation2 + $0x500] sm:$0xff]
    %v267 = vld [vmem:[#allocation2 + $0x508] sm:$0xff]
    %v268 = vld [vmem:[#allocation2 + $0x510] sm:$0xff]
    %v269 = vld [vmem:[#allocation2 + $0x518] sm:$0xff]
    %v270 = vld [vmem:[#allocation2 + $0x520] sm:$0xff]
    %v271 = vld [vmem:[#allocation2 + $0x528] sm:$0xff]
    %v272 = vld [vmem:[#allocation2 + $0x530] sm:$0xff]
    %v273 = vld [vmem:[#allocation2 + $0x538] sm:$0xff]
    %v274 = vld [vmem:[#allocation2 + $0x540] sm:$0xff]
    %v275 = vld [vmem:[#allocation2 + $0x548] sm:$0xff]
    %v276 = vld [vmem:[#allocation2 + $0x550] sm:$0xff]
    %v277 = vld [vmem:[#allocation2 + $0x558] sm:$0xff]
    %v278 = vld [vmem:[#allocation2 + $0x560] sm:$0xff]
    %v279 = vld [vmem:[#allocation2 + $0x568] sm:$0xff]
    %v280 = vld [vmem:[#allocation2 + $0x570] sm:$0xff]
    %v281 = vld [vmem:[#allocation2 + $0x578] sm:$0xff]
    %v282 = vld [vmem:[#allocation2 + $0x580] sm:$0xff]
    %v283 = vld [vmem:[#allocation2 + $0x588] sm:$0xff]
    %v284 = vld [vmem:[#allocation2 + $0x590] sm:$0xff]
    %v285 = vld [vmem:[#allocation2 + $0x598] sm:$0xff]
    %v286 = vld [vmem:[#allocation2 + $0x5a0] sm:$0xff]
    %v287 = vld [vmem:[#allocation2 + $0x5a8] sm:$0xff]
    %v288 = vld [vmem:[#allocation2 + $0x5b0] sm:$0xff]
    %v289 = vld [vmem:[#allocation2 + $0x5b8] sm:$0xff]
    %v290 = vld [vmem:[#allocation2 + $0x5c0] sm:$0xff]
    %v291 = vld [vmem:[#allocation2 + $0x5c8] sm:$0xff]
    %v292 = vld [vmem:[#allocation2 + $0x5d0] sm:$0xff]
    %v293 = vld [vmem:[#allocation2 + $0x5d8] sm:$0xff]
    %v294 = vld [vmem:[#allocation2 + $0x5e0] sm:$0xff]
    %v295 = vld [vmem:[#allocation2 + $0x5e8] sm:$0xff]
    %v296 = vld [vmem:[#allocation2 + $0x5f0] sm:$0xff]
    %v297 = vld [vmem:[#allocation2 + $0x5f8] sm:$0xff]
    %v298 = vld [vmem:[#allocation2 + $0x600] sm:$0xff]
    %v299 = vld [vmem:[#allocation2 + $0x608] sm:$0xff]
    %v300 = vld [vmem:[#allocation2 + $0x610] sm:$0xff]
    %v301 = vld [vmem:[#allocation2 + $0x618] sm:$0xff]
    %v302 = vld [vmem:[#allocation2 + $0x620] sm:$0xff]
    %v303 = vld [vmem:[#allocation2 + $0x628] sm:$0xff]
    %v304 = vld [vmem:[#allocation2 + $0x630] sm:$0xff]
    %v305 = vld [vmem:[#allocation2 + $0x638] sm:$0xff]
    %v306 = vld [vmem:[#allocation2 + $0x640] sm:$0xff]
    %v307 = vld [vmem:[#allocation2 + $0x648] sm:$0xff]
    %v308 = vld [vmem:[#allocation2 + $0x650] sm:$0xff]
    %v309 = vld [vmem:[#allocation2 + $0x658] sm:$0xff]
    %v310 = vld [vmem:[#allocation2 + $0x660] sm:$0xff]
    %v311 = vld [vmem:[#allocation2 + $0x668] sm:$0xff]
    %v312 = vld [vmem:[#allocation2 + $0x670] sm:$0xff]
    %v313 = vld [vmem:[#allocation2 + $0x678] sm:$0xff]
    %v314 = vld [vmem:[#allocation2 + $0x680] sm:$0xff]
    %v315 = vld [vmem:[#allocation2 + $0x688] sm:$0xff]
    %v316 = vld [vmem:[#allocation2 + $0x690] sm:$0xff]
    %v317 = vld [vmem:[#allocation2 + $0x698] sm:$0xff]
    %v318 = vld [vmem:[#allocation2 + $0x6a0] sm:$0xff]
    %v319 = vld [vmem:[#allocation2 + $0x6a8] sm:$0xff]
    %v320 = vld [vmem:[#allocation2 + $0x6b0] sm:$0xff]
    %v321 = vld [vmem:[#allocation2 + $0x6b8] sm:$0xff]
    %v322 = vld [vmem:[#allocation2 + $0x6c0] sm:$0xff]
    %v323 = vld [vmem:[#allocation2 + $0x6c8] sm:$0xff]
    %v324 = vld [vmem:[#allocation2 + $0x6d0] sm:$0xff]
    %v325 = vld [vmem:[#allocation2 + $0x6d8] sm:$0xff]
    %v326 = vld [vmem:[#allocation2 + $0x6e0] sm:$0xff]
    %v327 = vld [vmem:[#allocation2 + $0x6e8] sm:$0xff]
    %v328 = vld [vmem:[#allocation2 + $0x6f0] sm:$0xff]
    %v329 = vld [vmem:[#allocation2 + $0x6f8] sm:$0xff]
    %v330 = vld [vmem:[#allocation2 + $0x700] sm:$0xff]
    %v331 = vld [vmem:[#allocation2 + $0x708] sm:$0xff]
    %v332 = vld [vmem:[#allocation2 + $0x710] sm:$0xff]
    %v333 = vld [vmem:[#allocation2 + $0x718] sm:$0xff]
    %v334 = vld [vmem:[#allocation2 + $0x720] sm:$0xff]
    %v335 = vld [vmem:[#allocation2 + $0x728] sm:$0xff]
    %v336 = vld [vmem:[#allocation2 + $0x730] sm:$0xff]
    %v337 = vld [vmem:[#allocation2 + $0x738] sm:$0xff]
    %v338 = vld [vmem:[#allocation2 + $0x740] sm:$0xff]
    %v339 = vld [vmem:[#allocation2 + $0x748] sm:$0xff]
    %v340 = vld [vmem:[#allocation2 + $0x750] sm:$0xff]
    %v341 = vld [vmem:[#allocation2 + $0x758] sm:$0xff]
    %v342 = vld [vmem:[#allocation2 + $0x760] sm:$0xff]
    %v343 = vld [vmem:[#allocation2 + $0x768] sm:$0xff]
    %v344 = vld [vmem:[#allocation2 + $0x770] sm:$0xff]
    %v345 = vld [vmem:[#allocation2 + $0x778] sm:$0xff]
    %v346 = vld [vmem:[#allocation2 + $0x780] sm:$0xff]
    %v347 = vld [vmem:[#allocation2 + $0x788] sm:$0xff]
    %v348 = vld [vmem:[#allocation2 + $0x790] sm:$0xff]
    %v349 = vld [vmem:[#allocation2 + $0x798] sm:$0xff]
    %v350 = vld [vmem:[#allocation2 + $0x7a0] sm:$0xff]
    %v351 = vld [vmem:[#allocation2 + $0x7a8] sm:$0xff]
    %v352 = vld [vmem:[#allocation2 + $0x7b0] sm:$0xff]
    %v353 = vld [vmem:[#allocation2 + $0x7b8] sm:$0xff]
    %v354 = vld [vmem:[#allocation2 + $0x7c0] sm:$0xff]
    %v355 = vld [vmem:[#allocation2 + $0x7c8] sm:$0xff]
    %v356 = vld [vmem:[#allocation2 + $0x7d0] sm:$0xff]
    %v357 = vld [vmem:[#allocation2 + $0x7d8] sm:$0xff]
    %v358 = vld [vmem:[#allocation2 + $0x7e0] sm:$0xff]
    %v359 = vld [vmem:[#allocation2 + $0x7e8] sm:$0xff]
    %v360 = vld [vmem:[#allocation2 + $0x7f0] sm:$0xff]
    %v361 = vld [vmem:[#allocation2 + $0x7f8] sm:$0xff]
    %v362 = vld [vmem:[#allocation2 + $0x800] sm:$0xff]
    %v363 = vld [vmem:[#allocation2 + $0x808] sm:$0xff]
    %v364 = vld [vmem:[#allocation2 + $0x810] sm:$0xff]
    %v365 = vld [vmem:[#allocation2 + $0x818] sm:$0xff]
    %v366 = vld [vmem:[#allocation2 + $0x820] sm:$0xff]
    %v367 = vld [vmem:[#allocation2 + $0x828] sm:$0xff]
    %v368 = vld [vmem:[#allocation2 + $0x830] sm:$0xff]
    %v369 = vld [vmem:[#allocation2 + $0x838] sm:$0xff]
    %v370 = vld [vmem:[#allocation2 + $0x840] sm:$0xff]
    %v371 = vld [vmem:[#allocation2 + $0x848] sm:$0xff]
    %v372 = vld [vmem:[#allocation2 + $0x850] sm:$0xff]
    %v373 = vld [vmem:[#allocation2 + $0x858] sm:$0xff]
    %v374 = vld [vmem:[#allocation2 + $0x860] sm:$0xff]
    %v375 = vld [vmem:[#allocation2 + $0x868] sm:$0xff]
    %v376 = vld [vmem:[#allocation2 + $0x870] sm:$0xff]
    %v377 = vld [vmem:[#allocation2 + $0x878] sm:$0xff]
    %v378 = vld [vmem:[#allocation2 + $0x880] sm:$0xff]
    %v379 = vld [vmem:[#allocation2 + $0x888] sm:$0xff]
    %v380 = vld [vmem:[#allocation2 + $0x890] sm:$0xff]
    %v381 = vld [vmem:[#allocation2 + $0x898] sm:$0xff]
    %v382 = vld [vmem:[#allocation2 + $0x8a0] sm:$0xff]
    %v383 = vld [vmem:[#allocation2 + $0x8a8] sm:$0xff]
    %v384 = vld [vmem:[#allocation2 + $0x8b0] sm:$0xff]
    %v385 = vld [vmem:[#allocation2 + $0x8b8] sm:$0xff]
    %v386 = vld [vmem:[#allocation2 + $0x8c0] sm:$0xff]
    %v387 = vld [vmem:[#allocation2 + $0x8c8] sm:$0xff]
    %v388 = vld [vmem:[#allocation2 + $0x8d0] sm:$0xff]
    %v389 = vld [vmem:[#allocation2 + $0x8d8] sm:$0xff]
    %v390 = vld [vmem:[#allocation2 + $0x8e0] sm:$0xff]
    %v391 = vld [vmem:[#allocation2 + $0x8e8] sm:$0xff]
    %v392 = vld [vmem:[#allocation2 + $0x8f0] sm:$0xff]
    %v393 = vld [vmem:[#allocation2 + $0x8f8] sm:$0xff]
    %v394 = vld [vmem:[#allocation2 + $0x900] sm:$0xff]
    %v395 = vld [vmem:[#allocation2 + $0x908] sm:$0xff]
    %v396 = vld [vmem:[#allocation2 + $0x910] sm:$0xff]
    %v397 = vld [vmem:[#allocation2 + $0x918] sm:$0xff]
    %v398 = vld [vmem:[#allocation2 + $0x920] sm:$0xff]
    %v399 = vld [vmem:[#allocation2 + $0x928] sm:$0xff]
    %v400 = vld [vmem:[#allocation2 + $0x930] sm:$0xff]
    %v401 = vld [vmem:[#allocation2 + $0x938] sm:$0xff]
    %v402 = vld [vmem:[#allocation2 + $0x940] sm:$0xff]
    %v403 = vld [vmem:[#allocation2 + $0x948] sm:$0xff]
    %v404 = vld [vmem:[#allocation2 + $0x950] sm:$0xff]
    %v405 = vld [vmem:[#allocation2 + $0x958] sm:$0xff]
    %v406 = vld [vmem:[#allocation2 + $0x960] sm:$0xff]
    %v407 = vld [vmem:[#allocation2 + $0x968] sm:$0xff]
    %v408 = vld [vmem:[#allocation2 + $0x970] sm:$0xff]
    %v409 = vld [vmem:[#allocation2 + $0x978] sm:$0xff]
    %v410 = vld [vmem:[#allocation2 + $0x980] sm:$0xff]
    %v411 = vld [vmem:[#allocation2 + $0x988] sm:$0xff]
    %v412 = vld [vmem:[#allocation2 + $0x990] sm:$0xff]
    %v413 = vld [vmem:[#allocation2 + $0x998] sm:$0xff]
    %v414 = vld [vmem:[#allocation2 + $0x9a0] sm:$0xff]
    %v415 = vld [vmem:[#allocation2 + $0x9a8] sm:$0xff]
    %v416 = vld [vmem:[#allocation2 + $0x9b0] sm:$0xff]
    %v417 = vld [vmem:[#allocation2 + $0x9b8] sm:$0xff]
    %v418 = vld [vmem:[#allocation2 + $0x9c0] sm:$0xff]
    %v419 = vld [vmem:[#allocation2 + $0x9c8] sm:$0xff]
    %v420 = vld [vmem:[#allocation2 + $0x9d0] sm:$0xff]
    %v421 = vld [vmem:[#allocation2 + $0x9d8] sm:$0xff]
    %v422 = vld [vmem:[#allocation2 + $0x9e0] sm:$0xff]
    %v423 = vld [vmem:[#allocation2 + $0x9e8] sm:$0xff]
    %v424 = vld [vmem:[#allocation2 + $0x9f0] sm:$0xff]
    %v425 = vld [vmem:[#allocation2 + $0x9f8] sm:$0xff]
    %v426 = vld [vmem:[#allocation2 + $0xa00] sm:$0xff]
    %v427 = vld [vmem:[#allocation2 + $0xa08] sm:$0xff]
    %v428 = vld [vmem:[#allocation2 + $0xa10] sm:$0xff]
    %v429 = vld [vmem:[#allocation2 + $0xa18] sm:$0xff]
    %v430 = vld [vmem:[#allocation2 + $0xa20] sm:$0xff]
    %v431 = vld [vmem:[#allocation2 + $0xa28] sm:$0xff]
    %v432 = vld [vmem:[#allocation2 + $0xa30] sm:$0xff]
    %v433 = vld [vmem:[#allocation2 + $0xa38] sm:$0xff]
    %v434 = vld [vmem:[#allocation2 + $0xa40] sm:$0xff]
    %v435 = vld [vmem:[#allocation2 + $0xa48] sm:$0xff]
    %v436 = vld [vmem:[#allocation2 + $0xa50] sm:$0xff]
    %v437 = vld [vmem:[#allocation2 + $0xa58] sm:$0xff]
    %v438 = vld [vmem:[#allocation2 + $0xa60] sm:$0xff]
    %v439 = vld [vmem:[#allocation2 + $0xa68] sm:$0xff]
    %v440 = vld [vmem:[#allocation2 + $0xa70] sm:$0xff]
    %v441 = vld [vmem:[#allocation2 + $0xa78] sm:$0xff]
    %v442 = vld [vmem:[#allocation2 + $0xa80] sm:$0xff]
    %v443 = vld [vmem:[#allocation2 + $0xa88] sm:$0xff]
    %v444 = vld [vmem:[#allocation2 + $0xa90] sm:$0xff]
    %v445 = vld [vmem:[#allocation2 + $0xa98] sm:$0xff]
    %v446 = vld [vmem:[#allocation2 + $0xaa0] sm:$0xff]
    %v447 = vld [vmem:[#allocation2 + $0xaa8] sm:$0xff]
    %v448 = vld [vmem:[#allocation2 + $0xab0] sm:$0xff]
    %v449 = vld [vmem:[#allocation2 + $0xab8] sm:$0xff]
    %v450 = vld [vmem:[#allocation2 + $0xac0] sm:$0xff]
    %v451 = vld [vmem:[#allocation2 + $0xac8] sm:$0xff]
    %v452 = vld [vmem:[#allocation2 + $0xad0] sm:$0xff]
    %v453 = vld [vmem:[#allocation2 + $0xad8] sm:$0xff]
    %v454 = vld [vmem:[#allocation2 + $0xae0] sm:$0xff]
    %v455 = vld [vmem:[#allocation2 + $0xae8] sm:$0xff]
    %v456 = vld [vmem:[#allocation2 + $0xaf0] sm:$0xff]
    %v457 = vld [vmem:[#allocation2 + $0xaf8] sm:$0xff]
    %v458 = vld [vmem:[#allocation2 + $0xb00] sm:$0xff]
    %v459 = vld [vmem:[#allocation2 + $0xb08] sm:$0xff]
    %v460 = vld [vmem:[#allocation2 + $0xb10] sm:$0xff]
    %v461 = vld [vmem:[#allocation2 + $0xb18] sm:$0xff]
    %v462 = vld [vmem:[#allocation2 + $0xb20] sm:$0xff]
    %v463 = vld [vmem:[#allocation2 + $0xb28] sm:$0xff]
    %v464 = vld [vmem:[#allocation2 + $0xb30] sm:$0xff]
    %v465 = vld [vmem:[#allocation2 + $0xb38] sm:$0xff]
    %v466 = vld [vmem:[#allocation2 + $0xb40] sm:$0xff]
    %v467 = vld [vmem:[#allocation2 + $0xb48] sm:$0xff]
    %v468 = vld [vmem:[#allocation2 + $0xb50] sm:$0xff]
    %v469 = vld [vmem:[#allocation2 + $0xb58] sm:$0xff]
    %v470 = vld [vmem:[#allocation2 + $0xb60] sm:$0xff]
    %v471 = vld [vmem:[#allocation2 + $0xb68] sm:$0xff]
    %v472 = vld [vmem:[#allocation2 + $0xb70] sm:$0xff]
    %v473 = vld [vmem:[#allocation2 + $0xb78] sm:$0xff]
    %v474 = vld [vmem:[#allocation2 + $0xb80] sm:$0xff]
    %v475 = vld [vmem:[#allocation2 + $0xb88] sm:$0xff]
    %v476 = vld [vmem:[#allocation2 + $0xb90] sm:$0xff]
    %v477 = vld [vmem:[#allocation2 + $0xb98] sm:$0xff]
    %v478 = vld [vmem:[#allocation2 + $0xba0] sm:$0xff]
    %v479 = vld [vmem:[#allocation2 + $0xba8] sm:$0xff]
    %v480 = vld [vmem:[#allocation2 + $0xbb0] sm:$0xff]
    %v481 = vld [vmem:[#allocation2 + $0xbb8] sm:$0xff]
    %v482 = vld [vmem:[#allocation2 + $0xbc0] sm:$0xff]
    %v483 = vld [vmem:[#allocation2 + $0xbc8] sm:$0xff]
    %v484 = vld [vmem:[#allocation2 + $0xbd0] sm:$0xff]
    %v485 = vld [vmem:[#allocation2 + $0xbd8] sm:$0xff]
    %v486 = vld [vmem:[#allocation2 + $0xbe0] sm:$0xff]
    %v487 = vld [vmem:[#allocation2 + $0xbe8] sm:$0xff]
    %v488 = vld [vmem:[#allocation2 + $0xbf0] sm:$0xff]
    %v489 = vld [vmem:[#allocation2 + $0xbf8] sm:$0xff]
    %v490 = vld [vmem:[#allocation2 + $0xc00] sm:$0xff]
    %v491 = vld [vmem:[#allocation2 + $0xc08] sm:$0xff]
    %v492 = vld [vmem:[#allocation2 + $0xc10] sm:$0xff]
    %v493 = vld [vmem:[#allocation2 + $0xc18] sm:$0xff]
    %v494 = vld [vmem:[#allocation2 + $0xc20] sm:$0xff]
    %v495 = vld [vmem:[#allocation2 + $0xc28] sm:$0xff]
    %v496 = vld [vmem:[#allocation2 + $0xc30] sm:$0xff]
    %v497 = vld [vmem:[#allocation2 + $0xc38] sm:$0xff]
    %v498 = vld [vmem:[#allocation2 + $0xc40] sm:$0xff]
    %v499 = vld [vmem:[#allocation2 + $0xc48] sm:$0xff]
    %v500 = vld [vmem:[#allocation2 + $0xc50] sm:$0xff]
    %v501 = vld [vmem:[#allocation2 + $0xc58] sm:$0xff]
    %v502 = vld [vmem:[#allocation2 + $0xc60] sm:$0xff]
    %v503 = vld [vmem:[#allocation2 + $0xc68] sm:$0xff]
    %v504 = vld [vmem:[#allocation2 + $0xc70] sm:$0xff]
    %v505 = vld [vmem:[#allocation2 + $0xc78] sm:$0xff]
    %v506 = vld [vmem:[#allocation2 + $0xc80] sm:$0xff]
    %v507 = vld [vmem:[#allocation2 + $0xc88] sm:$0xff]
    %v508 = vld [vmem:[#allocation2 + $0xc90] sm:$0xff]
    %v509 = vld [vmem:[#allocation2 + $0xc98] sm:$0xff]
    %v510 = vld [vmem:[#allocation2 + $0xca0] sm:$0xff]
    %v511 = vld [vmem:[#allocation2 + $0xca8] sm:$0xff]
    %v512 = vld [vmem:[#allocation2 + $0xcb0] sm:$0xff]
    %v513 = vld [vmem:[#allocation2 + $0xcb8] sm:$0xff]
    %v514 = vld [vmem:[#allocation2 + $0xcc0] sm:$0xff]
    %v515 = vld [vmem:[#allocation2 + $0xcc8] sm:$0xff]
    %v516 = vld [vmem:[#allocation2 + $0xcd0] sm:$0xff]
    %v517 = vld [vmem:[#allocation2 + $0xcd8] sm:$0xff]
    %v518 = vld [vmem:[#allocation2 + $0xce0] sm:$0xff]
    %v519 = vld [vmem:[#allocation2 + $0xce8] sm:$0xff]
    %v520 = vld [vmem:[#allocation2 + $0xcf0] sm:$0xff]
    %v521 = vld [vmem:[#allocation2 + $0xcf8] sm:$0xff]
    %v522 = vld [vmem:[#allocation2 + $0xd00] sm:$0xff]
    %v523 = vld [vmem:[#allocation2 + $0xd08] sm:$0xff]
    %v524 = vld [vmem:[#allocation2 + $0xd10] sm:$0xff]
    %v525 = vld [vmem:[#allocation2 + $0xd18] sm:$0xff]
    %v526 = vld [vmem:[#allocation2 + $0xd20] sm:$0xff]
    %v527 = vld [vmem:[#allocation2 + $0xd28] sm:$0xff]
    %v528 = vld [vmem:[#allocation2 + $0xd30] sm:$0xff]
    %v529 = vld [vmem:[#allocation2 + $0xd38] sm:$0xff]
    %v530 = vld [vmem:[#allocation2 + $0xd40] sm:$0xff]
    %v531 = vld [vmem:[#allocation2 + $0xd48] sm:$0xff]
    %v532 = vld [vmem:[#allocation2 + $0xd50] sm:$0xff]
    %v533 = vld [vmem:[#allocation2 + $0xd58] sm:$0xff]
    %v534 = vld [vmem:[#allocation2 + $0xd60] sm:$0xff]
    %v535 = vld [vmem:[#allocation2 + $0xd68] sm:$0xff]
    %v536 = vld [vmem:[#allocation2 + $0xd70] sm:$0xff]
    %v537 = vld [vmem:[#allocation2 + $0xd78] sm:$0xff]
    %v538 = vld [vmem:[#allocation4] sm:$0x3f]
    %v540 = vlaneseq
    %v541 = vshrl.u32 %v540, 7
    %v542 = vsub.s32 0, %v541
    %v543 = vrot.slane %v538, %v542
    %v544 = vlaneseq
    %v545 = vshrl.u32 %v544, 7
    %v546 = vsub.s32 1, %v545
    %v547 = vrot.slane %v538, %v546
    %v548 = vlaneseq
    %v549 = vshrl.u32 %v548, 7
    %v550 = vsub.s32 2, %v549
    %v551 = vrot.slane %v538, %v550
    %v552 = vlaneseq
    %v553 = vshrl.u32 %v552, 7
    %v554 = vsub.s32 3, %v553
    %v555 = vrot.slane %v538, %v554
    %v556 = vlaneseq
    %v557 = vshrl.u32 %v556, 7
    %v558 = vsub.s32 4, %v557
    %v559 = vrot.slane %v538, %v558
    %v560 = vlaneseq
    %v561 = vshrl.u32 %v560, 7
    %v562 = vsub.s32 5, %v561
    %v563 = vrot.slane %v538, %v562
    %v1002 = vunpack.c.l.b16 %v106
    %v1003 = vunpack.c.h.b16 %v106
    %v1004 = vunpack.c.l.b16 %v107
    %v1005 = vunpack.c.h.b16 %v107
    %v1006 = vunpack.c.l.b16 %v108
    %v1007 = vunpack.c.h.b16 %v108
    %v1008 = vunpack.c.l.b16 %v109
    %v1009 = vunpack.c.h.b16 %v109
    %v1010 = vunpack.c.l.b16 %v110
    %v1011 = vunpack.c.h.b16 %v110
    %v1012 = vunpack.c.l.b16 %v111
    %v1013 = vunpack.c.h.b16 %v111
    %v1014 = vunpack.c.l.b16 %v112
    %v1015 = vunpack.c.h.b16 %v112
    %v1016 = vunpack.c.l.b16 %v113
    %v1017 = vunpack.c.h.b16 %v113
    %v1018 = vunpack.c.l.b16 %v114
    %v1019 = vunpack.c.h.b16 %v114
    %v1020 = vunpack.c.l.b16 %v115
    %v1021 = vunpack.c.h.b16 %v115
    %v1022 = vunpack.c.l.b16 %v116
    %v1023 = vunpack.c.h.b16 %v116
    %v1024 = vunpack.c.l.b16 %v117
    %v1025 = vunpack.c.h.b16 %v117
    %v1026 = vunpack.c.l.b16 %v118
    %v1027 = vunpack.c.h.b16 %v118
    %v1028 = vunpack.c.l.b16 %v119
    %v1029 = vunpack.c.h.b16 %v119
    %v1030 = vunpack.c.l.b16 %v120
    %v1031 = vunpack.c.h.b16 %v120
    %v1032 = vunpack.c.l.b16 %v121
    %v1033 = vunpack.c.h.b16 %v121
    %v1034 = vunpack.c.l.b16 %v122
    %v1035 = vunpack.c.h.b16 %v122
    %v1036 = vunpack.c.l.b16 %v123
    %v1037 = vunpack.c.h.b16 %v123
    %v1038 = vunpack.c.l.b16 %v124
    %v1039 = vunpack.c.h.b16 %v124
    %v1040 = vunpack.c.l.b16 %v125
    %v1041 = vunpack.c.h.b16 %v125
    %v1042 = vunpack.c.l.b16 %v126
    %v1043 = vunpack.c.h.b16 %v126
    %v1044 = vunpack.c.l.b16 %v127
    %v1045 = vunpack.c.h.b16 %v127
    %v1046 = vunpack.c.l.b16 %v128
    %v1047 = vunpack.c.h.b16 %v128
    %v1048 = vunpack.c.l.b16 %v129
    %v1049 = vunpack.c.h.b16 %v129
    %v1050 = vunpack.c.l.b16 %v130
    %v1051 = vunpack.c.h.b16 %v130
    %v1052 = vunpack.c.l.b16 %v131
    %v1053 = vunpack.c.h.b16 %v131
    %v1054 = vunpack.c.l.b16 %v132
    %v1055 = vunpack.c.h.b16 %v132
    %v1056 = vunpack.c.l.b16 %v133
    %v1057 = vunpack.c.h.b16 %v133
    %v1058 = vunpack.c.l.b16 %v134
    %v1059 = vunpack.c.h.b16 %v134
    %v1060 = vunpack.c.l.b16 %v135
    %v1061 = vunpack.c.h.b16 %v135
    %v1062 = vunpack.c.l.b16 %v136
    %v1063 = vunpack.c.h.b16 %v136
    %v1064 = vunpack.c.l.b16 %v137
    %v1065 = vunpack.c.h.b16 %v137
    %v1066 = vunpack.c.l.b16 %v138
    %v1067 = vunpack.c.h.b16 %v138
    %v1068 = vunpack.c.l.b16 %v139
    %v1069 = vunpack.c.h.b16 %v139
    %v1070 = vunpack.c.l.b16 %v140
    %v1071 = vunpack.c.h.b16 %v140
    %v1072 = vunpack.c.l.b16 %v141
    %v1073 = vunpack.c.h.b16 %v141
    %v1074 = vunpack.c.l.b16 %v142
    %v1075 = vunpack.c.h.b16 %v142
    %v1076 = vunpack.c.l.b16 %v143
    %v1077 = vunpack.c.h.b16 %v143
    %v1078 = vunpack.c.l.b16 %v144
    %v1079 = vunpack.c.h.b16 %v144
    %v1080 = vunpack.c.l.b16 %v145
    %v1081 = vunpack.c.h.b16 %v145
    %v1082 = vunpack.c.l.b16 %v146
    %v1083 = vunpack.c.h.b16 %v146
    %v1084 = vunpack.c.l.b16 %v147
    %v1085 = vunpack.c.h.b16 %v147
    %v1086 = vunpack.c.l.b16 %v148
    %v1087 = vunpack.c.h.b16 %v148
    %v1088 = vunpack.c.l.b16 %v149
    %v1089 = vunpack.c.h.b16 %v149
    %v1090 = vunpack.c.l.b16 %v150
    %v1091 = vunpack.c.h.b16 %v150
    %v1092 = vunpack.c.l.b16 %v151
    %v1093 = vunpack.c.h.b16 %v151
    %v1094 = vunpack.c.l.b16 %v152
    %v1095 = vunpack.c.h.b16 %v152
    %v1096 = vunpack.c.l.b16 %v153
    %v1097 = vunpack.c.h.b16 %v153
    %v1098 = vunpack.c.l.b16 %v154
    %v1099 = vunpack.c.h.b16 %v154
    %v1100 = vunpack.c.l.b16 %v155
    %v1101 = vunpack.c.h.b16 %v155
    %v1102 = vunpack.c.l.b16 %v156
    %v1103 = vunpack.c.h.b16 %v156
    %v1104 = vunpack.c.l.b16 %v157
    %v1105 = vunpack.c.h.b16 %v157
    %v1106 = vunpack.c.l.b16 %v158
    %v1107 = vunpack.c.h.b16 %v158
    %v1108 = vunpack.c.l.b16 %v159
    %v1109 = vunpack.c.h.b16 %v159
    %v1110 = vunpack.c.l.b16 %v160
    %v1111 = vunpack.c.h.b16 %v160
    %v1112 = vunpack.c.l.b16 %v161
    %v1113 = vunpack.c.h.b16 %v161
    %v1114 = vunpack.c.l.b16 %v162
    %v1115 = vunpack.c.h.b16 %v162
    %v1116 = vunpack.c.l.b16 %v163
    %v1117 = vunpack.c.h.b16 %v163
    %v1118 = vunpack.c.l.b16 %v164
    %v1119 = vunpack.c.h.b16 %v164
    %v1120 = vunpack.c.l.b16 %v165
    %v1121 = vunpack.c.h.b16 %v165
    %v1122 = vunpack.c.l.b16 %v166
    %v1123 = vunpack.c.h.b16 %v166
    %v1124 = vunpack.c.l.b16 %v167
    %v1125 = vunpack.c.h.b16 %v167
    %v1126 = vunpack.c.l.b16 %v168
    %v1127 = vunpack.c.h.b16 %v168
    %v1128 = vunpack.c.l.b16 %v169
    %v1129 = vunpack.c.h.b16 %v169
    %v1130 = vunpack.c.l.b16 %v170
    %v1131 = vunpack.c.h.b16 %v170
    %v1132 = vunpack.c.l.b16 %v171
    %v1133 = vunpack.c.h.b16 %v171
    %v1134 = vunpack.c.l.b16 %v172
    %v1135 = vunpack.c.h.b16 %v172
    %v1136 = vunpack.c.l.b16 %v173
    %v1137 = vunpack.c.h.b16 %v173
    %v1138 = vunpack.c.l.b16 %v174
    %v1139 = vunpack.c.h.b16 %v174
    %v1140 = vunpack.c.l.b16 %v175
    %v1141 = vunpack.c.h.b16 %v175
    %v1142 = vunpack.c.l.b16 %v176
    %v1143 = vunpack.c.h.b16 %v176
    %v1144 = vunpack.c.l.b16 %v177
    %v1145 = vunpack.c.h.b16 %v177
    %v1146 = vunpack.c.l.b16 %v178
    %v1147 = vunpack.c.h.b16 %v178
    %v1148 = vunpack.c.l.b16 %v179
    %v1149 = vunpack.c.h.b16 %v179
    %v1150 = vunpack.c.l.b16 %v180
    %v1151 = vunpack.c.h.b16 %v180
    %v1152 = vunpack.c.l.b16 %v181
    %v1153 = vunpack.c.h.b16 %v181
    %v1154 = vunpack.c.l.b16 %v182
    %v1155 = vunpack.c.h.b16 %v182
    %v1156 = vunpack.c.l.b16 %v183
    %v1157 = vunpack.c.h.b16 %v183
    %v1158 = vunpack.c.l.b16 %v184
    %v1159 = vunpack.c.h.b16 %v184
    %v1160 = vunpack.c.l.b16 %v185
    %v1161 = vunpack.c.h.b16 %v185
    %v1162 = vunpack.c.l.b16 %v186
    %v1163 = vunpack.c.h.b16 %v186
    %v1164 = vunpack.c.l.b16 %v187
    %v1165 = vunpack.c.h.b16 %v187
    %v1166 = vunpack.c.l.b16 %v188
    %v1167 = vunpack.c.h.b16 %v188
    %v1168 = vunpack.c.l.b16 %v189
    %v1169 = vunpack.c.h.b16 %v189
    %v1170 = vunpack.c.l.b16 %v190
    %v1171 = vunpack.c.h.b16 %v190
    %v1172 = vunpack.c.l.b16 %v191
    %v1173 = vunpack.c.h.b16 %v191
    %v1174 = vunpack.c.l.b16 %v192
    %v1175 = vunpack.c.h.b16 %v192
    %v1176 = vunpack.c.l.b16 %v193
    %v1177 = vunpack.c.h.b16 %v193
    %v1178 = vunpack.c.l.b16 %v194
    %v1179 = vunpack.c.h.b16 %v194
    %v1180 = vunpack.c.l.b16 %v195
    %v1181 = vunpack.c.h.b16 %v195
    %v1182 = vunpack.c.l.b16 %v196
    %v1183 = vunpack.c.h.b16 %v196
    %v1184 = vunpack.c.l.b16 %v197
    %v1185 = vunpack.c.h.b16 %v197
    %v1186 = vunpack.c.l.b16 %v198
    %v1187 = vunpack.c.h.b16 %v198
    %v1188 = vunpack.c.l.b16 %v199
    %v1189 = vunpack.c.h.b16 %v199
    %v1190 = vunpack.c.l.b16 %v200
    %v1191 = vunpack.c.h.b16 %v200
    %v1192 = vunpack.c.l.b16 %v201
    %v1193 = vunpack.c.h.b16 %v201
    %v1194 = vunpack.c.l.b16 %v202
    %v1195 = vunpack.c.h.b16 %v202
    %v1196 = vunpack.c.l.b16 %v203
    %v1197 = vunpack.c.h.b16 %v203
    %v1198 = vunpack.c.l.b16 %v204
    %v1199 = vunpack.c.h.b16 %v204
    %v1200 = vunpack.c.l.b16 %v205
    %v1201 = vunpack.c.h.b16 %v205
    %v1202 = vunpack.c.l.b16 %v206
    %v1203 = vunpack.c.h.b16 %v206
    %v1204 = vunpack.c.l.b16 %v207
    %v1205 = vunpack.c.h.b16 %v207
    %v1206 = vunpack.c.l.b16 %v208
    %v1207 = vunpack.c.h.b16 %v208
    %v1208 = vunpack.c.l.b16 %v209
    %v1209 = vunpack.c.h.b16 %v209
    %v1210 = vunpack.c.l.b16 %v210
    %v1211 = vunpack.c.h.b16 %v210
    %v1212 = vunpack.c.l.b16 %v211
    %v1213 = vunpack.c.h.b16 %v211
    %v1214 = vunpack.c.l.b16 %v212
    %v1215 = vunpack.c.h.b16 %v212
    %v1216 = vunpack.c.l.b16 %v213
    %v1217 = vunpack.c.h.b16 %v213
    %v1218 = vunpack.c.l.b16 %v214
    %v1219 = vunpack.c.h.b16 %v214
    %v1220 = vunpack.c.l.b16 %v215
    %v1221 = vunpack.c.h.b16 %v215
    %v1222 = vunpack.c.l.b16 %v216
    %v1223 = vunpack.c.h.b16 %v216
    %v1224 = vunpack.c.l.b16 %v217
    %v1225 = vunpack.c.h.b16 %v217
    %v1226 = vunpack.c.l.b16 %v218
    %v1227 = vunpack.c.h.b16 %v218
    %v1228 = vunpack.c.l.b16 %v219
    %v1229 = vunpack.c.h.b16 %v219
    %v1230 = vunpack.c.l.b16 %v220
    %v1231 = vunpack.c.h.b16 %v220
    %v1232 = vunpack.c.l.b16 %v221
    %v1233 = vunpack.c.h.b16 %v221
    %v1234 = vunpack.c.l.b16 %v222
    %v1235 = vunpack.c.h.b16 %v222
    %v1236 = vunpack.c.l.b16 %v223
    %v1237 = vunpack.c.h.b16 %v223
    %v1238 = vunpack.c.l.b16 %v224
    %v1239 = vunpack.c.h.b16 %v224
    %v1240 = vunpack.c.l.b16 %v225
    %v1241 = vunpack.c.h.b16 %v225
    %v1242 = vunpack.c.l.b16 %v226
    %v1243 = vunpack.c.h.b16 %v226
    %v1244 = vunpack.c.l.b16 %v227
    %v1245 = vunpack.c.h.b16 %v227
    %v1246 = vunpack.c.l.b16 %v228
    %v1247 = vunpack.c.h.b16 %v228
    %v1248 = vunpack.c.l.b16 %v229
    %v1249 = vunpack.c.h.b16 %v229
    %v1250 = vunpack.c.l.b16 %v230
    %v1251 = vunpack.c.h.b16 %v230
    %v1252 = vunpack.c.l.b16 %v231
    %v1253 = vunpack.c.h.b16 %v231
    %v1254 = vunpack.c.l.b16 %v232
    %v1255 = vunpack.c.h.b16 %v232
    %v1256 = vunpack.c.l.b16 %v233
    %v1257 = vunpack.c.h.b16 %v233
    %v1258 = vunpack.c.l.b16 %v234
    %v1259 = vunpack.c.h.b16 %v234
    %v1260 = vunpack.c.l.b16 %v235
    %v1261 = vunpack.c.h.b16 %v235
    %v1262 = vunpack.c.l.b16 %v236
    %v1263 = vunpack.c.h.b16 %v236
    %v1264 = vunpack.c.l.b16 %v237
    %v1265 = vunpack.c.h.b16 %v237
    %v1266 = vunpack.c.l.b16 %v238
    %v1267 = vunpack.c.h.b16 %v238
    %v1268 = vunpack.c.l.b16 %v239
    %v1269 = vunpack.c.h.b16 %v239
    %v1270 = vunpack.c.l.b16 %v240
    %v1271 = vunpack.c.h.b16 %v240
    %v1272 = vunpack.c.l.b16 %v241
    %v1273 = vunpack.c.h.b16 %v241
    %v1274 = vunpack.c.l.b16 %v242
    %v1275 = vunpack.c.h.b16 %v242
    %v1276 = vunpack.c.l.b16 %v243
    %v1277 = vunpack.c.h.b16 %v243
    %v1278 = vunpack.c.l.b16 %v244
    %v1279 = vunpack.c.h.b16 %v244
    %v1280 = vunpack.c.l.b16 %v245
    %v1281 = vunpack.c.h.b16 %v245
    %v1282 = vunpack.c.l.b16 %v246
    %v1283 = vunpack.c.h.b16 %v246
    %v1284 = vunpack.c.l.b16 %v247
    %v1285 = vunpack.c.h.b16 %v247
    %v1286 = vunpack.c.l.b16 %v248
    %v1287 = vunpack.c.h.b16 %v248
    %v1288 = vunpack.c.l.b16 %v249
    %v1289 = vunpack.c.h.b16 %v249
    %v1290 = vunpack.c.l.b16 %v250
    %v1291 = vunpack.c.h.b16 %v250
    %v1292 = vunpack.c.l.b16 %v251
    %v1293 = vunpack.c.h.b16 %v251
    %v1294 = vunpack.c.l.b16 %v252
    %v1295 = vunpack.c.h.b16 %v252
    %v1296 = vunpack.c.l.b16 %v253
    %v1297 = vunpack.c.h.b16 %v253
    %v1298 = vunpack.c.l.b16 %v254
    %v1299 = vunpack.c.h.b16 %v254
    %v1300 = vunpack.c.l.b16 %v255
    %v1301 = vunpack.c.h.b16 %v255
    %v1302 = vunpack.c.l.b16 %v256
    %v1303 = vunpack.c.h.b16 %v256
    %v1304 = vunpack.c.l.b16 %v257
    %v1305 = vunpack.c.h.b16 %v257
    %v1306 = vunpack.c.l.b16 %v258
    %v1307 = vunpack.c.h.b16 %v258
    %v1308 = vunpack.c.l.b16 %v259
    %v1309 = vunpack.c.h.b16 %v259
    %v1310 = vunpack.c.l.b16 %v260
    %v1311 = vunpack.c.h.b16 %v260
    %v1312 = vunpack.c.l.b16 %v261
    %v1313 = vunpack.c.h.b16 %v261
    %v1314 = vunpack.c.l.b16 %v262
    %v1315 = vunpack.c.h.b16 %v262
    %v1316 = vunpack.c.l.b16 %v263
    %v1317 = vunpack.c.h.b16 %v263
    %v1318 = vunpack.c.l.b16 %v264
    %v1319 = vunpack.c.h.b16 %v264
    %v1320 = vunpack.c.l.b16 %v265
    %v1321 = vunpack.c.h.b16 %v265
    %v1322 = vunpack.c.l.b16 %v266
    %v1323 = vunpack.c.h.b16 %v266
    %v1324 = vunpack.c.l.b16 %v267
    %v1325 = vunpack.c.h.b16 %v267
    %v1326 = vunpack.c.l.b16 %v268
    %v1327 = vunpack.c.h.b16 %v268
    %v1328 = vunpack.c.l.b16 %v269
    %v1329 = vunpack.c.h.b16 %v269
    %v1330 = vunpack.c.l.b16 %v270
    %v1331 = vunpack.c.h.b16 %v270
    %v1332 = vunpack.c.l.b16 %v271
    %v1333 = vunpack.c.h.b16 %v271
    %v1334 = vunpack.c.l.b16 %v272
    %v1335 = vunpack.c.h.b16 %v272
    %v1336 = vunpack.c.l.b16 %v273
    %v1337 = vunpack.c.h.b16 %v273
    %v1338 = vunpack.c.l.b16 %v274
    %v1339 = vunpack.c.h.b16 %v274
    %v1340 = vunpack.c.l.b16 %v275
    %v1341 = vunpack.c.h.b16 %v275
    %v1342 = vunpack.c.l.b16 %v276
    %v1343 = vunpack.c.h.b16 %v276
    %v1344 = vunpack.c.l.b16 %v277
    %v1345 = vunpack.c.h.b16 %v277
    %v1346 = vunpack.c.l.b16 %v278
    %v1347 = vunpack.c.h.b16 %v278
    %v1348 = vunpack.c.l.b16 %v279
    %v1349 = vunpack.c.h.b16 %v279
    %v1350 = vunpack.c.l.b16 %v280
    %v1351 = vunpack.c.h.b16 %v280
    %v1352 = vunpack.c.l.b16 %v281
    %v1353 = vunpack.c.h.b16 %v281
    %v1354 = vunpack.c.l.b16 %v282
    %v1355 = vunpack.c.h.b16 %v282
    %v1356 = vunpack.c.l.b16 %v283
    %v1357 = vunpack.c.h.b16 %v283
    %v1358 = vunpack.c.l.b16 %v284
    %v1359 = vunpack.c.h.b16 %v284
    %v1360 = vunpack.c.l.b16 %v285
    %v1361 = vunpack.c.h.b16 %v285
    %v1362 = vunpack.c.l.b16 %v286
    %v1363 = vunpack.c.h.b16 %v286
    %v1364 = vunpack.c.l.b16 %v287
    %v1365 = vunpack.c.h.b16 %v287
    %v1366 = vunpack.c.l.b16 %v288
    %v1367 = vunpack.c.h.b16 %v288
    %v1368 = vunpack.c.l.b16 %v289
    %v1369 = vunpack.c.h.b16 %v289
    %v1370 = vunpack.c.l.b16 %v290
    %v1371 = vunpack.c.h.b16 %v290
    %v1372 = vunpack.c.l.b16 %v291
    %v1373 = vunpack.c.h.b16 %v291
    %v1374 = vunpack.c.l.b16 %v292
    %v1375 = vunpack.c.h.b16 %v292
    %v1376 = vunpack.c.l.b16 %v293
    %v1377 = vunpack.c.h.b16 %v293
    %v1378 = vunpack.c.l.b16 %v294
    %v1379 = vunpack.c.h.b16 %v294
    %v1380 = vunpack.c.l.b16 %v295
    %v1381 = vunpack.c.h.b16 %v295
    %v1382 = vunpack.c.l.b16 %v296
    %v1383 = vunpack.c.h.b16 %v296
    %v1384 = vunpack.c.l.b16 %v297
    %v1385 = vunpack.c.h.b16 %v297
    %v1386 = vunpack.c.l.b16 %v298
    %v1387 = vunpack.c.h.b16 %v298
    %v1388 = vunpack.c.l.b16 %v299
    %v1389 = vunpack.c.h.b16 %v299
    %v1390 = vunpack.c.l.b16 %v300
    %v1391 = vunpack.c.h.b16 %v300
    %v1392 = vunpack.c.l.b16 %v301
    %v1393 = vunpack.c.h.b16 %v301
    %v1394 = vunpack.c.l.b16 %v302
    %v1395 = vunpack.c.h.b16 %v302
    %v1396 = vunpack.c.l.b16 %v303
    %v1397 = vunpack.c.h.b16 %v303
    %v1398 = vunpack.c.l.b16 %v304
    %v1399 = vunpack.c.h.b16 %v304
    %v1400 = vunpack.c.l.b16 %v305
    %v1401 = vunpack.c.h.b16 %v305
    %v1402 = vunpack.c.l.b16 %v306
    %v1403 = vunpack.c.h.b16 %v306
    %v1404 = vunpack.c.l.b16 %v307
    %v1405 = vunpack.c.h.b16 %v307
    %v1406 = vunpack.c.l.b16 %v308
    %v1407 = vunpack.c.h.b16 %v308
    %v1408 = vunpack.c.l.b16 %v309
    %v1409 = vunpack.c.h.b16 %v309
    %v1410 = vunpack.c.l.b16 %v310
    %v1411 = vunpack.c.h.b16 %v310
    %v1412 = vunpack.c.l.b16 %v311
    %v1413 = vunpack.c.h.b16 %v311
    %v1414 = vunpack.c.l.b16 %v312
    %v1415 = vunpack.c.h.b16 %v312
    %v1416 = vunpack.c.l.b16 %v313
    %v1417 = vunpack.c.h.b16 %v313
    %v1418 = vunpack.c.l.b16 %v314
    %v1419 = vunpack.c.h.b16 %v314
    %v1420 = vunpack.c.l.b16 %v315
    %v1421 = vunpack.c.h.b16 %v315
    %v1422 = vunpack.c.l.b16 %v316
    %v1423 = vunpack.c.h.b16 %v316
    %v1424 = vunpack.c.l.b16 %v317
    %v1425 = vunpack.c.h.b16 %v317
    %v1426 = vunpack.c.l.b16 %v318
    %v1427 = vunpack.c.h.b16 %v318
    %v1428 = vunpack.c.l.b16 %v319
    %v1429 = vunpack.c.h.b16 %v319
    %v1430 = vunpack.c.l.b16 %v320
    %v1431 = vunpack.c.h.b16 %v320
    %v1432 = vunpack.c.l.b16 %v321
    %v1433 = vunpack.c.h.b16 %v321
    %v1434 = vunpack.c.l.b16 %v322
    %v1435 = vunpack.c.h.b16 %v322
    %v1436 = vunpack.c.l.b16 %v323
    %v1437 = vunpack.c.h.b16 %v323
    %v1438 = vunpack.c.l.b16 %v324
    %v1439 = vunpack.c.h.b16 %v324
    %v1440 = vunpack.c.l.b16 %v325
    %v1441 = vunpack.c.h.b16 %v325
    %v1442 = vunpack.c.l.b16 %v326
    %v1443 = vunpack.c.h.b16 %v326
    %v1444 = vunpack.c.l.b16 %v327
    %v1445 = vunpack.c.h.b16 %v327
    %v1446 = vunpack.c.l.b16 %v328
    %v1447 = vunpack.c.h.b16 %v328
    %v1448 = vunpack.c.l.b16 %v329
    %v1449 = vunpack.c.h.b16 %v329
    %v1450 = vunpack.c.l.b16 %v330
    %v1451 = vunpack.c.h.b16 %v330
    %v1452 = vunpack.c.l.b16 %v331
    %v1453 = vunpack.c.h.b16 %v331
    %v1454 = vunpack.c.l.b16 %v332
    %v1455 = vunpack.c.h.b16 %v332
    %v1456 = vunpack.c.l.b16 %v333
    %v1457 = vunpack.c.h.b16 %v333
    %v1458 = vunpack.c.l.b16 %v334
    %v1459 = vunpack.c.h.b16 %v334
    %v1460 = vunpack.c.l.b16 %v335
    %v1461 = vunpack.c.h.b16 %v335
    %v1462 = vunpack.c.l.b16 %v336
    %v1463 = vunpack.c.h.b16 %v336
    %v1464 = vunpack.c.l.b16 %v337
    %v1465 = vunpack.c.h.b16 %v337
    %v1466 = vunpack.c.l.b16 %v338
    %v1467 = vunpack.c.h.b16 %v338
    %v1468 = vunpack.c.l.b16 %v339
    %v1469 = vunpack.c.h.b16 %v339
    %v1470 = vunpack.c.l.b16 %v340
    %v1471 = vunpack.c.h.b16 %v340
    %v1472 = vunpack.c.l.b16 %v341
    %v1473 = vunpack.c.h.b16 %v341
    %v1474 = vunpack.c.l.b16 %v342
    %v1475 = vunpack.c.h.b16 %v342
    %v1476 = vunpack.c.l.b16 %v343
    %v1477 = vunpack.c.h.b16 %v343
    %v1478 = vunpack.c.l.b16 %v344
    %v1479 = vunpack.c.h.b16 %v344
    %v1480 = vunpack.c.l.b16 %v345
    %v1481 = vunpack.c.h.b16 %v345
    %v1482 = vunpack.c.l.b16 %v346
    %v1483 = vunpack.c.h.b16 %v346
    %v1484 = vunpack.c.l.b16 %v347
    %v1485 = vunpack.c.h.b16 %v347
    %v1486 = vunpack.c.l.b16 %v348
    %v1487 = vunpack.c.h.b16 %v348
    %v1488 = vunpack.c.l.b16 %v349
    %v1489 = vunpack.c.h.b16 %v349
    %v1490 = vunpack.c.l.b16 %v350
    %v1491 = vunpack.c.h.b16 %v350
    %v1492 = vunpack.c.l.b16 %v351
    %v1493 = vunpack.c.h.b16 %v351
    %v1494 = vunpack.c.l.b16 %v352
    %v1495 = vunpack.c.h.b16 %v352
    %v1496 = vunpack.c.l.b16 %v353
    %v1497 = vunpack.c.h.b16 %v353
    %v1498 = vunpack.c.l.b16 %v354
    %v1499 = vunpack.c.h.b16 %v354
    %v1500 = vunpack.c.l.b16 %v355
    %v1501 = vunpack.c.h.b16 %v355
    %v1502 = vunpack.c.l.b16 %v356
    %v1503 = vunpack.c.h.b16 %v356
    %v1504 = vunpack.c.l.b16 %v357
    %v1505 = vunpack.c.h.b16 %v357
    %v1506 = vunpack.c.l.b16 %v358
    %v1507 = vunpack.c.h.b16 %v358
    %v1508 = vunpack.c.l.b16 %v359
    %v1509 = vunpack.c.h.b16 %v359
    %v1510 = vunpack.c.l.b16 %v360
    %v1511 = vunpack.c.h.b16 %v360
    %v1512 = vunpack.c.l.b16 %v361
    %v1513 = vunpack.c.h.b16 %v361
    %v1514 = vunpack.c.l.b16 %v362
    %v1515 = vunpack.c.h.b16 %v362
    %v1516 = vunpack.c.l.b16 %v363
    %v1517 = vunpack.c.h.b16 %v363
    %v1518 = vunpack.c.l.b16 %v364
    %v1519 = vunpack.c.h.b16 %v364
    %v1520 = vunpack.c.l.b16 %v365
    %v1521 = vunpack.c.h.b16 %v365
    %v1522 = vunpack.c.l.b16 %v366
    %v1523 = vunpack.c.h.b16 %v366
    %v1524 = vunpack.c.l.b16 %v367
    %v1525 = vunpack.c.h.b16 %v367
    %v1526 = vunpack.c.l.b16 %v368
    %v1527 = vunpack.c.h.b16 %v368
    %v1528 = vunpack.c.l.b16 %v369
    %v1529 = vunpack.c.h.b16 %v369
    %v1530 = vunpack.c.l.b16 %v370
    %v1531 = vunpack.c.h.b16 %v370
    %v1532 = vunpack.c.l.b16 %v371
    %v1533 = vunpack.c.h.b16 %v371
    %v1534 = vunpack.c.l.b16 %v372
    %v1535 = vunpack.c.h.b16 %v372
    %v1536 = vunpack.c.l.b16 %v373
    %v1537 = vunpack.c.h.b16 %v373
    %v1538 = vunpack.c.l.b16 %v374
    %v1539 = vunpack.c.h.b16 %v374
    %v1540 = vunpack.c.l.b16 %v375
    %v1541 = vunpack.c.h.b16 %v375
    %v1542 = vunpack.c.l.b16 %v376
    %v1543 = vunpack.c.h.b16 %v376
    %v1544 = vunpack.c.l.b16 %v377
    %v1545 = vunpack.c.h.b16 %v377
    %v1546 = vunpack.c.l.b16 %v378
    %v1547 = vunpack.c.h.b16 %v378
    %v1548 = vunpack.c.l.b16 %v379
    %v1549 = vunpack.c.h.b16 %v379
    %v1550 = vunpack.c.l.b16 %v380
    %v1551 = vunpack.c.h.b16 %v380
    %v1552 = vunpack.c.l.b16 %v381
    %v1553 = vunpack.c.h.b16 %v381
    %v1554 = vunpack.c.l.b16 %v382
    %v1555 = vunpack.c.h.b16 %v382
    %v1556 = vunpack.c.l.b16 %v383
    %v1557 = vunpack.c.h.b16 %v383
    %v1558 = vunpack.c.l.b16 %v384
    %v1559 = vunpack.c.h.b16 %v384
    %v1560 = vunpack.c.l.b16 %v385
    %v1561 = vunpack.c.h.b16 %v385
    %v1562 = vunpack.c.l.b16 %v386
    %v1563 = vunpack.c.h.b16 %v386
    %v1564 = vunpack.c.l.b16 %v387
    %v1565 = vunpack.c.h.b16 %v387
    %v1566 = vunpack.c.l.b16 %v388
    %v1567 = vunpack.c.h.b16 %v388
    %v1568 = vunpack.c.l.b16 %v389
    %v1569 = vunpack.c.h.b16 %v389
    %v1570 = vunpack.c.l.b16 %v390
    %v1571 = vunpack.c.h.b16 %v390
    %v1572 = vunpack.c.l.b16 %v391
    %v1573 = vunpack.c.h.b16 %v391
    %v1574 = vunpack.c.l.b16 %v392
    %v1575 = vunpack.c.h.b16 %v392
    %v1576 = vunpack.c.l.b16 %v393
    %v1577 = vunpack.c.h.b16 %v393
    %v1578 = vunpack.c.l.b16 %v394
    %v1579 = vunpack.c.h.b16 %v394
    %v1580 = vunpack.c.l.b16 %v395
    %v1581 = vunpack.c.h.b16 %v395
    %v1582 = vunpack.c.l.b16 %v396
    %v1583 = vunpack.c.h.b16 %v396
    %v1584 = vunpack.c.l.b16 %v397
    %v1585 = vunpack.c.h.b16 %v397
    %v1586 = vunpack.c.l.b16 %v398
    %v1587 = vunpack.c.h.b16 %v398
    %v1588 = vunpack.c.l.b16 %v399
    %v1589 = vunpack.c.h.b16 %v399
    %v1590 = vunpack.c.l.b16 %v400
    %v1591 = vunpack.c.h.b16 %v400
    %v1592 = vunpack.c.l.b16 %v401
    %v1593 = vunpack.c.h.b16 %v401
    %v1594 = vunpack.c.l.b16 %v402
    %v1595 = vunpack.c.h.b16 %v402
    %v1596 = vunpack.c.l.b16 %v403
    %v1597 = vunpack.c.h.b16 %v403
    %v1598 = vunpack.c.l.b16 %v404
    %v1599 = vunpack.c.h.b16 %v404
    %v1600 = vunpack.c.l.b16 %v405
    %v1601 = vunpack.c.h.b16 %v405
    %v1602 = vunpack.c.l.b16 %v406
    %v1603 = vunpack.c.h.b16 %v406
    %v1604 = vunpack.c.l.b16 %v407
    %v1605 = vunpack.c.h.b16 %v407
    %v1606 = vunpack.c.l.b16 %v408
    %v1607 = vunpack.c.h.b16 %v408
    %v1608 = vunpack.c.l.b16 %v409
    %v1609 = vunpack.c.h.b16 %v409
    %v1610 = vunpack.c.l.b16 %v410
    %v1611 = vunpack.c.h.b16 %v410
    %v1612 = vunpack.c.l.b16 %v411
    %v1613 = vunpack.c.h.b16 %v411
    %v1614 = vunpack.c.l.b16 %v412
    %v1615 = vunpack.c.h.b16 %v412
    %v1616 = vunpack.c.l.b16 %v413
    %v1617 = vunpack.c.h.b16 %v413
    %v1618 = vunpack.c.l.b16 %v414
    %v1619 = vunpack.c.h.b16 %v414
    %v1620 = vunpack.c.l.b16 %v415
    %v1621 = vunpack.c.h.b16 %v415
    %v1622 = vunpack.c.l.b16 %v416
    %v1623 = vunpack.c.h.b16 %v416
    %v1624 = vunpack.c.l.b16 %v417
    %v1625 = vunpack.c.h.b16 %v417
    %v1626 = vunpack.c.l.b16 %v418
    %v1627 = vunpack.c.h.b16 %v418
    %v1628 = vunpack.c.l.b16 %v419
    %v1629 = vunpack.c.h.b16 %v419
    %v1630 = vunpack.c.l.b16 %v420
    %v1631 = vunpack.c.h.b16 %v420
    %v1632 = vunpack.c.l.b16 %v421
    %v1633 = vunpack.c.h.b16 %v421
    %v1634 = vunpack.c.l.b16 %v422
    %v1635 = vunpack.c.h.b16 %v422
    %v1636 = vunpack.c.l.b16 %v423
    %v1637 = vunpack.c.h.b16 %v423
    %v1638 = vunpack.c.l.b16 %v424
    %v1639 = vunpack.c.h.b16 %v424
    %v1640 = vunpack.c.l.b16 %v425
    %v1641 = vunpack.c.h.b16 %v425
    %v1642 = vunpack.c.l.b16 %v426
    %v1643 = vunpack.c.h.b16 %v426
    %v1644 = vunpack.c.l.b16 %v427
    %v1645 = vunpack.c.h.b16 %v427
    %v1646 = vunpack.c.l.b16 %v428
    %v1647 = vunpack.c.h.b16 %v428
    %v1648 = vunpack.c.l.b16 %v429
    %v1649 = vunpack.c.h.b16 %v429
    %v1650 = vunpack.c.l.b16 %v430
    %v1651 = vunpack.c.h.b16 %v430
    %v1652 = vunpack.c.l.b16 %v431
    %v1653 = vunpack.c.h.b16 %v431
    %v1654 = vunpack.c.l.b16 %v432
    %v1655 = vunpack.c.h.b16 %v432
    %v1656 = vunpack.c.l.b16 %v433
    %v1657 = vunpack.c.h.b16 %v433
    %v1658 = vunpack.c.l.b16 %v434
    %v1659 = vunpack.c.h.b16 %v434
    %v1660 = vunpack.c.l.b16 %v435
    %v1661 = vunpack.c.h.b16 %v435
    %v1662 = vunpack.c.l.b16 %v436
    %v1663 = vunpack.c.h.b16 %v436
    %v1664 = vunpack.c.l.b16 %v437
    %v1665 = vunpack.c.h.b16 %v437
    %v1666 = vunpack.c.l.b16 %v438
    %v1667 = vunpack.c.h.b16 %v438
    %v1668 = vunpack.c.l.b16 %v439
    %v1669 = vunpack.c.h.b16 %v439
    %v1670 = vunpack.c.l.b16 %v440
    %v1671 = vunpack.c.h.b16 %v440
    %v1672 = vunpack.c.l.b16 %v441
    %v1673 = vunpack.c.h.b16 %v441
    %v1674 = vunpack.c.l.b16 %v442
    %v1675 = vunpack.c.h.b16 %v442
    %v1676 = vunpack.c.l.b16 %v443
    %v1677 = vunpack.c.h.b16 %v443
    %v1678 = vunpack.c.l.b16 %v444
    %v1679 = vunpack.c.h.b16 %v444
    %v1680 = vunpack.c.l.b16 %v445
    %v1681 = vunpack.c.h.b16 %v445
    %v1682 = vunpack.c.l.b16 %v446
    %v1683 = vunpack.c.h.b16 %v446
    %v1684 = vunpack.c.l.b16 %v447
    %v1685 = vunpack.c.h.b16 %v447
    %v1686 = vunpack.c.l.b16 %v448
    %v1687 = vunpack.c.h.b16 %v448
    %v1688 = vunpack.c.l.b16 %v449
    %v1689 = vunpack.c.h.b16 %v449
    %v1690 = vunpack.c.l.b16 %v450
    %v1691 = vunpack.c.h.b16 %v450
    %v1692 = vunpack.c.l.b16 %v451
    %v1693 = vunpack.c.h.b16 %v451
    %v1694 = vunpack.c.l.b16 %v452
    %v1695 = vunpack.c.h.b16 %v452
    %v1696 = vunpack.c.l.b16 %v453
    %v1697 = vunpack.c.h.b16 %v453
    %v1698 = vunpack.c.l.b16 %v454
    %v1699 = vunpack.c.h.b16 %v454
    %v1700 = vunpack.c.l.b16 %v455
    %v1701 = vunpack.c.h.b16 %v455
    %v1702 = vunpack.c.l.b16 %v456
    %v1703 = vunpack.c.h.b16 %v456
    %v1704 = vunpack.c.l.b16 %v457
    %v1705 = vunpack.c.h.b16 %v457
    %v1706 = vunpack.c.l.b16 %v458
    %v1707 = vunpack.c.h.b16 %v458
    %v1708 = vunpack.c.l.b16 %v459
    %v1709 = vunpack.c.h.b16 %v459
    %v1710 = vunpack.c.l.b16 %v460
    %v1711 = vunpack.c.h.b16 %v460
    %v1712 = vunpack.c.l.b16 %v461
    %v1713 = vunpack.c.h.b16 %v461
    %v1714 = vunpack.c.l.b16 %v462
    %v1715 = vunpack.c.h.b16 %v462
    %v1716 = vunpack.c.l.b16 %v463
    %v1717 = vunpack.c.h.b16 %v463
    %v1718 = vunpack.c.l.b16 %v464
    %v1719 = vunpack.c.h.b16 %v464
    %v1720 = vunpack.c.l.b16 %v465
    %v1721 = vunpack.c.h.b16 %v465
    %v1722 = vunpack.c.l.b16 %v466
    %v1723 = vunpack.c.h.b16 %v466
    %v1724 = vunpack.c.l.b16 %v467
    %v1725 = vunpack.c.h.b16 %v467
    %v1726 = vunpack.c.l.b16 %v468
    %v1727 = vunpack.c.h.b16 %v468
    %v1728 = vunpack.c.l.b16 %v469
    %v1729 = vunpack.c.h.b16 %v469
    %v1730 = vunpack.c.l.b16 %v470
    %v1731 = vunpack.c.h.b16 %v470
    %v1732 = vunpack.c.l.b16 %v471
    %v1733 = vunpack.c.h.b16 %v471
    %v1734 = vunpack.c.l.b16 %v472
    %v1735 = vunpack.c.h.b16 %v472
    %v1736 = vunpack.c.l.b16 %v473
    %v1737 = vunpack.c.h.b16 %v473
    %v1738 = vunpack.c.l.b16 %v474
    %v1739 = vunpack.c.h.b16 %v474
    %v1740 = vunpack.c.l.b16 %v475
    %v1741 = vunpack.c.h.b16 %v475
    %v1742 = vunpack.c.l.b16 %v476
    %v1743 = vunpack.c.h.b16 %v476
    %v1744 = vunpack.c.l.b16 %v477
    %v1745 = vunpack.c.h.b16 %v477
    %v1746 = vunpack.c.l.b16 %v478
    %v1747 = vunpack.c.h.b16 %v478
    %v1748 = vunpack.c.l.b16 %v479
    %v1749 = vunpack.c.h.b16 %v479
    %v1750 = vunpack.c.l.b16 %v480
    %v1751 = vunpack.c.h.b16 %v480
    %v1752 = vunpack.c.l.b16 %v481
    %v1753 = vunpack.c.h.b16 %v481
    %v1754 = vunpack.c.l.b16 %v482
    %v1755 = vunpack.c.h.b16 %v482
    %v1756 = vunpack.c.l.b16 %v483
    %v1757 = vunpack.c.h.b16 %v483
    %v1758 = vunpack.c.l.b16 %v484
    %v1759 = vunpack.c.h.b16 %v484
    %v1760 = vunpack.c.l.b16 %v485
    %v1761 = vunpack.c.h.b16 %v485
    %v1762 = vunpack.c.l.b16 %v486
    %v1763 = vunpack.c.h.b16 %v486
    %v1764 = vunpack.c.l.b16 %v487
    %v1765 = vunpack.c.h.b16 %v487
    %v1766 = vunpack.c.l.b16 %v488
    %v1767 = vunpack.c.h.b16 %v488
    %v1768 = vunpack.c.l.b16 %v489
    %v1769 = vunpack.c.h.b16 %v489
    %v1770 = vunpack.c.l.b16 %v490
    %v1771 = vunpack.c.h.b16 %v490
    %v1772 = vunpack.c.l.b16 %v491
    %v1773 = vunpack.c.h.b16 %v491
    %v1774 = vunpack.c.l.b16 %v492
    %v1775 = vunpack.c.h.b16 %v492
    %v1776 = vunpack.c.l.b16 %v493
    %v1777 = vunpack.c.h.b16 %v493
    %v1778 = vunpack.c.l.b16 %v494
    %v1779 = vunpack.c.h.b16 %v494
    %v1780 = vunpack.c.l.b16 %v495
    %v1781 = vunpack.c.h.b16 %v495
    %v1782 = vunpack.c.l.b16 %v496
    %v1783 = vunpack.c.h.b16 %v496
    %v1784 = vunpack.c.l.b16 %v497
    %v1785 = vunpack.c.h.b16 %v497
    %v1786 = vunpack.c.l.b16 %v498
    %v1787 = vunpack.c.h.b16 %v498
    %v1788 = vunpack.c.l.b16 %v499
    %v1789 = vunpack.c.h.b16 %v499
    %v1790 = vunpack.c.l.b16 %v500
    %v1791 = vunpack.c.h.b16 %v500
    %v1792 = vunpack.c.l.b16 %v501
    %v1793 = vunpack.c.h.b16 %v501
    %v1794 = vunpack.c.l.b16 %v502
    %v1795 = vunpack.c.h.b16 %v502
    %v1796 = vunpack.c.l.b16 %v503
    %v1797 = vunpack.c.h.b16 %v503
    %v1798 = vunpack.c.l.b16 %v504
    %v1799 = vunpack.c.h.b16 %v504
    %v1800 = vunpack.c.l.b16 %v505
    %v1801 = vunpack.c.h.b16 %v505
    %v1802 = vunpack.c.l.b16 %v506
    %v1803 = vunpack.c.h.b16 %v506
    %v1804 = vunpack.c.l.b16 %v507
    %v1805 = vunpack.c.h.b16 %v507
    %v1806 = vunpack.c.l.b16 %v508
    %v1807 = vunpack.c.h.b16 %v508
    %v1808 = vunpack.c.l.b16 %v509
    %v1809 = vunpack.c.h.b16 %v509
    %v1810 = vunpack.c.l.b16 %v510
    %v1811 = vunpack.c.h.b16 %v510
    %v1812 = vunpack.c.l.b16 %v511
    %v1813 = vunpack.c.h.b16 %v511
    %v1814 = vunpack.c.l.b16 %v512
    %v1815 = vunpack.c.h.b16 %v512
    %v1816 = vunpack.c.l.b16 %v513
    %v1817 = vunpack.c.h.b16 %v513
    %v1818 = vunpack.c.l.b16 %v514
    %v1819 = vunpack.c.h.b16 %v514
    %v1820 = vunpack.c.l.b16 %v515
    %v1821 = vunpack.c.h.b16 %v515
    %v1822 = vunpack.c.l.b16 %v516
    %v1823 = vunpack.c.h.b16 %v516
    %v1824 = vunpack.c.l.b16 %v517
    %v1825 = vunpack.c.h.b16 %v517
    %v1826 = vunpack.c.l.b16 %v518
    %v1827 = vunpack.c.h.b16 %v518
    %v1828 = vunpack.c.l.b16 %v519
    %v1829 = vunpack.c.h.b16 %v519
    %v1830 = vunpack.c.l.b16 %v520
    %v1831 = vunpack.c.h.b16 %v520
    %v1832 = vunpack.c.l.b16 %v521
    %v1833 = vunpack.c.h.b16 %v521
    %v1834 = vunpack.c.l.b16 %v522
    %v1835 = vunpack.c.h.b16 %v522
    %v1836 = vunpack.c.l.b16 %v523
    %v1837 = vunpack.c.h.b16 %v523
    %v1838 = vunpack.c.l.b16 %v524
    %v1839 = vunpack.c.h.b16 %v524
    %v1840 = vunpack.c.l.b16 %v525
    %v1841 = vunpack.c.h.b16 %v525
    %v1842 = vunpack.c.l.b16 %v526
    %v1843 = vunpack.c.h.b16 %v526
    %v1844 = vunpack.c.l.b16 %v527
    %v1845 = vunpack.c.h.b16 %v527
    %v1846 = vunpack.c.l.b16 %v528
    %v1847 = vunpack.c.h.b16 %v528
    %v1848 = vunpack.c.l.b16 %v529
    %v1849 = vunpack.c.h.b16 %v529
    %v1850 = vunpack.c.l.b16 %v530
    %v1851 = vunpack.c.h.b16 %v530
    %v1852 = vunpack.c.l.b16 %v531
    %v1853 = vunpack.c.h.b16 %v531
    %v1854 = vunpack.c.l.b16 %v532
    %v1855 = vunpack.c.h.b16 %v532
    %v1856 = vunpack.c.l.b16 %v533
    %v1857 = vunpack.c.h.b16 %v533
    %v1858 = vunpack.c.l.b16 %v534
    %v1859 = vunpack.c.h.b16 %v534
    %v1860 = vunpack.c.l.b16 %v535
    %v1861 = vunpack.c.h.b16 %v535
    %v1862 = vunpack.c.l.b16 %v536
    %v1863 = vunpack.c.h.b16 %v536
    %v1864 = vunpack.c.l.b16 %v537
    %v1865 = vunpack.c.h.b16 %v537
    %v1866 = vpack.c.b16 %v1008, %v1002
    %v1867 = vpack.c.b16 %v1009, %v1003
    %v1868 = vpack.c.b16 %v1010, %v1004
    %v1869 = vpack.c.b16 %v1011, %v1005
    %v1870 = vpack.c.b16 %v1012, %v1006
    %v1871 = vpack.c.b16 %v1013, %v1007
    %v1872 = vpack.c.b16 %v1020, %v1014
    %v1873 = vpack.c.b16 %v1021, %v1015
    %v1874 = vpack.c.b16 %v1022, %v1016
    %v1875 = vpack.c.b16 %v1023, %v1017
    %v1876 = vpack.c.b16 %v1024, %v1018
    %v1877 = vpack.c.b16 %v1025, %v1019
    %v1878 = vpack.c.b16 %v1032, %v1026
    %v1879 = vpack.c.b16 %v1033, %v1027
    %v1880 = vpack.c.b16 %v1034, %v1028
    %v1881 = vpack.c.b16 %v1035, %v1029
    %v1882 = vpack.c.b16 %v1036, %v1030
    %v1883 = vpack.c.b16 %v1037, %v1031
    %v1884 = vpack.c.b16 %v1044, %v1038
    %v1885 = vpack.c.b16 %v1045, %v1039
    %v1886 = vpack.c.b16 %v1046, %v1040
    %v1887 = vpack.c.b16 %v1047, %v1041
    %v1888 = vpack.c.b16 %v1048, %v1042
    %v1889 = vpack.c.b16 %v1049, %v1043
    %v1890 = vpack.c.b16 %v1056, %v1050
    %v1891 = vpack.c.b16 %v1057, %v1051
    %v1892 = vpack.c.b16 %v1058, %v1052
    %v1893 = vpack.c.b16 %v1059, %v1053
    %v1894 = vpack.c.b16 %v1060, %v1054
    %v1895 = vpack.c.b16 %v1061, %v1055
    %v1896 = vpack.c.b16 %v1068, %v1062
    %v1897 = vpack.c.b16 %v1069, %v1063
    %v1898 = vpack.c.b16 %v1070, %v1064
    %v1899 = vpack.c.b16 %v1071, %v1065
    %v1900 = vpack.c.b16 %v1072, %v1066
    %v1901 = vpack.c.b16 %v1073, %v1067
    %v1902 = vpack.c.b16 %v1080, %v1074
    %v1903 = vpack.c.b16 %v1081, %v1075
    %v1904 = vpack.c.b16 %v1082, %v1076
    %v1905 = vpack.c.b16 %v1083, %v1077
    %v1906 = vpack.c.b16 %v1084, %v1078
    %v1907 = vpack.c.b16 %v1085, %v1079
    %v1908 = vpack.c.b16 %v1092, %v1086
    %v1909 = vpack.c.b16 %v1093, %v1087
    %v1910 = vpack.c.b16 %v1094, %v1088
    %v1911 = vpack.c.b16 %v1095, %v1089
    %v1912 = vpack.c.b16 %v1096, %v1090
    %v1913 = vpack.c.b16 %v1097, %v1091
    %v1914 = vpack.c.b16 %v1104, %v1098
    %v1915 = vpack.c.b16 %v1105, %v1099
    %v1916 = vpack.c.b16 %v1106, %v1100
    %v1917 = vpack.c.b16 %v1107, %v1101
    %v1918 = vpack.c.b16 %v1108, %v1102
    %v1919 = vpack.c.b16 %v1109, %v1103
    %v1920 = vpack.c.b16 %v1116, %v1110
    %v1921 = vpack.c.b16 %v1117, %v1111
    %v1922 = vpack.c.b16 %v1118, %v1112
    %v1923 = vpack.c.b16 %v1119, %v1113
    %v1924 = vpack.c.b16 %v1120, %v1114
    %v1925 = vpack.c.b16 %v1121, %v1115
    %v1926 = vpack.c.b16 %v1128, %v1122
    %v1927 = vpack.c.b16 %v1129, %v1123
    %v1928 = vpack.c.b16 %v1130, %v1124
    %v1929 = vpack.c.b16 %v1131, %v1125
    %v1930 = vpack.c.b16 %v1132, %v1126
    %v1931 = vpack.c.b16 %v1133, %v1127
    %v1932 = vpack.c.b16 %v1140, %v1134
    %v1933 = vpack.c.b16 %v1141, %v1135
    %v1934 = vpack.c.b16 %v1142, %v1136
    %v1935 = vpack.c.b16 %v1143, %v1137
    %v1936 = vpack.c.b16 %v1144, %v1138
    %v1937 = vpack.c.b16 %v1145, %v1139
    %v1938 = vpack.c.b16 %v1152, %v1146
    %v1939 = vpack.c.b16 %v1153, %v1147
    %v1940 = vpack.c.b16 %v1154, %v1148
    %v1941 = vpack.c.b16 %v1155, %v1149
    %v1942 = vpack.c.b16 %v1156, %v1150
    %v1943 = vpack.c.b16 %v1157, %v1151
    %v1944 = vpack.c.b16 %v1164, %v1158
    %v1945 = vpack.c.b16 %v1165, %v1159
    %v1946 = vpack.c.b16 %v1166, %v1160
    %v1947 = vpack.c.b16 %v1167, %v1161
    %v1948 = vpack.c.b16 %v1168, %v1162
    %v1949 = vpack.c.b16 %v1169, %v1163
    %v1950 = vpack.c.b16 %v1176, %v1170
    %v1951 = vpack.c.b16 %v1177, %v1171
    %v1952 = vpack.c.b16 %v1178, %v1172
    %v1953 = vpack.c.b16 %v1179, %v1173
    %v1954 = vpack.c.b16 %v1180, %v1174
    %v1955 = vpack.c.b16 %v1181, %v1175
    %v1956 = vpack.c.b16 %v1188, %v1182
    %v1957 = vpack.c.b16 %v1189, %v1183
    %v1958 = vpack.c.b16 %v1190, %v1184
    %v1959 = vpack.c.b16 %v1191, %v1185
    %v1960 = vpack.c.b16 %v1192, %v1186
    %v1961 = vpack.c.b16 %v1193, %v1187
    %v1962 = vpack.c.b16 %v1200, %v1194
    %v1963 = vpack.c.b16 %v1201, %v1195
    %v1964 = vpack.c.b16 %v1202, %v1196
    %v1965 = vpack.c.b16 %v1203, %v1197
    %v1966 = vpack.c.b16 %v1204, %v1198
    %v1967 = vpack.c.b16 %v1205, %v1199
    %v1968 = vpack.c.b16 %v1212, %v1206
    %v1969 = vpack.c.b16 %v1213, %v1207
    %v1970 = vpack.c.b16 %v1214, %v1208
    %v1971 = vpack.c.b16 %v1215, %v1209
    %v1972 = vpack.c.b16 %v1216, %v1210
    %v1973 = vpack.c.b16 %v1217, %v1211
    %v1974 = vpack.c.b16 %v1224, %v1218
    %v1975 = vpack.c.b16 %v1225, %v1219
    %v1976 = vpack.c.b16 %v1226, %v1220
    %v1977 = vpack.c.b16 %v1227, %v1221
    %v1978 = vpack.c.b16 %v1228, %v1222
    %v1979 = vpack.c.b16 %v1229, %v1223
    %v1980 = vpack.c.b16 %v1236, %v1230
    %v1981 = vpack.c.b16 %v1237, %v1231
    %v1982 = vpack.c.b16 %v1238, %v1232
    %v1983 = vpack.c.b16 %v1239, %v1233
    %v1984 = vpack.c.b16 %v1240, %v1234
    %v1985 = vpack.c.b16 %v1241, %v1235
    %v1986 = vpack.c.b16 %v1248, %v1242
    %v1987 = vpack.c.b16 %v1249, %v1243
    %v1988 = vpack.c.b16 %v1250, %v1244
    %v1989 = vpack.c.b16 %v1251, %v1245
    %v1990 = vpack.c.b16 %v1252, %v1246
    %v1991 = vpack.c.b16 %v1253, %v1247
    %v1992 = vpack.c.b16 %v1260, %v1254
    %v1993 = vpack.c.b16 %v1261, %v1255
    %v1994 = vpack.c.b16 %v1262, %v1256
    %v1995 = vpack.c.b16 %v1263, %v1257
    %v1996 = vpack.c.b16 %v1264, %v1258
    %v1997 = vpack.c.b16 %v1265, %v1259
    %v1998 = vpack.c.b16 %v1272, %v1266
    %v1999 = vpack.c.b16 %v1273, %v1267
    %v2000 = vpack.c.b16 %v1274, %v1268
    %v2001 = vpack.c.b16 %v1275, %v1269
    %v2002 = vpack.c.b16 %v1276, %v1270
    %v2003 = vpack.c.b16 %v1277, %v1271
    %v2004 = vpack.c.b16 %v1284, %v1278
    %v2005 = vpack.c.b16 %v1285, %v1279
    %v2006 = vpack.c.b16 %v1286, %v1280
    %v2007 = vpack.c.b16 %v1287, %v1281
    %v2008 = vpack.c.b16 %v1288, %v1282
    %v2009 = vpack.c.b16 %v1289, %v1283
    %v2010 = vpack.c.b16 %v1296, %v1290
    %v2011 = vpack.c.b16 %v1297, %v1291
    %v2012 = vpack.c.b16 %v1298, %v1292
    %v2013 = vpack.c.b16 %v1299, %v1293
    %v2014 = vpack.c.b16 %v1300, %v1294
    %v2015 = vpack.c.b16 %v1301, %v1295
    %v2016 = vpack.c.b16 %v1308, %v1302
    %v2017 = vpack.c.b16 %v1309, %v1303
    %v2018 = vpack.c.b16 %v1310, %v1304
    %v2019 = vpack.c.b16 %v1311, %v1305
    %v2020 = vpack.c.b16 %v1312, %v1306
    %v2021 = vpack.c.b16 %v1313, %v1307
    %v2022 = vpack.c.b16 %v1320, %v1314
    %v2023 = vpack.c.b16 %v1321, %v1315
    %v2024 = vpack.c.b16 %v1322, %v1316
    %v2025 = vpack.c.b16 %v1323, %v1317
    %v2026 = vpack.c.b16 %v1324, %v1318
    %v2027 = vpack.c.b16 %v1325, %v1319
    %v2028 = vpack.c.b16 %v1332, %v1326
    %v2029 = vpack.c.b16 %v1333, %v1327
    %v2030 = vpack.c.b16 %v1334, %v1328
    %v2031 = vpack.c.b16 %v1335, %v1329
    %v2032 = vpack.c.b16 %v1336, %v1330
    %v2033 = vpack.c.b16 %v1337, %v1331
    %v2034 = vpack.c.b16 %v1344, %v1338
    %v2035 = vpack.c.b16 %v1345, %v1339
    %v2036 = vpack.c.b16 %v1346, %v1340
    %v2037 = vpack.c.b16 %v1347, %v1341
    %v2038 = vpack.c.b16 %v1348, %v1342
    %v2039 = vpack.c.b16 %v1349, %v1343
    %v2040 = vpack.c.b16 %v1356, %v1350
    %v2041 = vpack.c.b16 %v1357, %v1351
    %v2042 = vpack.c.b16 %v1358, %v1352
    %v2043 = vpack.c.b16 %v1359, %v1353
    %v2044 = vpack.c.b16 %v1360, %v1354
    %v2045 = vpack.c.b16 %v1361, %v1355
    %v2046 = vpack.c.b16 %v1368, %v1362
    %v2047 = vpack.c.b16 %v1369, %v1363
    %v2048 = vpack.c.b16 %v1370, %v1364
    %v2049 = vpack.c.b16 %v1371, %v1365
    %v2050 = vpack.c.b16 %v1372, %v1366
    %v2051 = vpack.c.b16 %v1373, %v1367
    %v2052 = vpack.c.b16 %v1380, %v1374
    %v2053 = vpack.c.b16 %v1381, %v1375
    %v2054 = vpack.c.b16 %v1382, %v1376
    %v2055 = vpack.c.b16 %v1383, %v1377
    %v2056 = vpack.c.b16 %v1384, %v1378
    %v2057 = vpack.c.b16 %v1385, %v1379
    %v2058 = vpack.c.b16 %v1392, %v1386
    %v2059 = vpack.c.b16 %v1393, %v1387
    %v2060 = vpack.c.b16 %v1394, %v1388
    %v2061 = vpack.c.b16 %v1395, %v1389
    %v2062 = vpack.c.b16 %v1396, %v1390
    %v2063 = vpack.c.b16 %v1397, %v1391
    %v2064 = vpack.c.b16 %v1404, %v1398
    %v2065 = vpack.c.b16 %v1405, %v1399
    %v2066 = vpack.c.b16 %v1406, %v1400
    %v2067 = vpack.c.b16 %v1407, %v1401
    %v2068 = vpack.c.b16 %v1408, %v1402
    %v2069 = vpack.c.b16 %v1409, %v1403
    %v2070 = vpack.c.b16 %v1416, %v1410
    %v2071 = vpack.c.b16 %v1417, %v1411
    %v2072 = vpack.c.b16 %v1418, %v1412
    %v2073 = vpack.c.b16 %v1419, %v1413
    %v2074 = vpack.c.b16 %v1420, %v1414
    %v2075 = vpack.c.b16 %v1421, %v1415
    %v2076 = vpack.c.b16 %v1428, %v1422
    %v2077 = vpack.c.b16 %v1429, %v1423
    %v2078 = vpack.c.b16 %v1430, %v1424
    %v2079 = vpack.c.b16 %v1431, %v1425
    %v2080 = vpack.c.b16 %v1432, %v1426
    %v2081 = vpack.c.b16 %v1433, %v1427
    %v2082 = vpack.c.b16 %v1440, %v1434
    %v2083 = vpack.c.b16 %v1441, %v1435
    %v2084 = vpack.c.b16 %v1442, %v1436
    %v2085 = vpack.c.b16 %v1443, %v1437
    %v2086 = vpack.c.b16 %v1444, %v1438
    %v2087 = vpack.c.b16 %v1445, %v1439
    %v2088 = vpack.c.b16 %v1452, %v1446
    %v2089 = vpack.c.b16 %v1453, %v1447
    %v2090 = vpack.c.b16 %v1454, %v1448
    %v2091 = vpack.c.b16 %v1455, %v1449
    %v2092 = vpack.c.b16 %v1456, %v1450
    %v2093 = vpack.c.b16 %v1457, %v1451
    %v2094 = vpack.c.b16 %v1464, %v1458
    %v2095 = vpack.c.b16 %v1465, %v1459
    %v2096 = vpack.c.b16 %v1466, %v1460
    %v2097 = vpack.c.b16 %v1467, %v1461
    %v2098 = vpack.c.b16 %v1468, %v1462
    %v2099 = vpack.c.b16 %v1469, %v1463
    %v2100 = vpack.c.b16 %v1476, %v1470
    %v2101 = vpack.c.b16 %v1477, %v1471
    %v2102 = vpack.c.b16 %v1478, %v1472
    %v2103 = vpack.c.b16 %v1479, %v1473
    %v2104 = vpack.c.b16 %v1480, %v1474
    %v2105 = vpack.c.b16 %v1481, %v1475
    %v2106 = vpack.c.b16 %v1488, %v1482
    %v2107 = vpack.c.b16 %v1489, %v1483
    %v2108 = vpack.c.b16 %v1490, %v1484
    %v2109 = vpack.c.b16 %v1491, %v1485
    %v2110 = vpack.c.b16 %v1492, %v1486
    %v2111 = vpack.c.b16 %v1493, %v1487
    %v2112 = vpack.c.b16 %v1500, %v1494
    %v2113 = vpack.c.b16 %v1501, %v1495
    %v2114 = vpack.c.b16 %v1502, %v1496
    %v2115 = vpack.c.b16 %v1503, %v1497
    %v2116 = vpack.c.b16 %v1504, %v1498
    %v2117 = vpack.c.b16 %v1505, %v1499
    %v2118 = vpack.c.b16 %v1512, %v1506
    %v2119 = vpack.c.b16 %v1513, %v1507
    %v2120 = vpack.c.b16 %v1514, %v1508
    %v2121 = vpack.c.b16 %v1515, %v1509
    %v2122 = vpack.c.b16 %v1516, %v1510
    %v2123 = vpack.c.b16 %v1517, %v1511
    %v2124 = vpack.c.b16 %v1524, %v1518
    %v2125 = vpack.c.b16 %v1525, %v1519
    %v2126 = vpack.c.b16 %v1526, %v1520
    %v2127 = vpack.c.b16 %v1527, %v1521
    %v2128 = vpack.c.b16 %v1528, %v1522
    %v2129 = vpack.c.b16 %v1529, %v1523
    %v2130 = vpack.c.b16 %v1536, %v1530
    %v2131 = vpack.c.b16 %v1537, %v1531
    %v2132 = vpack.c.b16 %v1538, %v1532
    %v2133 = vpack.c.b16 %v1539, %v1533
    %v2134 = vpack.c.b16 %v1540, %v1534
    %v2135 = vpack.c.b16 %v1541, %v1535
    %v2136 = vpack.c.b16 %v1548, %v1542
    %v2137 = vpack.c.b16 %v1549, %v1543
    %v2138 = vpack.c.b16 %v1550, %v1544
    %v2139 = vpack.c.b16 %v1551, %v1545
    %v2140 = vpack.c.b16 %v1552, %v1546
    %v2141 = vpack.c.b16 %v1553, %v1547
    %v2142 = vpack.c.b16 %v1560, %v1554
    %v2143 = vpack.c.b16 %v1561, %v1555
    %v2144 = vpack.c.b16 %v1562, %v1556
    %v2145 = vpack.c.b16 %v1563, %v1557
    %v2146 = vpack.c.b16 %v1564, %v1558
    %v2147 = vpack.c.b16 %v1565, %v1559
    %v2148 = vpack.c.b16 %v1572, %v1566
    %v2149 = vpack.c.b16 %v1573, %v1567
    %v2150 = vpack.c.b16 %v1574, %v1568
    %v2151 = vpack.c.b16 %v1575, %v1569
    %v2152 = vpack.c.b16 %v1576, %v1570
    %v2153 = vpack.c.b16 %v1577, %v1571
    %v2154 = vpack.c.b16 %v1584, %v1578
    %v2155 = vpack.c.b16 %v1585, %v1579
    %v2156 = vpack.c.b16 %v1586, %v1580
    %v2157 = vpack.c.b16 %v1587, %v1581
    %v2158 = vpack.c.b16 %v1588, %v1582
    %v2159 = vpack.c.b16 %v1589, %v1583
    %v2160 = vpack.c.b16 %v1596, %v1590
    %v2161 = vpack.c.b16 %v1597, %v1591
    %v2162 = vpack.c.b16 %v1598, %v1592
    %v2163 = vpack.c.b16 %v1599, %v1593
    %v2164 = vpack.c.b16 %v1600, %v1594
    %v2165 = vpack.c.b16 %v1601, %v1595
    %v2166 = vpack.c.b16 %v1608, %v1602
    %v2167 = vpack.c.b16 %v1609, %v1603
    %v2168 = vpack.c.b16 %v1610, %v1604
    %v2169 = vpack.c.b16 %v1611, %v1605
    %v2170 = vpack.c.b16 %v1612, %v1606
    %v2171 = vpack.c.b16 %v1613, %v1607
    %v2172 = vpack.c.b16 %v1620, %v1614
    %v2173 = vpack.c.b16 %v1621, %v1615
    %v2174 = vpack.c.b16 %v1622, %v1616
    %v2175 = vpack.c.b16 %v1623, %v1617
    %v2176 = vpack.c.b16 %v1624, %v1618
    %v2177 = vpack.c.b16 %v1625, %v1619
    %v2178 = vpack.c.b16 %v1632, %v1626
    %v2179 = vpack.c.b16 %v1633, %v1627
    %v2180 = vpack.c.b16 %v1634, %v1628
    %v2181 = vpack.c.b16 %v1635, %v1629
    %v2182 = vpack.c.b16 %v1636, %v1630
    %v2183 = vpack.c.b16 %v1637, %v1631
    %v2184 = vpack.c.b16 %v1644, %v1638
    %v2185 = vpack.c.b16 %v1645, %v1639
    %v2186 = vpack.c.b16 %v1646, %v1640
    %v2187 = vpack.c.b16 %v1647, %v1641
    %v2188 = vpack.c.b16 %v1648, %v1642
    %v2189 = vpack.c.b16 %v1649, %v1643
    %v2190 = vpack.c.b16 %v1656, %v1650
    %v2191 = vpack.c.b16 %v1657, %v1651
    %v2192 = vpack.c.b16 %v1658, %v1652
    %v2193 = vpack.c.b16 %v1659, %v1653
    %v2194 = vpack.c.b16 %v1660, %v1654
    %v2195 = vpack.c.b16 %v1661, %v1655
    %v2196 = vpack.c.b16 %v1668, %v1662
    %v2197 = vpack.c.b16 %v1669, %v1663
    %v2198 = vpack.c.b16 %v1670, %v1664
    %v2199 = vpack.c.b16 %v1671, %v1665
    %v2200 = vpack.c.b16 %v1672, %v1666
    %v2201 = vpack.c.b16 %v1673, %v1667
    %v2202 = vpack.c.b16 %v1680, %v1674
    %v2203 = vpack.c.b16 %v1681, %v1675
    %v2204 = vpack.c.b16 %v1682, %v1676
    %v2205 = vpack.c.b16 %v1683, %v1677
    %v2206 = vpack.c.b16 %v1684, %v1678
    %v2207 = vpack.c.b16 %v1685, %v1679
    %v2208 = vpack.c.b16 %v1692, %v1686
    %v2209 = vpack.c.b16 %v1693, %v1687
    %v2210 = vpack.c.b16 %v1694, %v1688
    %v2211 = vpack.c.b16 %v1695, %v1689
    %v2212 = vpack.c.b16 %v1696, %v1690
    %v2213 = vpack.c.b16 %v1697, %v1691
    %v2214 = vpack.c.b16 %v1704, %v1698
    %v2215 = vpack.c.b16 %v1705, %v1699
    %v2216 = vpack.c.b16 %v1706, %v1700
    %v2217 = vpack.c.b16 %v1707, %v1701
    %v2218 = vpack.c.b16 %v1708, %v1702
    %v2219 = vpack.c.b16 %v1709, %v1703
    %v2220 = vpack.c.b16 %v1716, %v1710
    %v2221 = vpack.c.b16 %v1717, %v1711
    %v2222 = vpack.c.b16 %v1718, %v1712
    %v2223 = vpack.c.b16 %v1719, %v1713
    %v2224 = vpack.c.b16 %v1720, %v1714
    %v2225 = vpack.c.b16 %v1721, %v1715
    %v2226 = vpack.c.b16 %v1728, %v1722
    %v2227 = vpack.c.b16 %v1729, %v1723
    %v2228 = vpack.c.b16 %v1730, %v1724
    %v2229 = vpack.c.b16 %v1731, %v1725
    %v2230 = vpack.c.b16 %v1732, %v1726
    %v2231 = vpack.c.b16 %v1733, %v1727
    %v2232 = vpack.c.b16 %v1740, %v1734
    %v2233 = vpack.c.b16 %v1741, %v1735
    %v2234 = vpack.c.b16 %v1742, %v1736
    %v2235 = vpack.c.b16 %v1743, %v1737
    %v2236 = vpack.c.b16 %v1744, %v1738
    %v2237 = vpack.c.b16 %v1745, %v1739
    %v2238 = vpack.c.b16 %v1752, %v1746
    %v2239 = vpack.c.b16 %v1753, %v1747
    %v2240 = vpack.c.b16 %v1754, %v1748
    %v2241 = vpack.c.b16 %v1755, %v1749
    %v2242 = vpack.c.b16 %v1756, %v1750
    %v2243 = vpack.c.b16 %v1757, %v1751
    %v2244 = vpack.c.b16 %v1764, %v1758
    %v2245 = vpack.c.b16 %v1765, %v1759
    %v2246 = vpack.c.b16 %v1766, %v1760
    %v2247 = vpack.c.b16 %v1767, %v1761
    %v2248 = vpack.c.b16 %v1768, %v1762
    %v2249 = vpack.c.b16 %v1769, %v1763
    %v2250 = vpack.c.b16 %v1776, %v1770
    %v2251 = vpack.c.b16 %v1777, %v1771
    %v2252 = vpack.c.b16 %v1778, %v1772
    %v2253 = vpack.c.b16 %v1779, %v1773
    %v2254 = vpack.c.b16 %v1780, %v1774
    %v2255 = vpack.c.b16 %v1781, %v1775
    %v2256 = vpack.c.b16 %v1788, %v1782
    %v2257 = vpack.c.b16 %v1789, %v1783
    %v2258 = vpack.c.b16 %v1790, %v1784
    %v2259 = vpack.c.b16 %v1791, %v1785
    %v2260 = vpack.c.b16 %v1792, %v1786
    %v2261 = vpack.c.b16 %v1793, %v1787
    %v2262 = vpack.c.b16 %v1800, %v1794
    %v2263 = vpack.c.b16 %v1801, %v1795
    %v2264 = vpack.c.b16 %v1802, %v1796
    %v2265 = vpack.c.b16 %v1803, %v1797
    %v2266 = vpack.c.b16 %v1804, %v1798
    %v2267 = vpack.c.b16 %v1805, %v1799
    %v2268 = vpack.c.b16 %v1812, %v1806
    %v2269 = vpack.c.b16 %v1813, %v1807
    %v2270 = vpack.c.b16 %v1814, %v1808
    %v2271 = vpack.c.b16 %v1815, %v1809
    %v2272 = vpack.c.b16 %v1816, %v1810
    %v2273 = vpack.c.b16 %v1817, %v1811
    %v2274 = vpack.c.b16 %v1824, %v1818
    %v2275 = vpack.c.b16 %v1825, %v1819
    %v2276 = vpack.c.b16 %v1826, %v1820
    %v2277 = vpack.c.b16 %v1827, %v1821
    %v2278 = vpack.c.b16 %v1828, %v1822
    %v2279 = vpack.c.b16 %v1829, %v1823
    %v2280 = vpack.c.b16 %v1836, %v1830
    %v2281 = vpack.c.b16 %v1837, %v1831
    %v2282 = vpack.c.b16 %v1838, %v1832
    %v2283 = vpack.c.b16 %v1839, %v1833
    %v2284 = vpack.c.b16 %v1840, %v1834
    %v2285 = vpack.c.b16 %v1841, %v1835
    %v2286 = vpack.c.b16 %v1848, %v1842
    %v2287 = vpack.c.b16 %v1849, %v1843
    %v2288 = vpack.c.b16 %v1850, %v1844
    %v2289 = vpack.c.b16 %v1851, %v1845
    %v2290 = vpack.c.b16 %v1852, %v1846
    %v2291 = vpack.c.b16 %v1853, %v1847
    %v2292 = vpack.c.b16 %v1860, %v1854
    %v2293 = vpack.c.b16 %v1861, %v1855
    %v2294 = vpack.c.b16 %v1862, %v1856
    %v2295 = vpack.c.b16 %v1863, %v1857
    %v2296 = vpack.c.b16 %v1864, %v1858
    %v2297 = vpack.c.b16 %v1865, %v1859
    %2730 = vmatprep.subr.bf16.mxu0 %v1909
    %2731 = vmatpush1.bf16.msra.mxu0 %v1908
    %2732 = vmatprep.subr.bf16.mxu0 %v1903
    %2733 = vmatpush1.bf16.msra.mxu0 %v1902
    %2734 = vmatprep.subr.bf16.mxu0 %v1897
    %2735 = vmatpush1.bf16.msra.mxu0 %v1896
    %2736 = vmatprep.subr.bf16.mxu0 %v1891
    %2737 = vmatpush1.bf16.msra.mxu0 %v1890
    %2738 = vmatprep.subr.bf16.mxu0 %v1885
    %2739 = vmatpush1.bf16.msra.mxu0 %v1884
    %2740 = vmatprep.subr.bf16.mxu0 %v1879
    %2741 = vmatpush1.bf16.msra.mxu0 %v1878
    %2742 = vmatprep.subr.bf16.mxu0 %v1873
    %2743 = vmatpush1.bf16.msra.mxu0 %v1872
    %2744 = vmatprep.subr.bf16.mxu0 %v1867
    %2745 = vmatpush1.bf16.msra.mxu0 %v1866
    %2746 = vmatprep.subr.bf16.mxu0 %v1957
    %2747 = vmatpush2.bf16.msra.mxu0 %v1956
    %2748 = vmatprep.subr.bf16.mxu0 %v1951
    %2749 = vmatpush2.bf16.msra.mxu0 %v1950
    %2750 = vmatprep.subr.bf16.mxu0 %v1945
    %2751 = vmatpush2.bf16.msra.mxu0 %v1944
    %2752 = vmatprep.subr.bf16.mxu0 %v1939
    %2753 = vmatpush2.bf16.msra.mxu0 %v1938
    %2754 = vmatprep.subr.bf16.mxu0 %v1933
    %2755 = vmatpush2.bf16.msra.mxu0 %v1932
    %2756 = vmatprep.subr.bf16.mxu0 %v1927
    %2757 = vmatpush2.bf16.msra.mxu0 %v1926
    %2758 = vmatprep.subr.bf16.mxu0 %v1921
    %2759 = vmatpush2.bf16.msra.mxu0 %v1920
    %2760 = vmatprep.subr.bf16.mxu0 %v1915
    %2761 = vmatpush2.bf16.msra.mxu0 %v1914
    %2762 = vmatprep.mubr.bf16.mxu0 %v98
    %2763 = vmatmul.mubr.bf16.gmra.mxu0 %v97
    %v2764 = vpop.f32.mrf.mxu0
    %v2765 = vadd.f32 %v543, %v2764
    %v2766 = vpop.f32.mrf.mxu0
    %v2767 = vadd.f32 %v547, %v2766
    %v2768 = vpop.f32.mrf.mxu0
    %v2769 = vpop.f32.mrf.mxu0
    %2770 = vdwg.mxu0
    %2771 = vmatprep.subr.bf16.mxu0 %v2005
    %2772 = vmatpush1.bf16.msra.mxu0 %v2004
    %2773 = vmatprep.subr.bf16.mxu0 %v1999
    %2774 = vmatpush1.bf16.msra.mxu0 %v1998
    %2775 = vmatprep.subr.bf16.mxu0 %v1993
    %2776 = vmatpush1.bf16.msra.mxu0 %v1992
    %2777 = vmatprep.subr.bf16.mxu0 %v1987
    %2778 = vmatpush1.bf16.msra.mxu0 %v1986
    %2779 = vmatprep.subr.bf16.mxu0 %v1981
    %2780 = vmatpush1.bf16.msra.mxu0 %v1980
    %2781 = vmatprep.subr.bf16.mxu0 %v1975
    %2782 = vmatpush1.bf16.msra.mxu0 %v1974
    %2783 = vmatprep.subr.bf16.mxu0 %v1969
    %2784 = vmatpush1.bf16.msra.mxu0 %v1968
    %2785 = vmatprep.subr.bf16.mxu0 %v1963
    %2786 = vmatpush1.bf16.msra.mxu0 %v1962
    %2787 = vmatprep.subr.bf16.mxu0 %v2053
    %2788 = vmatpush2.bf16.msra.mxu0 %v2052
    %2789 = vmatprep.subr.bf16.mxu0 %v2047
    %2790 = vmatpush2.bf16.msra.mxu0 %v2046
    %2791 = vmatprep.subr.bf16.mxu0 %v2041
    %2792 = vmatpush2.bf16.msra.mxu0 %v2040
    %2793 = vmatprep.subr.bf16.mxu0 %v2035
    %2794 = vmatpush2.bf16.msra.mxu0 %v2034
    %2795 = vmatprep.subr.bf16.mxu0 %v2029
    %2796 = vmatpush2.bf16.msra.mxu0 %v2028
    %2797 = vmatprep.subr.bf16.mxu0 %v2023
    %2798 = vmatpush2.bf16.msra.mxu0 %v2022
    %2799 = vmatprep.subr.bf16.mxu0 %v2017
    %2800 = vmatpush2.bf16.msra.mxu0 %v2016
    %2801 = vmatprep.subr.bf16.mxu0 %v2011
    %2802 = vmatpush2.bf16.msra.mxu0 %v2010
    %2803 = vmatprep.mubr.bf16.mxu0 %v100
    %2804 = vmatmul.mubr.bf16.gmra.mxu0 %v99
    %v2805 = vpop.f32.mrf.mxu0
    %v2806 = vadd.f32 %v2765, %v2805
    %v2807 = vpop.f32.mrf.mxu0
    %v2808 = vadd.f32 %v2767, %v2807
    %v2809 = vpop.f32.mrf.mxu0
    %v2810 = vpop.f32.mrf.mxu0
    %2811 = vdwg.mxu0
    %2812 = vmatprep.subr.bf16.mxu0 %v2101
    %2813 = vmatpush1.bf16.msra.mxu0 %v2100
    %2814 = vmatprep.subr.bf16.mxu0 %v2095
    %2815 = vmatpush1.bf16.msra.mxu0 %v2094
    %2816 = vmatprep.subr.bf16.mxu0 %v2089
    %2817 = vmatpush1.bf16.msra.mxu0 %v2088
    %2818 = vmatprep.subr.bf16.mxu0 %v2083
    %2819 = vmatpush1.bf16.msra.mxu0 %v2082
    %2820 = vmatprep.subr.bf16.mxu0 %v2077
    %2821 = vmatpush1.bf16.msra.mxu0 %v2076
    %2822 = vmatprep.subr.bf16.mxu0 %v2071
    %2823 = vmatpush1.bf16.msra.mxu0 %v2070
    %2824 = vmatprep.subr.bf16.mxu0 %v2065
    %2825 = vmatpush1.bf16.msra.mxu0 %v2064
    %2826 = vmatprep.subr.bf16.mxu0 %v2059
    %2827 = vmatpush1.bf16.msra.mxu0 %v2058
    %2828 = vmatprep.subr.bf16.mxu0 %v2149
    %2829 = vmatpush2.bf16.msra.mxu0 %v2148
    %2830 = vmatprep.subr.bf16.mxu0 %v2143
    %2831 = vmatpush2.bf16.msra.mxu0 %v2142
    %2832 = vmatprep.subr.bf16.mxu0 %v2137
    %2833 = vmatpush2.bf16.msra.mxu0 %v2136
    %2834 = vmatprep.subr.bf16.mxu0 %v2131
    %2835 = vmatpush2.bf16.msra.mxu0 %v2130
    %2836 = vmatprep.subr.bf16.mxu0 %v2125
    %2837 = vmatpush2.bf16.msra.mxu0 %v2124
    %2838 = vmatprep.subr.bf16.mxu0 %v2119
    %2839 = vmatpush2.bf16.msra.mxu0 %v2118
    %2840 = vmatprep.subr.bf16.mxu0 %v2113
    %2841 = vmatpush2.bf16.msra.mxu0 %v2112
    %2842 = vmatprep.subr.bf16.mxu0 %v2107
    %2843 = vmatpush2.bf16.msra.mxu0 %v2106
    %2844 = vmatprep.mubr.bf16.mxu0 %v102
    %2845 = vmatmul.mubr.bf16.gmra.mxu0 %v101
    %v2846 = vpop.f32.mrf.mxu0
    %v2847 = vadd.f32 %v2806, %v2846
    %v2848 = vpop.f32.mrf.mxu0
    %v2849 = vadd.f32 %v2808, %v2848
    %v2850 = vpop.f32.mrf.mxu0
    %v2851 = vpop.f32.mrf.mxu0
    %2852 = vdwg.mxu0
    %2853 = vmatprep.subr.bf16.mxu0 %v2197
    %2854 = vmatpush1.bf16.msra.mxu0 %v2196
    %2855 = vmatprep.subr.bf16.mxu0 %v2191
    %2856 = vmatpush1.bf16.msra.mxu0 %v2190
    %2857 = vmatprep.subr.bf16.mxu0 %v2185
    %2858 = vmatpush1.bf16.msra.mxu0 %v2184
    %2859 = vmatprep.subr.bf16.mxu0 %v2179
    %2860 = vmatpush1.bf16.msra.mxu0 %v2178
    %2861 = vmatprep.subr.bf16.mxu0 %v2173
    %2862 = vmatpush1.bf16.msra.mxu0 %v2172
    %2863 = vmatprep.subr.bf16.mxu0 %v2167
    %2864 = vmatpush1.bf16.msra.mxu0 %v2166
    %2865 = vmatprep.subr.bf16.mxu0 %v2161
    %2866 = vmatpush1.bf16.msra.mxu0 %v2160
    %2867 = vmatprep.subr.bf16.mxu0 %v2155
    %2868 = vmatpush1.bf16.msra.mxu0 %v2154
    %2869 = vmatprep.subr.bf16.mxu0 %v2245
    %2870 = vmatpush2.bf16.msra.mxu0 %v2244
    %2871 = vmatprep.subr.bf16.mxu0 %v2239
    %2872 = vmatpush2.bf16.msra.mxu0 %v2238
    %2873 = vmatprep.subr.bf16.mxu0 %v2233
    %2874 = vmatpush2.bf16.msra.mxu0 %v2232
    %2875 = vmatprep.subr.bf16.mxu0 %v2227
    %2876 = vmatpush2.bf16.msra.mxu0 %v2226
    %2877 = vmatprep.subr.bf16.mxu0 %v2221
    %2878 = vmatpush2.bf16.msra.mxu0 %v2220
    %2879 = vmatprep.subr.bf16.mxu0 %v2215
    %2880 = vmatpush2.bf16.msra.mxu0 %v2214
    %2881 = vmatprep.subr.bf16.mxu0 %v2209
    %2882 = vmatpush2.bf16.msra.mxu0 %v2208
    %2883 = vmatprep.subr.bf16.mxu0 %v2203
    %2884 = vmatpush2.bf16.msra.mxu0 %v2202
    %2885 = vmatprep.mubr.bf16.mxu0 %v104
    %2886 = vmatmul.mubr.bf16.gmra.mxu0 %v103
    %v2887 = vpop.f32.mrf.mxu0
    %v2888 = vadd.f32 %v2847, %v2887
    %v2889 = vpop.f32.mrf.mxu0
    %v2890 = vadd.f32 %v2849, %v2889
    %v2891 = vpop.f32.mrf.mxu0
    %v2892 = vpop.f32.mrf.mxu0
    %2893 = vdwg.mxu0
    %2894 = vmatprep.subr.bf16.mxu0 %v2293
    %2895 = vmatpush1.bf16.msra.mxu0 %v2292
    %2896 = vmatprep.subr.bf16.mxu0 %v2287
    %2897 = vmatpush1.bf16.msra.mxu0 %v2286
    %2898 = vmatprep.subr.bf16.mxu0 %v2281
    %2899 = vmatpush1.bf16.msra.mxu0 %v2280
    %2900 = vmatprep.subr.bf16.mxu0 %v2275
    %2901 = vmatpush1.bf16.msra.mxu0 %v2274
    %2902 = vmatprep.subr.bf16.mxu0 %v2269
    %2903 = vmatpush1.bf16.msra.mxu0 %v2268
    %2904 = vmatprep.subr.bf16.mxu0 %v2263
    %2905 = vmatpush1.bf16.msra.mxu0 %v2262
    %2906 = vmatprep.subr.bf16.mxu0 %v2257
    %2907 = vmatpush1.bf16.msra.mxu0 %v2256
    %2908 = vmatprep.subr.bf16.mxu0 %v2251
    %2909 = vmatpush1.bf16.msra.mxu0 %v2250
    %2910 = vmatprep.subr.bf16.mxu0 0
    %2911 = vmatpush2.bf16.msra.mxu0 0
    %2912 = vmatprep.subr.bf16.mxu0 0
    %2913 = vmatpush2.bf16.msra.mxu0 0
    %2914 = vmatprep.subr.bf16.mxu0 0
    %2915 = vmatpush2.bf16.msra.mxu0 0
    %2916 = vmatprep.subr.bf16.mxu0 0
    %2917 = vmatpush2.bf16.msra.mxu0 0
    %2918 = vmatprep.subr.bf16.mxu0 0
    %2919 = vmatpush2.bf16.msra.mxu0 0
    %2920 = vmatprep.subr.bf16.mxu0 0
    %2921 = vmatpush2.bf16.msra.mxu0 0
    %2922 = vmatprep.subr.bf16.mxu0 0
    %2923 = vmatpush2.bf16.msra.mxu0 0
    %2924 = vmatprep.subr.bf16.mxu0 0
    %2925 = vmatpush2.bf16.msra.mxu0 0
    %2926 = vmatprep.mubr.bf16.mxu0 0
    %2927 = vmatmul.mubr.bf16.gmra.mxu0 %v105
    %v2928 = vpop.f32.mrf.mxu0
    %v2929 = vadd.f32 %v2888, %v2928
    %v2930 = vpop.f32.mrf.mxu0
    %v2931 = vadd.f32 %v2890, %v2930
    %v2932 = vpop.f32.mrf.mxu0
    %v2933 = vpop.f32.mrf.mxu0
    %2934 = vdwg.mxu0
    %2935 = vmatprep.subr.bf16.mxu0 %v1911
    %2936 = vmatpush1.bf16.msra.mxu0 %v1910
    %2937 = vmatprep.subr.bf16.mxu0 %v1905
    %2938 = vmatpush1.bf16.msra.mxu0 %v1904
    %2939 = vmatprep.subr.bf16.mxu0 %v1899
    %2940 = vmatpush1.bf16.msra.mxu0 %v1898
    %2941 = vmatprep.subr.bf16.mxu0 %v1893
    %2942 = vmatpush1.bf16.msra.mxu0 %v1892
    %2943 = vmatprep.subr.bf16.mxu0 %v1887
    %2944 = vmatpush1.bf16.msra.mxu0 %v1886
    %2945 = vmatprep.subr.bf16.mxu0 %v1881
    %2946 = vmatpush1.bf16.msra.mxu0 %v1880
    %2947 = vmatprep.subr.bf16.mxu0 %v1875
    %2948 = vmatpush1.bf16.msra.mxu0 %v1874
    %2949 = vmatprep.subr.bf16.mxu0 %v1869
    %2950 = vmatpush1.bf16.msra.mxu0 %v1868
    %2951 = vmatprep.subr.bf16.mxu0 %v1959
    %2952 = vmatpush2.bf16.msra.mxu0 %v1958
    %2953 = vmatprep.subr.bf16.mxu0 %v1953
    %2954 = vmatpush2.bf16.msra.mxu0 %v1952
    %2955 = vmatprep.subr.bf16.mxu0 %v1947
    %2956 = vmatpush2.bf16.msra.mxu0 %v1946
    %2957 = vmatprep.subr.bf16.mxu0 %v1941
    %2958 = vmatpush2.bf16.msra.mxu0 %v1940
    %2959 = vmatprep.subr.bf16.mxu0 %v1935
    %2960 = vmatpush2.bf16.msra.mxu0 %v1934
    %2961 = vmatprep.subr.bf16.mxu0 %v1929
    %2962 = vmatpush2.bf16.msra.mxu0 %v1928
    %2963 = vmatprep.subr.bf16.mxu0 %v1923
    %2964 = vmatpush2.bf16.msra.mxu0 %v1922
    %2965 = vmatprep.subr.bf16.mxu0 %v1917
    %2966 = vmatpush2.bf16.msra.mxu0 %v1916
    %2967 = vmatprep.mubr.bf16.mxu0 %v98
    %2968 = vmatmul.mubr.bf16.gmra.mxu0 %v97
    %v2969 = vpop.f32.mrf.mxu0
    %v2970 = vadd.f32 %v551, %v2969
    %v2971 = vpop.f32.mrf.mxu0
    %v2972 = vadd.f32 %v555, %v2971
    %v2973 = vpop.f32.mrf.mxu0
    %v2974 = vpop.f32.mrf.mxu0
    %2975 = vdwg.mxu0
    %2976 = vmatprep.subr.bf16.mxu0 %v2007
    %2977 = vmatpush1.bf16.msra.mxu0 %v2006
    %2978 = vmatprep.subr.bf16.mxu0 %v2001
    %2979 = vmatpush1.bf16.msra.mxu0 %v2000
    %2980 = vmatprep.subr.bf16.mxu0 %v1995
    %2981 = vmatpush1.bf16.msra.mxu0 %v1994
    %2982 = vmatprep.subr.bf16.mxu0 %v1989
    %2983 = vmatpush1.bf16.msra.mxu0 %v1988
    %2984 = vmatprep.subr.bf16.mxu0 %v1983
    %2985 = vmatpush1.bf16.msra.mxu0 %v1982
    %2986 = vmatprep.subr.bf16.mxu0 %v1977
    %2987 = vmatpush1.bf16.msra.mxu0 %v1976
    %2988 = vmatprep.subr.bf16.mxu0 %v1971
    %2989 = vmatpush1.bf16.msra.mxu0 %v1970
    %2990 = vmatprep.subr.bf16.mxu0 %v1965
    %2991 = vmatpush1.bf16.msra.mxu0 %v1964
    %2992 = vmatprep.subr.bf16.mxu0 %v2055
    %2993 = vmatpush2.bf16.msra.mxu0 %v2054
    %2994 = vmatprep.subr.bf16.mxu0 %v2049
    %2995 = vmatpush2.bf16.msra.mxu0 %v2048
    %2996 = vmatprep.subr.bf16.mxu0 %v2043
    %2997 = vmatpush2.bf16.msra.mxu0 %v2042
    %2998 = vmatprep.subr.bf16.mxu0 %v2037
    %2999 = vmatpush2.bf16.msra.mxu0 %v2036
    %3000 = vmatprep.subr.bf16.mxu0 %v2031
    %3001 = vmatpush2.bf16.msra.mxu0 %v2030
    %3002 = vmatprep.subr.bf16.mxu0 %v2025
    %3003 = vmatpush2.bf16.msra.mxu0 %v2024
    %3004 = vmatprep.subr.bf16.mxu0 %v2019
    %3005 = vmatpush2.bf16.msra.mxu0 %v2018
    %3006 = vmatprep.subr.bf16.mxu0 %v2013
    %3007 = vmatpush2.bf16.msra.mxu0 %v2012
    %3008 = vmatprep.mubr.bf16.mxu0 %v100
    %3009 = vmatmul.mubr.bf16.gmra.mxu0 %v99
    %v3010 = vpop.f32.mrf.mxu0
    %v3011 = vadd.f32 %v2970, %v3010
    %v3012 = vpop.f32.mrf.mxu0
    %v3013 = vadd.f32 %v2972, %v3012
    %v3014 = vpop.f32.mrf.mxu0
    %v3015 = vpop.f32.mrf.mxu0
    %3016 = vdwg.mxu0
    %3017 = vmatprep.subr.bf16.mxu0 %v2103
    %3018 = vmatpush1.bf16.msra.mxu0 %v2102
    %3019 = vmatprep.subr.bf16.mxu0 %v2097
    %3020 = vmatpush1.bf16.msra.mxu0 %v2096
    %3021 = vmatprep.subr.bf16.mxu0 %v2091
    %3022 = vmatpush1.bf16.msra.mxu0 %v2090
    %3023 = vmatprep.subr.bf16.mxu0 %v2085
    %3024 = vmatpush1.bf16.msra.mxu0 %v2084
    %3025 = vmatprep.subr.bf16.mxu0 %v2079
    %3026 = vmatpush1.bf16.msra.mxu0 %v2078
    %3027 = vmatprep.subr.bf16.mxu0 %v2073
    %3028 = vmatpush1.bf16.msra.mxu0 %v2072
    %3029 = vmatprep.subr.bf16.mxu0 %v2067
    %3030 = vmatpush1.bf16.msra.mxu0 %v2066
    %3031 = vmatprep.subr.bf16.mxu0 %v2061
    %3032 = vmatpush1.bf16.msra.mxu0 %v2060
    %3033 = vmatprep.subr.bf16.mxu0 %v2151
    %3034 = vmatpush2.bf16.msra.mxu0 %v2150
    %3035 = vmatprep.subr.bf16.mxu0 %v2145
    %3036 = vmatpush2.bf16.msra.mxu0 %v2144
    %3037 = vmatprep.subr.bf16.mxu0 %v2139
    %3038 = vmatpush2.bf16.msra.mxu0 %v2138
    %3039 = vmatprep.subr.bf16.mxu0 %v2133
    %3040 = vmatpush2.bf16.msra.mxu0 %v2132
    %3041 = vmatprep.subr.bf16.mxu0 %v2127
    %3042 = vmatpush2.bf16.msra.mxu0 %v2126
    %3043 = vmatprep.subr.bf16.mxu0 %v2121
    %3044 = vmatpush2.bf16.msra.mxu0 %v2120
    %3045 = vmatprep.subr.bf16.mxu0 %v2115
    %3046 = vmatpush2.bf16.msra.mxu0 %v2114
    %3047 = vmatprep.subr.bf16.mxu0 %v2109
    %3048 = vmatpush2.bf16.msra.mxu0 %v2108
    %3049 = vmatprep.mubr.bf16.mxu0 %v102
    %3050 = vmatmul.mubr.bf16.gmra.mxu0 %v101
    %v3051 = vpop.f32.mrf.mxu0
    %v3052 = vadd.f32 %v3011, %v3051
    %v3053 = vpop.f32.mrf.mxu0
    %v3054 = vadd.f32 %v3013, %v3053
    %v3055 = vpop.f32.mrf.mxu0
    %v3056 = vpop.f32.mrf.mxu0
    %3057 = vdwg.mxu0
    %3058 = vmatprep.subr.bf16.mxu0 %v2199
    %3059 = vmatpush1.bf16.msra.mxu0 %v2198
    %3060 = vmatprep.subr.bf16.mxu0 %v2193
    %3061 = vmatpush1.bf16.msra.mxu0 %v2192
    %3062 = vmatprep.subr.bf16.mxu0 %v2187
    %3063 = vmatpush1.bf16.msra.mxu0 %v2186
    %3064 = vmatprep.subr.bf16.mxu0 %v2181
    %3065 = vmatpush1.bf16.msra.mxu0 %v2180
    %3066 = vmatprep.subr.bf16.mxu0 %v2175
    %3067 = vmatpush1.bf16.msra.mxu0 %v2174
    %3068 = vmatprep.subr.bf16.mxu0 %v2169
    %3069 = vmatpush1.bf16.msra.mxu0 %v2168
    %3070 = vmatprep.subr.bf16.mxu0 %v2163
    %3071 = vmatpush1.bf16.msra.mxu0 %v2162
    %3072 = vmatprep.subr.bf16.mxu0 %v2157
    %3073 = vmatpush1.bf16.msra.mxu0 %v2156
    %3074 = vmatprep.subr.bf16.mxu0 %v2247
    %3075 = vmatpush2.bf16.msra.mxu0 %v2246
    %3076 = vmatprep.subr.bf16.mxu0 %v2241
    %3077 = vmatpush2.bf16.msra.mxu0 %v2240
    %3078 = vmatprep.subr.bf16.mxu0 %v2235
    %3079 = vmatpush2.bf16.msra.mxu0 %v2234
    %3080 = vmatprep.subr.bf16.mxu0 %v2229
    %3081 = vmatpush2.bf16.msra.mxu0 %v2228
    %3082 = vmatprep.subr.bf16.mxu0 %v2223
    %3083 = vmatpush2.bf16.msra.mxu0 %v2222
    %3084 = vmatprep.subr.bf16.mxu0 %v2217
    %3085 = vmatpush2.bf16.msra.mxu0 %v2216
    %3086 = vmatprep.subr.bf16.mxu0 %v2211
    %3087 = vmatpush2.bf16.msra.mxu0 %v2210
    %3088 = vmatprep.subr.bf16.mxu0 %v2205
    %3089 = vmatpush2.bf16.msra.mxu0 %v2204
    %3090 = vmatprep.mubr.bf16.mxu0 %v104
    %3091 = vmatmul.mubr.bf16.gmra.mxu0 %v103
    %v3092 = vpop.f32.mrf.mxu0
    %v3093 = vadd.f32 %v3052, %v3092
    %v3094 = vpop.f32.mrf.mxu0
    %v3095 = vadd.f32 %v3054, %v3094
    %v3096 = vpop.f32.mrf.mxu0
    %v3097 = vpop.f32.mrf.mxu0
    %3098 = vdwg.mxu0
    %3099 = vmatprep.subr.bf16.mxu0 %v2295
    %3100 = vmatpush1.bf16.msra.mxu0 %v2294
    %3101 = vmatprep.subr.bf16.mxu0 %v2289
    %3102 = vmatpush1.bf16.msra.mxu0 %v2288
    %3103 = vmatprep.subr.bf16.mxu0 %v2283
    %3104 = vmatpush1.bf16.msra.mxu0 %v2282
    %3105 = vmatprep.subr.bf16.mxu0 %v2277
    %3106 = vmatpush1.bf16.msra.mxu0 %v2276
    %3107 = vmatprep.subr.bf16.mxu0 %v2271
    %3108 = vmatpush1.bf16.msra.mxu0 %v2270
    %3109 = vmatprep.subr.bf16.mxu0 %v2265
    %3110 = vmatpush1.bf16.msra.mxu0 %v2264
    %3111 = vmatprep.subr.bf16.mxu0 %v2259
    %3112 = vmatpush1.bf16.msra.mxu0 %v2258
    %3113 = vmatprep.subr.bf16.mxu0 %v2253
    %3114 = vmatpush1.bf16.msra.mxu0 %v2252
    %3115 = vmatprep.subr.bf16.mxu0 0
    %3116 = vmatpush2.bf16.msra.mxu0 0
    %3117 = vmatprep.subr.bf16.mxu0 0
    %3118 = vmatpush2.bf16.msra.mxu0 0
    %3119 = vmatprep.subr.bf16.mxu0 0
    %3120 = vmatpush2.bf16.msra.mxu0 0
    %3121 = vmatprep.subr.bf16.mxu0 0
    %3122 = vmatpush2.bf16.msra.mxu0 0
    %3123 = vmatprep.subr.bf16.mxu0 0
    %3124 = vmatpush2.bf16.msra.mxu0 0
    %3125 = vmatprep.subr.bf16.mxu0 0
    %3126 = vmatpush2.bf16.msra.mxu0 0
    %3127 = vmatprep.subr.bf16.mxu0 0
    %3128 = vmatpush2.bf16.msra.mxu0 0
    %3129 = vmatprep.subr.bf16.mxu0 0
    %3130 = vmatpush2.bf16.msra.mxu0 0
    %3131 = vmatprep.mubr.bf16.mxu0 0
    %3132 = vmatmul.mubr.bf16.gmra.mxu0 %v105
    %v3133 = vpop.f32.mrf.mxu0
    %v3134 = vadd.f32 %v3093, %v3133
    %v3135 = vpop.f32.mrf.mxu0
    %v3136 = vadd.f32 %v3095, %v3135
    %v3137 = vpop.f32.mrf.mxu0
    %v3138 = vpop.f32.mrf.mxu0
    %3139 = vdwg.mxu0
    %3140 = vmatprep.subr.bf16.mxu0 %v1913
    %3141 = vmatpush1.bf16.msra.mxu0 %v1912
    %3142 = vmatprep.subr.bf16.mxu0 %v1907
    %3143 = vmatpush1.bf16.msra.mxu0 %v1906
    %3144 = vmatprep.subr.bf16.mxu0 %v1901
    %3145 = vmatpush1.bf16.msra.mxu0 %v1900
    %3146 = vmatprep.subr.bf16.mxu0 %v1895
    %3147 = vmatpush1.bf16.msra.mxu0 %v1894
    %3148 = vmatprep.subr.bf16.mxu0 %v1889
    %3149 = vmatpush1.bf16.msra.mxu0 %v1888
    %3150 = vmatprep.subr.bf16.mxu0 %v1883
    %3151 = vmatpush1.bf16.msra.mxu0 %v1882
    %3152 = vmatprep.subr.bf16.mxu0 %v1877
    %3153 = vmatpush1.bf16.msra.mxu0 %v1876
    %3154 = vmatprep.subr.bf16.mxu0 %v1871
    %3155 = vmatpush1.bf16.msra.mxu0 %v1870
    %3156 = vmatprep.subr.bf16.mxu0 %v1961
    %3157 = vmatpush2.bf16.msra.mxu0 %v1960
    %3158 = vmatprep.subr.bf16.mxu0 %v1955
    %3159 = vmatpush2.bf16.msra.mxu0 %v1954
    %3160 = vmatprep.subr.bf16.mxu0 %v1949
    %3161 = vmatpush2.bf16.msra.mxu0 %v1948
    %3162 = vmatprep.subr.bf16.mxu0 %v1943
    %3163 = vmatpush2.bf16.msra.mxu0 %v1942
    %3164 = vmatprep.subr.bf16.mxu0 %v1937
    %3165 = vmatpush2.bf16.msra.mxu0 %v1936
    %3166 = vmatprep.subr.bf16.mxu0 %v1931
    %3167 = vmatpush2.bf16.msra.mxu0 %v1930
    %3168 = vmatprep.subr.bf16.mxu0 %v1925
    %3169 = vmatpush2.bf16.msra.mxu0 %v1924
    %3170 = vmatprep.subr.bf16.mxu0 %v1919
    %3171 = vmatpush2.bf16.msra.mxu0 %v1918
    %3172 = vmatprep.mubr.bf16.mxu0 %v98
    %3173 = vmatmul.mubr.bf16.gmra.mxu0 %v97
    %v3174 = vpop.f32.mrf.mxu0
    %v3175 = vadd.f32 %v559, %v3174
    %v3176 = vpop.f32.mrf.mxu0
    %v3177 = vadd.f32 %v563, %v3176
    %v3178 = vpop.f32.mrf.mxu0
    %v3179 = vpop.f32.mrf.mxu0
    %3180 = vdwg.mxu0
    %3181 = vmatprep.subr.bf16.mxu0 %v2009
    %3182 = vmatpush1.bf16.msra.mxu0 %v2008
    %3183 = vmatprep.subr.bf16.mxu0 %v2003
    %3184 = vmatpush1.bf16.msra.mxu0 %v2002
    %3185 = vmatprep.subr.bf16.mxu0 %v1997
    %3186 = vmatpush1.bf16.msra.mxu0 %v1996
    %3187 = vmatprep.subr.bf16.mxu0 %v1991
    %3188 = vmatpush1.bf16.msra.mxu0 %v1990
    %3189 = vmatprep.subr.bf16.mxu0 %v1985
    %3190 = vmatpush1.bf16.msra.mxu0 %v1984
    %3191 = vmatprep.subr.bf16.mxu0 %v1979
    %3192 = vmatpush1.bf16.msra.mxu0 %v1978
    %3193 = vmatprep.subr.bf16.mxu0 %v1973
    %3194 = vmatpush1.bf16.msra.mxu0 %v1972
    %3195 = vmatprep.subr.bf16.mxu0 %v1967
    %3196 = vmatpush1.bf16.msra.mxu0 %v1966
    %3197 = vmatprep.subr.bf16.mxu0 %v2057
    %3198 = vmatpush2.bf16.msra.mxu0 %v2056
    %3199 = vmatprep.subr.bf16.mxu0 %v2051
    %3200 = vmatpush2.bf16.msra.mxu0 %v2050
    %3201 = vmatprep.subr.bf16.mxu0 %v2045
    %3202 = vmatpush2.bf16.msra.mxu0 %v2044
    %3203 = vmatprep.subr.bf16.mxu0 %v2039
    %3204 = vmatpush2.bf16.msra.mxu0 %v2038
    %3205 = vmatprep.subr.bf16.mxu0 %v2033
    %3206 = vmatpush2.bf16.msra.mxu0 %v2032
    %3207 = vmatprep.subr.bf16.mxu0 %v2027
    %3208 = vmatpush2.bf16.msra.mxu0 %v2026
    %3209 = vmatprep.subr.bf16.mxu0 %v2021
    %3210 = vmatpush2.bf16.msra.mxu0 %v2020
    %3211 = vmatprep.subr.bf16.mxu0 %v2015
    %3212 = vmatpush2.bf16.msra.mxu0 %v2014
    %3213 = vmatprep.mubr.bf16.mxu0 %v100
    %3214 = vmatmul.mubr.bf16.gmra.mxu0 %v99
    %v3215 = vpop.f32.mrf.mxu0
    %v3216 = vadd.f32 %v3175, %v3215
    %v3217 = vpop.f32.mrf.mxu0
    %v3218 = vadd.f32 %v3177, %v3217
    %v3219 = vpop.f32.mrf.mxu0
    %v3220 = vpop.f32.mrf.mxu0
    %3221 = vdwg.mxu0
    %3222 = vmatprep.subr.bf16.mxu0 %v2105
    %3223 = vmatpush1.bf16.msra.mxu0 %v2104
    %3224 = vmatprep.subr.bf16.mxu0 %v2099
    %3225 = vmatpush1.bf16.msra.mxu0 %v2098
    %3226 = vmatprep.subr.bf16.mxu0 %v2093
    %3227 = vmatpush1.bf16.msra.mxu0 %v2092
    %3228 = vmatprep.subr.bf16.mxu0 %v2087
    %3229 = vmatpush1.bf16.msra.mxu0 %v2086
    %3230 = vmatprep.subr.bf16.mxu0 %v2081
    %3231 = vmatpush1.bf16.msra.mxu0 %v2080
    %3232 = vmatprep.subr.bf16.mxu0 %v2075
    %3233 = vmatpush1.bf16.msra.mxu0 %v2074
    %3234 = vmatprep.subr.bf16.mxu0 %v2069
    %3235 = vmatpush1.bf16.msra.mxu0 %v2068
    %3236 = vmatprep.subr.bf16.mxu0 %v2063
    %3237 = vmatpush1.bf16.msra.mxu0 %v2062
    %3238 = vmatprep.subr.bf16.mxu0 %v2153
    %3239 = vmatpush2.bf16.msra.mxu0 %v2152
    %3240 = vmatprep.subr.bf16.mxu0 %v2147
    %3241 = vmatpush2.bf16.msra.mxu0 %v2146
    %3242 = vmatprep.subr.bf16.mxu0 %v2141
    %3243 = vmatpush2.bf16.msra.mxu0 %v2140
    %3244 = vmatprep.subr.bf16.mxu0 %v2135
    %3245 = vmatpush2.bf16.msra.mxu0 %v2134
    %3246 = vmatprep.subr.bf16.mxu0 %v2129
    %3247 = vmatpush2.bf16.msra.mxu0 %v2128
    %3248 = vmatprep.subr.bf16.mxu0 %v2123
    %3249 = vmatpush2.bf16.msra.mxu0 %v2122
    %3250 = vmatprep.subr.bf16.mxu0 %v2117
    %3251 = vmatpush2.bf16.msra.mxu0 %v2116
    %3252 = vmatprep.subr.bf16.mxu0 %v2111
    %3253 = vmatpush2.bf16.msra.mxu0 %v2110
    %3254 = vmatprep.mubr.bf16.mxu0 %v102
    %3255 = vmatmul.mubr.bf16.gmra.mxu0 %v101
    %v3256 = vpop.f32.mrf.mxu0
    %v3257 = vadd.f32 %v3216, %v3256
    %v3258 = vpop.f32.mrf.mxu0
    %v3259 = vadd.f32 %v3218, %v3258
    %v3260 = vpop.f32.mrf.mxu0
    %v3261 = vpop.f32.mrf.mxu0
    %3262 = vdwg.mxu0
    %3263 = vmatprep.subr.bf16.mxu0 %v2201
    %3264 = vmatpush1.bf16.msra.mxu0 %v2200
    %3265 = vmatprep.subr.bf16.mxu0 %v2195
    %3266 = vmatpush1.bf16.msra.mxu0 %v2194
    %3267 = vmatprep.subr.bf16.mxu0 %v2189
    %3268 = vmatpush1.bf16.msra.mxu0 %v2188
    %3269 = vmatprep.subr.bf16.mxu0 %v2183
    %3270 = vmatpush1.bf16.msra.mxu0 %v2182
    %3271 = vmatprep.subr.bf16.mxu0 %v2177
    %3272 = vmatpush1.bf16.msra.mxu0 %v2176
    %3273 = vmatprep.subr.bf16.mxu0 %v2171
    %3274 = vmatpush1.bf16.msra.mxu0 %v2170
    %3275 = vmatprep.subr.bf16.mxu0 %v2165
    %3276 = vmatpush1.bf16.msra.mxu0 %v2164
    %3277 = vmatprep.subr.bf16.mxu0 %v2159
    %3278 = vmatpush1.bf16.msra.mxu0 %v2158
    %3279 = vmatprep.subr.bf16.mxu0 %v2249
    %3280 = vmatpush2.bf16.msra.mxu0 %v2248
    %3281 = vmatprep.subr.bf16.mxu0 %v2243
    %3282 = vmatpush2.bf16.msra.mxu0 %v2242
    %3283 = vmatprep.subr.bf16.mxu0 %v2237
    %3284 = vmatpush2.bf16.msra.mxu0 %v2236
    %3285 = vmatprep.subr.bf16.mxu0 %v2231
    %3286 = vmatpush2.bf16.msra.mxu0 %v2230
    %3287 = vmatprep.subr.bf16.mxu0 %v2225
    %3288 = vmatpush2.bf16.msra.mxu0 %v2224
    %3289 = vmatprep.subr.bf16.mxu0 %v2219
    %3290 = vmatpush2.bf16.msra.mxu0 %v2218
    %3291 = vmatprep.subr.bf16.mxu0 %v2213
    %3292 = vmatpush2.bf16.msra.mxu0 %v2212
    %3293 = vmatprep.subr.bf16.mxu0 %v2207
    %3294 = vmatpush2.bf16.msra.mxu0 %v2206
    %3295 = vmatprep.mubr.bf16.mxu0 %v104
    %3296 = vmatmul.mubr.bf16.gmra.mxu0 %v103
    %v3297 = vpop.f32.mrf.mxu0
    %v3298 = vadd.f32 %v3257, %v3297
    %v3299 = vpop.f32.mrf.mxu0
    %v3300 = vadd.f32 %v3259, %v3299
    %v3301 = vpop.f32.mrf.mxu0
    %v3302 = vpop.f32.mrf.mxu0
    %3303 = vdwg.mxu0
    %3304 = vmatprep.subr.bf16.mxu0 %v2297
    %3305 = vmatpush1.bf16.msra.mxu0 %v2296
    %3306 = vmatprep.subr.bf16.mxu0 %v2291
    %3307 = vmatpush1.bf16.msra.mxu0 %v2290
    %3308 = vmatprep.subr.bf16.mxu0 %v2285
    %3309 = vmatpush1.bf16.msra.mxu0 %v2284
    %3310 = vmatprep.subr.bf16.mxu0 %v2279
    %3311 = vmatpush1.bf16.msra.mxu0 %v2278
    %3312 = vmatprep.subr.bf16.mxu0 %v2273
    %3313 = vmatpush1.bf16.msra.mxu0 %v2272
    %3314 = vmatprep.subr.bf16.mxu0 %v2267
    %3315 = vmatpush1.bf16.msra.mxu0 %v2266
    %3316 = vmatprep.subr.bf16.mxu0 %v2261
    %3317 = vmatpush1.bf16.msra.mxu0 %v2260
    %3318 = vmatprep.subr.bf16.mxu0 %v2255
    %3319 = vmatpush1.bf16.msra.mxu0 %v2254
    %3320 = vmatprep.subr.bf16.mxu0 0
    %3321 = vmatpush2.bf16.msra.mxu0 0
    %3322 = vmatprep.subr.bf16.mxu0 0
    %3323 = vmatpush2.bf16.msra.mxu0 0
    %3324 = vmatprep.subr.bf16.mxu0 0
    %3325 = vmatpush2.bf16.msra.mxu0 0
    %3326 = vmatprep.subr.bf16.mxu0 0
    %3327 = vmatpush2.bf16.msra.mxu0 0
    %3328 = vmatprep.subr.bf16.mxu0 0
    %3329 = vmatpush2.bf16.msra.mxu0 0
    %3330 = vmatprep.subr.bf16.mxu0 0
    %3331 = vmatpush2.bf16.msra.mxu0 0
    %3332 = vmatprep.subr.bf16.mxu0 0
    %3333 = vmatpush2.bf16.msra.mxu0 0
    %3334 = vmatprep.subr.bf16.mxu0 0
    %3335 = vmatpush2.bf16.msra.mxu0 0
    %3336 = vmatprep.mubr.bf16.mxu0 0
    %3337 = vmatmul.mubr.bf16.gmra.mxu0 %v105
    %v3338 = vpop.f32.mrf.mxu0
    %v3339 = vadd.f32 %v3298, %v3338
    %v3340 = vpop.f32.mrf.mxu0
    %v3341 = vadd.f32 %v3300, %v3340
    %v3342 = vpop.f32.mrf.mxu0
    %v3343 = vpop.f32.mrf.mxu0
    %3344 = vdwg.mxu0
    %v3351 = vcombine.low %v2929, %v2931
    %v3352 = vcombine.low %v3134, %v3136
    %v3354 = vunpack.c.l.s4 1983009808
    %v3355 = vunpack.c.0.s8 %v3354
    %v3356 = vlaneseq
    %v3357 = vshrl.u32 %v3356, 7
    %v3358 = vsub.s32 %v3355, %v3357
    %v3359 = vrot.slane %v3351, %v3358
    %v3361 = vunpack.c.l.s4 1983009808
    %v3362 = vunpack.c.0.s8 %v3361
    %v3363 = vlaneseq
    %v3364 = vshrl.u32 %v3363, 7
    %v3365 = vsub.s32 %v3362, %v3364
    %v3366 = vrot.slane %v3352, %v3365
    %v3367 = vcombine.low %v3359, %v3366
    %v3368 = vcombine.low %v3339, %v3341
    %v3370 = vunpack.c.l.s4 1983009808
    %v3371 = vunpack.c.0.s8 %v3370
    %v3372 = vlaneseq
    %v3373 = vshrl.u32 %v3372, 7
    %v3374 = vsub.s32 %v3371, %v3373
    %v3375 = vrot.slane %v3368, %v3374
    %3378 = vst [vmem:[%s3] sm:$0xff] %v3367
    %3379 = vst [vmem:[%s3 + $0x8] sm:$0xf] %v3375
    // Predicated region
    $region22: #{_lambda_.2} parent=1 // pred_check
      _
    $region23: #{_lambda_.2} parent=1 // pred_check_branch
      %3381 = sbr.rel (0) target = $region25
    $region24: #{_lambda_.2} parent=1 // pred_region
      _
    $region25: #{_lambda_.2} parent=1 // pred_fallthru
      _
    // Predicated region
    $region26: #{_lambda_.2} parent=1 // pred_check
      _
    $region27: #{_lambda_.2} parent=1 // pred_check_branch
      %3383 = sbr.rel (0) target = $region29
    $region28: #{_lambda_.2} parent=1 // pred_region
      _
    $region29: #{_lambda_.2} parent=1 // pred_fallthru
      _
    %3384 = vsyncpa [#allocation3], 1
    %3385 = vsyncpa [#allocation5], 1

</llo_original>
